<compile_context>
chip_gen: v6e
topology: v6e:2x2x1
jax: 0.10.0
libtpu: 0.0.40
codegen_flags: <defaults>
</compile_context>

<pallas_src>
import jax
import jax.numpy as jnp
from jax.experimental import pallas as pl
from jax.experimental.pallas import tpu as pltpu

# ----------------------- configuration (module hyper-params) -----------------------
DIM = 32                 # dim (channels)
NUM_HEADS = 2            # num_heads
WINDOW_SIZE = 8          # window_size
MLP_RATIO = 4.0          # mlp_ratio
HEAD_DIM = DIM // NUM_HEADS
HIDDEN = int(DIM * MLP_RATIO)


# ----------------------------- fused Pallas kernel ----------------------------------
def fused_swin_kernel(xpad_ref, dww_ref, dwb_ref, bias_ref,
                      wqkv_ref, bqkv_ref, wproj_ref, bproj_ref,
                      w1_ref, b1_ref, w2_ref, b2_ref,
                      o_ref):
    """One batch element: pos_embed(dwconv)+residual -> (folded norm1)+W-MSA
    -> residual -> (folded norm2)+MLP -> residual.

    xpad_ref: (1, H+2, W+2, C) zero-padded NHWC input
    bias_ref: (H*W, H*W) block-diagonal additive window mask (0 / -1e30)
    o_ref   : (1, H*W, C) tokens in row-major (H, W) order
    """
    f32 = jnp.float32
    Hp, Wp, C = xpad_ref.shape[1], xpad_ref.shape[2], xpad_ref.shape[3]
    H, W = Hp - 2, Wp - 2
    HW = H * W

    # --- pos_embed: x + depthwise 3x3 conv ------------------------------------------
    xpad = xpad_ref[0].astype(f32)                         # (H+2, W+2, C)
    acc = xpad[1:1 + H, 1:1 + W, :] + dwb_ref[0]           # residual + conv bias
    for dy in range(3):
        for dx in range(3):
            acc = acc + xpad[dy:dy + H, dx:dx + W, :] * dww_ref[dy, dx, :]
    x = acc.reshape(HW, C)                                 # token layout (shortcut)

    # --- norm1 + QKV (Aff_channel folded into the weights, qk scale folded into q) --
    qkv = jnp.dot(x, wqkv_ref[...], preferred_element_type=f32) + bqkv_ref[...]

    bias = bias_ref[...]                                   # (HW, HW) window mask
    wproj = wproj_ref[...]                                 # (C, C)

    # --- W-MSA: block-diag-masked full attention; head outputs folded into proj -----
    attn_acc = None
    for h in range(NUM_HEADS):
        qh = qkv[:, 0 * C + h * HEAD_DIM:0 * C + (h + 1) * HEAD_DIM]   # pre-scaled
        kh = qkv[:, 1 * C + h * HEAD_DIM:1 * C + (h + 1) * HEAD_DIM]
        vh = qkv[:, 2 * C + h * HEAD_DIM:2 * C + (h + 1) * HEAD_DIM]
        s = jax.lax.dot_general(qh, kh, (((1,), (1,)), ((), ())),
                                preferred_element_type=f32) + bias      # (HW, HW)
        s = s - jnp.max(s, axis=-1, keepdims=True)
        p = jnp.exp(s)
        p = p * pl.reciprocal(jnp.sum(p, axis=-1, keepdims=True), approx=True)
        oh = jnp.dot(p, vh, preferred_element_type=f32)                 # (HW, Dh)
        ph = jnp.dot(oh, wproj[h * HEAD_DIM:(h + 1) * HEAD_DIM, :],
                     preferred_element_type=f32)                        # (HW, C)
        attn_acc = ph if attn_acc is None else attn_acc + ph

    x = x + attn_acc + bproj_ref[...]                      # residual 1

    # --- norm2 + MLP (Aff_channel folded into fc1) -----------------------------------
    h1 = jnp.dot(x, w1_ref[...], preferred_element_type=f32) + b1_ref[...]
    h1 = jax.nn.gelu(h1, approximate=True)                 # tanh GELU -> EUP slot
    m = jnp.dot(h1, w2_ref[...], preferred_element_type=f32) + b2_ref[...]

    o_ref[0] = (x + m).astype(o_ref.dtype)                 # residual 2


# ------------------------------- wrapper ---------------------------------------------
def swin_transformer_block(x_nchw, p):
    B, C, H, W = x_nchw.shape
    ws = WINDOW_SIZE
    assert C == DIM and H % ws == 0 and W % ws == 0
    HW = H * W

    # NCHW -> NHWC, zero-pad for the 3x3 depthwise conv
    x = jnp.transpose(x_nchw, (0, 2, 3, 1))
    xpad = jnp.pad(x, ((0, 0), (1, 1), (1, 1), (0, 0)))

    # ---- fold Aff_channel norms + qk scale into adjacent linears (exact algebra) ----
    scale = HEAD_DIM ** (-0.5)
    wqkv_f = (p["color1"].T * p["alpha1"]) @ p["wqkv_t"]            # (C, 3C)
    bqkv_f = p["beta1"] @ p["wqkv_t"] + p["bqkv"]                   # (1, 3C)
    qscale = jnp.concatenate([jnp.full((C,), scale, jnp.float32),
                              jnp.ones((2 * C,), jnp.float32)])
    wqkv_f = wqkv_f * qscale
    bqkv_f = bqkv_f * qscale
    w1_f = (p["color2"].T * p["alpha2"]) @ p["w1_t"]                # (C, HIDDEN)
    b1_f = p["beta2"] @ p["w1_t"] + p["b1"]                         # (1, HIDDEN)

    # ---- block-diagonal (same-window) additive attention mask ----------------------
    ti = jnp.arange(HW)
    wid = (ti // W) // ws * (W // ws) + (ti % W) // ws              # window id / token
    bias = jnp.where(wid[:, None] == wid[None, :], 0.0, -1e30).astype(jnp.float32)

    full2 = lambda b: (0, 0)
    out = pl.pallas_call(
        fused_swin_kernel,
        out_shape=jax.ShapeDtypeStruct((B, HW, C), x.dtype),
        grid=(B,),
        in_specs=[
            pl.BlockSpec((1, H + 2, W + 2, C), lambda b: (b, 0, 0, 0)),
            pl.BlockSpec((3, 3, C), lambda b: (0, 0, 0)),   # dw conv weight
            pl.BlockSpec((1, C), full2),                    # dw conv bias
            pl.BlockSpec((HW, HW), full2),                  # window mask bias
            pl.BlockSpec((C, 3 * C), full2),                # folded Wqkv^T
            pl.BlockSpec((1, 3 * C), full2),                # folded bqkv
            pl.BlockSpec((C, C), full2),                    # Wproj^T
            pl.BlockSpec((1, C), full2),                    # bproj
            pl.BlockSpec((C, HIDDEN), full2),               # folded W1^T
            pl.BlockSpec((1, HIDDEN), full2),               # folded b1
            pl.BlockSpec((HIDDEN, C), full2),               # W2^T
            pl.BlockSpec((1, C), full2),                    # b2
        ],
        out_specs=pl.BlockSpec((1, HW, C), lambda b: (b, 0, 0)),
        compiler_params=pltpu.CompilerParams(dimension_semantics=("parallel",)),
    )(xpad, p["dw_w"], p["dw_b"], bias,
      wqkv_f, bqkv_f, p["wproj_t"], p["bproj"],
      w1_f, b1_f, p["w2_t"], p["b2"])

    # (B, H*W, C) row-major tokens -> NCHW
    return jnp.transpose(out.reshape(B, H, W, C), (0, 3, 1, 2))


# ------------------------------ pure-JAX reference -----------------------------------
def ref_forward(x_nchw, p):
    B, C, H, W = x_nchw.shape
    ws = WINDOW_SIZE
    x = jnp.transpose(x_nchw, (0, 2, 3, 1)).astype(jnp.float32)
    xpad = jnp.pad(x, ((0, 0), (1, 1), (1, 1), (0, 0)))
    conv = jnp.zeros_like(x)
    for dy in range(3):
        for dx in range(3):
            conv = conv + xpad[:, dy:dy + H, dx:dx + W, :] * p["dw_w"][dy, dx, :]
    x = x + conv + p["dw_b"][0]

    xw = (x.reshape(B, H // ws, ws, W // ws, ws, C)
           .transpose(0, 1, 3, 2, 4, 5).reshape(-1, ws * ws, C))
    xn = jnp.einsum("wnc,dc->wnd", xw, p["color1"]) * p["alpha1"] + p["beta1"]
    qkv = jnp.einsum("wnc,ck->wnk", xn, p["wqkv_t"]) + p["bqkv"]
    q, k, v = qkv[..., :C], qkv[..., C:2 * C], qkv[..., 2 * C:]
    scale = HEAD_DIM ** (-0.5)
    heads = []
    for h in range(NUM_HEADS):
        sl = slice(h * HEAD_DIM, (h + 1) * HEAD_DIM)
        s = jnp.einsum("wqd,wkd->wqk", q[..., sl] * scale, k[..., sl])
        s = s - jnp.max(s, axis=-1, keepdims=True)
        pr = jnp.exp(s)
        pr = pr / jnp.sum(pr, axis=-1, keepdims=True)
        heads.append(jnp.einsum("wqk,wkd->wqd", pr, v[..., sl]))
    attn = jnp.concatenate(heads, axis=-1)
    attn = jnp.einsum("wnc,cd->wnd", attn, p["wproj_t"]) + p["bproj"]
    xw = xw + attn
    xn2 = jnp.einsum("wnc,dc->wnd", xw, p["color2"]) * p["alpha2"] + p["beta2"]
    h1 = jax.nn.gelu(jnp.einsum("wnc,ch->wnh", xn2, p["w1_t"]) + p["b1"],
                     approximate=False)
    m = jnp.einsum("wnh,hc->wnc", h1, p["w2_t"]) + p["b2"]
    xw = xw + m
    x = (xw.reshape(B, H // ws, W // ws, ws, ws, C)
           .transpose(0, 1, 3, 2, 4, 5).reshape(B, H, W, C))
    return jnp.transpose(x, (0, 3, 1, 2))


# ------------------------------------ params / main -----------------------------------
def make_params(key):
    ks = jax.random.split(key, 16)
    n = lambda k, s, sc: (jax.random.normal(k, s, jnp.float32) * sc)
    return {
        # pos_embed depthwise conv: weight (3,3,C), bias (1,C)
        "dw_w": n(ks[0], (3, 3, DIM), 0.1),
        "dw_b": n(ks[1], (1, DIM), 0.1),
        # norm1 (Aff_channel): alpha/beta (1,C), color (C,C)
        "color1": jnp.eye(DIM, dtype=jnp.float32) + n(ks[2], (DIM, DIM), 0.05),
        "alpha1": 1.0 + n(ks[3], (1, DIM), 0.1),
        "beta1": n(ks[4], (1, DIM), 0.1),
        # attention qkv / proj (stored pre-transposed: x @ W^T)
        "wqkv_t": n(ks[5], (DIM, 3 * DIM), DIM ** -0.5),
        "bqkv": n(ks[6], (1, 3 * DIM), 0.05),
        "wproj_t": n(ks[7], (DIM, DIM), DIM ** -0.5),
        "bproj": n(ks[8], (1, DIM), 0.05),
        # norm2
        "color2": jnp.eye(DIM, dtype=jnp.float32) + n(ks[9], (DIM, DIM), 0.05),
        "alpha2": 1.0 + n(ks[10], (1, DIM), 0.1),
        "beta2": n(ks[11], (1, DIM), 0.1),
        # MLP
        "w1_t": n(ks[12], (DIM, HIDDEN), DIM ** -0.5),
        "b1": n(ks[13], (1, HIDDEN), 0.05),
        "w2_t": n(ks[14], (HIDDEN, DIM), HIDDEN ** -0.5),
        "b2": n(ks[15], (1, DIM), 0.05),
    }


if __name__ == "__main__":
    key = jax.random.PRNGKey(0)
    k_x, k_p = jax.random.split(key)

    B, H, W = 2, 16, 16
    x = jax.random.normal(k_x, (B, DIM, H, W), jnp.float32)   # NCHW like PyTorch
    params = make_params(k_p)

    fwd = jax.jit(swin_transformer_block)
    out = jax.block_until_ready(fwd(x, params))

    ref = jax.block_until_ready(ref_forward(x, params))
    assert out.shape == (B, DIM, H, W)
    err = float(jnp.max(jnp.abs(out - ref)))
    assert err < 5e-2, f"max abs diff too large: {err}"

    print("KERNEL_OK")
</pallas_src>

<mosaic_0001>
module attributes {stable_mosaic.version = 11 : i64} {
  func.func @fused_swin_kernel(%arg0: i32, %arg1: memref<1x18x18x32xf32, #tpu.memory_space<vmem>>, %arg2: memref<3x3x32xf32, #tpu.memory_space<vmem>>, %arg3: memref<1x32xf32, #tpu.memory_space<vmem>>, %arg4: memref<256x256xf32, #tpu.memory_space<vmem>>, %arg5: memref<32x96xf32, #tpu.memory_space<vmem>>, %arg6: memref<1x96xf32, #tpu.memory_space<vmem>>, %arg7: memref<32x32xf32, #tpu.memory_space<vmem>>, %arg8: memref<1x32xf32, #tpu.memory_space<vmem>>, %arg9: memref<32x128xf32, #tpu.memory_space<vmem>>, %arg10: memref<1x128xf32, #tpu.memory_space<vmem>>, %arg11: memref<128x32xf32, #tpu.memory_space<vmem>>, %arg12: memref<1x32xf32, #tpu.memory_space<vmem>>, %arg13: memref<1x256x32xf32, #tpu.memory_space<vmem>>) attributes {dimension_semantics = [#tpu.dimension_semantics<parallel>], iteration_bounds = array<i64: 2>, scalar_prefetch = 0 : i64, scratch_operands = 0 : i64, tpu.core_type = #tpu.core_type<tc>, window_params = [{transform_indices = @transform_0, window_bounds = array<i64: 1, 18, 18, 32>}, {pipeline_mode = #tpu.pipeline_mode<synchronous>, transform_indices = @transform_1, window_bounds = array<i64: 3, 3, 32>}, {pipeline_mode = #tpu.pipeline_mode<synchronous>, transform_indices = @transform_2, window_bounds = array<i64: 1, 32>}, {pipeline_mode = #tpu.pipeline_mode<synchronous>, transform_indices = @transform_3, window_bounds = array<i64: 256, 256>}, {pipeline_mode = #tpu.pipeline_mode<synchronous>, transform_indices = @transform_4, window_bounds = array<i64: 32, 96>}, {pipeline_mode = #tpu.pipeline_mode<synchronous>, transform_indices = @transform_5, window_bounds = array<i64: 1, 96>}, {pipeline_mode = #tpu.pipeline_mode<synchronous>, transform_indices = @transform_6, window_bounds = array<i64: 32, 32>}, {pipeline_mode = #tpu.pipeline_mode<synchronous>, transform_indices = @transform_7, window_bounds = array<i64: 1, 32>}, {pipeline_mode = #tpu.pipeline_mode<synchronous>, transform_indices = @transform_8, window_bounds = array<i64: 32, 128>}, {pipeline_mode = #tpu.pipeline_mode<synchronous>, transform_indices = @transform_9, window_bounds = array<i64: 1, 128>}, {pipeline_mode = #tpu.pipeline_mode<synchronous>, transform_indices = @transform_10, window_bounds = array<i64: 128, 32>}, {pipeline_mode = #tpu.pipeline_mode<synchronous>, transform_indices = @transform_11, window_bounds = array<i64: 1, 32>}, {transform_indices = @transform_12, window_bounds = array<i64: 1, 256, 32>}]} {
    %c0 = arith.constant 0 : index
    %c0_0 = arith.constant 0 : index
    %c0_1 = arith.constant 0 : index
    %c0_2 = arith.constant 0 : index
    %0 = vector.load %arg1[%c0, %c0_0, %c0_1, %c0_2] : memref<1x18x18x32xf32, #tpu.memory_space<vmem>>, vector<1x18x18x32xf32>
    %1 = vector.shape_cast %0 : vector<1x18x18x32xf32> to vector<18x18x32xf32>
    %2 = vector.extract_strided_slice %1 {offsets = [1, 1, 0], sizes = [16, 16, 32], strides = [1, 1, 1]} : vector<18x18x32xf32> to vector<16x16x32xf32>
    %c0_3 = arith.constant 0 : index
    %c0_4 = arith.constant 0 : index
    %3 = vector.load %arg3[%c0_3, %c0_4] : memref<1x32xf32, #tpu.memory_space<vmem>>, vector<1x32xf32>
    %4 = vector.shape_cast %3 : vector<1x32xf32> to vector<32xf32>
    %5 = vector.shape_cast %4 : vector<32xf32> to vector<1x1x32xf32>
    %6 = vector.broadcast %5 : vector<1x1x32xf32> to vector<16x16x32xf32>
    %7 = arith.addf %2, %6 : vector<16x16x32xf32>
    %8 = vector.extract_strided_slice %1 {offsets = [0, 0, 0], sizes = [16, 16, 32], strides = [1, 1, 1]} : vector<18x18x32xf32> to vector<16x16x32xf32>
    %c0_5 = arith.constant 0 : index
    %c0_6 = arith.constant 0 : index
    %c0_7 = arith.constant 0 : index
    %9 = vector.load %arg2[%c0_5, %c0_6, %c0_7] : memref<3x3x32xf32, #tpu.memory_space<vmem>>, vector<1x1x32xf32>
    %10 = vector.shape_cast %9 : vector<1x1x32xf32> to vector<32xf32>
    %11 = vector.shape_cast %10 : vector<32xf32> to vector<1x1x32xf32>
    %12 = vector.broadcast %11 : vector<1x1x32xf32> to vector<16x16x32xf32>
    %13 = arith.mulf %8, %12 : vector<16x16x32xf32>
    %14 = arith.addf %7, %13 : vector<16x16x32xf32>
    %15 = vector.extract_strided_slice %1 {offsets = [0, 1, 0], sizes = [16, 16, 32], strides = [1, 1, 1]} : vector<18x18x32xf32> to vector<16x16x32xf32>
    %c0_8 = arith.constant 0 : index
    %c1 = arith.constant 1 : index
    %c0_9 = arith.constant 0 : index
    %16 = vector.load %arg2[%c0_8, %c1, %c0_9] : memref<3x3x32xf32, #tpu.memory_space<vmem>>, vector<1x1x32xf32>
    %17 = vector.shape_cast %16 : vector<1x1x32xf32> to vector<32xf32>
    %18 = vector.shape_cast %17 : vector<32xf32> to vector<1x1x32xf32>
    %19 = vector.broadcast %18 : vector<1x1x32xf32> to vector<16x16x32xf32>
    %20 = arith.mulf %15, %19 : vector<16x16x32xf32>
    %21 = arith.addf %14, %20 : vector<16x16x32xf32>
    %22 = vector.extract_strided_slice %1 {offsets = [0, 2, 0], sizes = [16, 16, 32], strides = [1, 1, 1]} : vector<18x18x32xf32> to vector<16x16x32xf32>
    %c0_10 = arith.constant 0 : index
    %c2 = arith.constant 2 : index
    %c0_11 = arith.constant 0 : index
    %23 = vector.load %arg2[%c0_10, %c2, %c0_11] : memref<3x3x32xf32, #tpu.memory_space<vmem>>, vector<1x1x32xf32>
    %24 = vector.shape_cast %23 : vector<1x1x32xf32> to vector<32xf32>
    %25 = vector.shape_cast %24 : vector<32xf32> to vector<1x1x32xf32>
    %26 = vector.broadcast %25 : vector<1x1x32xf32> to vector<16x16x32xf32>
    %27 = arith.mulf %22, %26 : vector<16x16x32xf32>
    %28 = arith.addf %21, %27 : vector<16x16x32xf32>
    %29 = vector.extract_strided_slice %1 {offsets = [1, 0, 0], sizes = [16, 16, 32], strides = [1, 1, 1]} : vector<18x18x32xf32> to vector<16x16x32xf32>
    %c1_12 = arith.constant 1 : index
    %c0_13 = arith.constant 0 : index
    %c0_14 = arith.constant 0 : index
    %30 = vector.load %arg2[%c1_12, %c0_13, %c0_14] : memref<3x3x32xf32, #tpu.memory_space<vmem>>, vector<1x1x32xf32>
    %31 = vector.shape_cast %30 : vector<1x1x32xf32> to vector<32xf32>
    %32 = vector.shape_cast %31 : vector<32xf32> to vector<1x1x32xf32>
    %33 = vector.broadcast %32 : vector<1x1x32xf32> to vector<16x16x32xf32>
    %34 = arith.mulf %29, %33 : vector<16x16x32xf32>
    %35 = arith.addf %28, %34 : vector<16x16x32xf32>
    %36 = vector.extract_strided_slice %1 {offsets = [1, 1, 0], sizes = [16, 16, 32], strides = [1, 1, 1]} : vector<18x18x32xf32> to vector<16x16x32xf32>
    %c1_15 = arith.constant 1 : index
    %c1_16 = arith.constant 1 : index
    %c0_17 = arith.constant 0 : index
    %37 = vector.load %arg2[%c1_15, %c1_16, %c0_17] : memref<3x3x32xf32, #tpu.memory_space<vmem>>, vector<1x1x32xf32>
    %38 = vector.shape_cast %37 : vector<1x1x32xf32> to vector<32xf32>
    %39 = vector.shape_cast %38 : vector<32xf32> to vector<1x1x32xf32>
    %40 = vector.broadcast %39 : vector<1x1x32xf32> to vector<16x16x32xf32>
    %41 = arith.mulf %36, %40 : vector<16x16x32xf32>
    %42 = arith.addf %35, %41 : vector<16x16x32xf32>
    %43 = vector.extract_strided_slice %1 {offsets = [1, 2, 0], sizes = [16, 16, 32], strides = [1, 1, 1]} : vector<18x18x32xf32> to vector<16x16x32xf32>
    %c1_18 = arith.constant 1 : index
    %c2_19 = arith.constant 2 : index
    %c0_20 = arith.constant 0 : index
    %44 = vector.load %arg2[%c1_18, %c2_19, %c0_20] : memref<3x3x32xf32, #tpu.memory_space<vmem>>, vector<1x1x32xf32>
    %45 = vector.shape_cast %44 : vector<1x1x32xf32> to vector<32xf32>
    %46 = vector.shape_cast %45 : vector<32xf32> to vector<1x1x32xf32>
    %47 = vector.broadcast %46 : vector<1x1x32xf32> to vector<16x16x32xf32>
    %48 = arith.mulf %43, %47 : vector<16x16x32xf32>
    %49 = arith.addf %42, %48 : vector<16x16x32xf32>
    %50 = vector.extract_strided_slice %1 {offsets = [2, 0, 0], sizes = [16, 16, 32], strides = [1, 1, 1]} : vector<18x18x32xf32> to vector<16x16x32xf32>
    %c2_21 = arith.constant 2 : index
    %c0_22 = arith.constant 0 : index
    %c0_23 = arith.constant 0 : index
    %51 = vector.load %arg2[%c2_21, %c0_22, %c0_23] : memref<3x3x32xf32, #tpu.memory_space<vmem>>, vector<1x1x32xf32>
    %52 = vector.shape_cast %51 : vector<1x1x32xf32> to vector<32xf32>
    %53 = vector.shape_cast %52 : vector<32xf32> to vector<1x1x32xf32>
    %54 = vector.broadcast %53 : vector<1x1x32xf32> to vector<16x16x32xf32>
    %55 = arith.mulf %50, %54 : vector<16x16x32xf32>
    %56 = arith.addf %49, %55 : vector<16x16x32xf32>
    %57 = vector.extract_strided_slice %1 {offsets = [2, 1, 0], sizes = [16, 16, 32], strides = [1, 1, 1]} : vector<18x18x32xf32> to vector<16x16x32xf32>
    %c2_24 = arith.constant 2 : index
    %c1_25 = arith.constant 1 : index
    %c0_26 = arith.constant 0 : index
    %58 = vector.load %arg2[%c2_24, %c1_25, %c0_26] : memref<3x3x32xf32, #tpu.memory_space<vmem>>, vector<1x1x32xf32>
    %59 = vector.shape_cast %58 : vector<1x1x32xf32> to vector<32xf32>
    %60 = vector.shape_cast %59 : vector<32xf32> to vector<1x1x32xf32>
    %61 = vector.broadcast %60 : vector<1x1x32xf32> to vector<16x16x32xf32>
    %62 = arith.mulf %57, %61 : vector<16x16x32xf32>
    %63 = arith.addf %56, %62 : vector<16x16x32xf32>
    %64 = vector.extract_strided_slice %1 {offsets = [2, 2, 0], sizes = [16, 16, 32], strides = [1, 1, 1]} : vector<18x18x32xf32> to vector<16x16x32xf32>
    %c2_27 = arith.constant 2 : index
    %c2_28 = arith.constant 2 : index
    %c0_29 = arith.constant 0 : index
    %65 = vector.load %arg2[%c2_27, %c2_28, %c0_29] : memref<3x3x32xf32, #tpu.memory_space<vmem>>, vector<1x1x32xf32>
    %66 = vector.shape_cast %65 : vector<1x1x32xf32> to vector<32xf32>
    %67 = vector.shape_cast %66 : vector<32xf32> to vector<1x1x32xf32>
    %68 = vector.broadcast %67 : vector<1x1x32xf32> to vector<16x16x32xf32>
    %69 = arith.mulf %64, %68 : vector<16x16x32xf32>
    %70 = arith.addf %63, %69 : vector<16x16x32xf32>
    %71 = vector.shape_cast %70 : vector<16x16x32xf32> to vector<256x32xf32>
    %c0_30 = arith.constant 0 : index
    %c0_31 = arith.constant 0 : index
    %72 = vector.load %arg5[%c0_30, %c0_31] : memref<32x96xf32, #tpu.memory_space<vmem>>, vector<32x96xf32>
    %cst = arith.constant dense<0.000000e+00> : vector<256x96xf32>
    %73 = tpu.matmul %71, %72, %cst {dimension_numbers = #tpu.dot_dimension_numbers<[1], [0], [0], [1], [0, 0, 1, 1], [], []>} : vector<256x32xf32>, vector<32x96xf32>, vector<256x96xf32> -> vector<256x96xf32>
    %c0_32 = arith.constant 0 : index
    %c0_33 = arith.constant 0 : index
    %74 = vector.load %arg6[%c0_32, %c0_33] : memref<1x96xf32, #tpu.memory_space<vmem>>, vector<1x96xf32>
    %75 = vector.broadcast %74 : vector<1x96xf32> to vector<256x96xf32>
    %76 = arith.addf %73, %75 : vector<256x96xf32>
    %c0_34 = arith.constant 0 : index
    %c0_35 = arith.constant 0 : index
    %77 = vector.load %arg4[%c0_34, %c0_35] : memref<256x256xf32, #tpu.memory_space<vmem>>, vector<256x256xf32>
    %c0_36 = arith.constant 0 : index
    %c0_37 = arith.constant 0 : index
    %78 = vector.load %arg7[%c0_36, %c0_37] : memref<32x32xf32, #tpu.memory_space<vmem>>, vector<32x32xf32>
    %79 = vector.extract_strided_slice %76 {offsets = [0, 0], sizes = [256, 16], strides = [1, 1]} : vector<256x96xf32> to vector<256x16xf32>
    %80 = vector.extract_strided_slice %76 {offsets = [0, 32], sizes = [256, 16], strides = [1, 1]} : vector<256x96xf32> to vector<256x16xf32>
    %81 = vector.extract_strided_slice %76 {offsets = [0, 64], sizes = [256, 16], strides = [1, 1]} : vector<256x96xf32> to vector<256x16xf32>
    %cst_38 = arith.constant dense<0.000000e+00> : vector<256x256xf32>
    %82 = tpu.matmul %79, %80, %cst_38 {dimension_numbers = #tpu.dot_dimension_numbers<[1], [1], [0], [0], [0, 0, 1, 0], [], []>} : vector<256x16xf32>, vector<256x16xf32>, vector<256x256xf32> -> vector<256x256xf32>
    %83 = arith.addf %82, %77 : vector<256x256xf32>
    %cst_39 = arith.constant dense<0xFF800000> : vector<256xf32>
    %84 = vector.multi_reduction <maximumf>, %83, %cst_39 [1] : vector<256x256xf32> to vector<256xf32>
    %85 = vector.shape_cast %84 : vector<256xf32> to vector<256x1xf32>
    %86 = vector.broadcast %85 : vector<256x1xf32> to vector<256x256xf32>
    %87 = arith.subf %83, %86 : vector<256x256xf32>
    %88 = math.exp %87 : vector<256x256xf32>
    %cst_40 = arith.constant dense<0.000000e+00> : vector<256xf32>
    %89 = vector.multi_reduction <add>, %88, %cst_40 [1] : vector<256x256xf32> to vector<256xf32>
    %90 = vector.shape_cast %89 : vector<256xf32> to vector<256x1xf32>
    %91 = tpu.reciprocal %90 {approx = true} : vector<256x1xf32> -> vector<256x1xf32>
    %92 = vector.broadcast %91 : vector<256x1xf32> to vector<256x256xf32>
    %93 = arith.mulf %88, %92 : vector<256x256xf32>
    %cst_41 = arith.constant dense<0.000000e+00> : vector<256x16xf32>
    %94 = tpu.matmul %93, %81, %cst_41 {dimension_numbers = #tpu.dot_dimension_numbers<[1], [0], [0], [1], [0, 0, 1, 1], [], []>} : vector<256x256xf32>, vector<256x16xf32>, vector<256x16xf32> -> vector<256x16xf32>
    %95 = vector.extract_strided_slice %78 {offsets = [0, 0], sizes = [16, 32], strides = [1, 1]} : vector<32x32xf32> to vector<16x32xf32>
    %cst_42 = arith.constant dense<0.000000e+00> : vector<256x32xf32>
    %96 = tpu.matmul %94, %95, %cst_42 {dimension_numbers = #tpu.dot_dimension_numbers<[1], [0], [0], [1], [0, 0, 1, 1], [], []>} : vector<256x16xf32>, vector<16x32xf32>, vector<256x32xf32> -> vector<256x32xf32>
    %97 = vector.extract_strided_slice %76 {offsets = [0, 16], sizes = [256, 16], strides = [1, 1]} : vector<256x96xf32> to vector<256x16xf32>
    %98 = vector.extract_strided_slice %76 {offsets = [0, 48], sizes = [256, 16], strides = [1, 1]} : vector<256x96xf32> to vector<256x16xf32>
    %99 = vector.extract_strided_slice %76 {offsets = [0, 80], sizes = [256, 16], strides = [1, 1]} : vector<256x96xf32> to vector<256x16xf32>
    %cst_43 = arith.constant dense<0.000000e+00> : vector<256x256xf32>
    %100 = tpu.matmul %97, %98, %cst_43 {dimension_numbers = #tpu.dot_dimension_numbers<[1], [1], [0], [0], [0, 0, 1, 0], [], []>} : vector<256x16xf32>, vector<256x16xf32>, vector<256x256xf32> -> vector<256x256xf32>
    %101 = arith.addf %100, %77 : vector<256x256xf32>
    %cst_44 = arith.constant dense<0xFF800000> : vector<256xf32>
    %102 = vector.multi_reduction <maximumf>, %101, %cst_44 [1] : vector<256x256xf32> to vector<256xf32>
    %103 = vector.shape_cast %102 : vector<256xf32> to vector<256x1xf32>
    %104 = vector.broadcast %103 : vector<256x1xf32> to vector<256x256xf32>
    %105 = arith.subf %101, %104 : vector<256x256xf32>
    %106 = math.exp %105 : vector<256x256xf32>
    %cst_45 = arith.constant dense<0.000000e+00> : vector<256xf32>
    %107 = vector.multi_reduction <add>, %106, %cst_45 [1] : vector<256x256xf32> to vector<256xf32>
    %108 = vector.shape_cast %107 : vector<256xf32> to vector<256x1xf32>
    %109 = tpu.reciprocal %108 {approx = true} : vector<256x1xf32> -> vector<256x1xf32>
    %110 = vector.broadcast %109 : vector<256x1xf32> to vector<256x256xf32>
    %111 = arith.mulf %106, %110 : vector<256x256xf32>
    %cst_46 = arith.constant dense<0.000000e+00> : vector<256x16xf32>
    %112 = tpu.matmul %111, %99, %cst_46 {dimension_numbers = #tpu.dot_dimension_numbers<[1], [0], [0], [1], [0, 0, 1, 1], [], []>} : vector<256x256xf32>, vector<256x16xf32>, vector<256x16xf32> -> vector<256x16xf32>
    %113 = vector.extract_strided_slice %78 {offsets = [16, 0], sizes = [16, 32], strides = [1, 1]} : vector<32x32xf32> to vector<16x32xf32>
    %cst_47 = arith.constant dense<0.000000e+00> : vector<256x32xf32>
    %114 = tpu.matmul %112, %113, %cst_47 {dimension_numbers = #tpu.dot_dimension_numbers<[1], [0], [0], [1], [0, 0, 1, 1], [], []>} : vector<256x16xf32>, vector<16x32xf32>, vector<256x32xf32> -> vector<256x32xf32>
    %115 = arith.addf %96, %114 : vector<256x32xf32>
    %116 = arith.addf %71, %115 : vector<256x32xf32>
    %c0_48 = arith.constant 0 : index
    %c0_49 = arith.constant 0 : index
    %117 = vector.load %arg8[%c0_48, %c0_49] : memref<1x32xf32, #tpu.memory_space<vmem>>, vector<1x32xf32>
    %118 = vector.broadcast %117 : vector<1x32xf32> to vector<256x32xf32>
    %119 = arith.addf %116, %118 : vector<256x32xf32>
    %c0_50 = arith.constant 0 : index
    %c0_51 = arith.constant 0 : index
    %120 = vector.load %arg9[%c0_50, %c0_51] : memref<32x128xf32, #tpu.memory_space<vmem>>, vector<32x128xf32>
    %cst_52 = arith.constant dense<0.000000e+00> : vector<256x128xf32>
    %121 = tpu.matmul %119, %120, %cst_52 {dimension_numbers = #tpu.dot_dimension_numbers<[1], [0], [0], [1], [0, 0, 1, 1], [], []>} : vector<256x32xf32>, vector<32x128xf32>, vector<256x128xf32> -> vector<256x128xf32>
    %c0_53 = arith.constant 0 : index
    %c0_54 = arith.constant 0 : index
    %122 = vector.load %arg10[%c0_53, %c0_54] : memref<1x128xf32, #tpu.memory_space<vmem>>, vector<1x128xf32>
    %123 = vector.broadcast %122 : vector<1x128xf32> to vector<256x128xf32>
    %124 = arith.addf %121, %123 : vector<256x128xf32>
    %125 = arith.mulf %124, %124 : vector<256x128xf32>
    %126 = arith.mulf %124, %125 : vector<256x128xf32>
    %cst_55 = arith.constant 4.471500e-02 : f32
    %127 = vector.broadcast %cst_55 : f32 to vector<256x128xf32>
    %128 = arith.mulf %127, %126 : vector<256x128xf32>
    %129 = arith.addf %124, %128 : vector<256x128xf32>
    %cst_56 = arith.constant 0.797884583 : f32
    %130 = vector.broadcast %cst_56 : f32 to vector<256x128xf32>
    %131 = arith.mulf %130, %129 : vector<256x128xf32>
    %132 = math.tanh %131 : vector<256x128xf32>
    %cst_57 = arith.constant 1.000000e+00 : f32
    %133 = vector.broadcast %cst_57 : f32 to vector<256x128xf32>
    %134 = arith.addf %133, %132 : vector<256x128xf32>
    %cst_58 = arith.constant 5.000000e-01 : f32
    %135 = vector.broadcast %cst_58 : f32 to vector<256x128xf32>
    %136 = arith.mulf %135, %134 : vector<256x128xf32>
    %137 = arith.mulf %124, %136 : vector<256x128xf32>
    %c0_59 = arith.constant 0 : index
    %c0_60 = arith.constant 0 : index
    %138 = vector.load %arg11[%c0_59, %c0_60] : memref<128x32xf32, #tpu.memory_space<vmem>>, vector<128x32xf32>
    %cst_61 = arith.constant dense<0.000000e+00> : vector<256x32xf32>
    %139 = tpu.matmul %137, %138, %cst_61 {dimension_numbers = #tpu.dot_dimension_numbers<[1], [0], [0], [1], [0, 0, 1, 1], [], []>} : vector<256x128xf32>, vector<128x32xf32>, vector<256x32xf32> -> vector<256x32xf32>
    %c0_62 = arith.constant 0 : index
    %c0_63 = arith.constant 0 : index
    %140 = vector.load %arg12[%c0_62, %c0_63] : memref<1x32xf32, #tpu.memory_space<vmem>>, vector<1x32xf32>
    %141 = vector.broadcast %140 : vector<1x32xf32> to vector<256x32xf32>
    %142 = arith.addf %139, %141 : vector<256x32xf32>
    %143 = arith.addf %119, %142 : vector<256x32xf32>
    %c0_64 = arith.constant 0 : index
    %c0_65 = arith.constant 0 : index
    %c0_66 = arith.constant 0 : index
    %144 = vector.load %arg13[%c0_64, %c0_65, %c0_66] : memref<1x256x32xf32, #tpu.memory_space<vmem>>, vector<1x256x32xf32>
    %145 = vector.shape_cast %144 : vector<1x256x32xf32> to vector<256x32xf32>
    %146 = vector.shape_cast %143 : vector<256x32xf32> to vector<1x256x32xf32>
    tpu.vector_store %arg13[%c0_64, %c0_65, %c0_66], %146 {strides = array<i32>} : memref<1x256x32xf32, #tpu.memory_space<vmem>>, vector<1x256x32xf32>,
    return
  }
  func.func @transform_0(%arg0: i32) -> (i32, i32, i32, i32) {
    %c0_i32 = arith.constant 0 : i32
    %c0_i32_0 = arith.constant 0 : i32
    %c0_i32_1 = arith.constant 0 : i32
    %c0_i32_2 = arith.constant 0 : i32
    return %arg0, %c0_i32, %c0_i32_0, %c0_i32_1 : i32, i32, i32, i32
  }
  func.func @transform_1(%arg0: i32) -> (i32, i32, i32) {
    %c0_i32 = arith.constant 0 : i32
    %c0_i32_0 = arith.constant 0 : i32
    %c0_i32_1 = arith.constant 0 : i32
    %c0_i32_2 = arith.constant 0 : i32
    return %c0_i32, %c0_i32_0, %c0_i32_1 : i32, i32, i32
  }
  func.func @transform_2(%arg0: i32) -> (i32, i32) {
    %c0_i32 = arith.constant 0 : i32
    %c0_i32_0 = arith.constant 0 : i32
    %c0_i32_1 = arith.constant 0 : i32
    return %c0_i32, %c0_i32_0 : i32, i32
  }
  func.func @transform_3(%arg0: i32) -> (i32, i32) {
    %c0_i32 = arith.constant 0 : i32
    %c0_i32_0 = arith.constant 0 : i32
    %c0_i32_1 = arith.constant 0 : i32
    return %c0_i32, %c0_i32_0 : i32, i32
  }
  func.func @transform_4(%arg0: i32) -> (i32, i32) {
    %c0_i32 = arith.constant 0 : i32
    %c0_i32_0 = arith.constant 0 : i32
    %c0_i32_1 = arith.constant 0 : i32
    return %c0_i32, %c0_i32_0 : i32, i32
  }
  func.func @transform_5(%arg0: i32) -> (i32, i32) {
    %c0_i32 = arith.constant 0 : i32
    %c0_i32_0 = arith.constant 0 : i32
    %c0_i32_1 = arith.constant 0 : i32
    return %c0_i32, %c0_i32_0 : i32, i32
  }
  func.func @transform_6(%arg0: i32) -> (i32, i32) {
    %c0_i32 = arith.constant 0 : i32
    %c0_i32_0 = arith.constant 0 : i32
    %c0_i32_1 = arith.constant 0 : i32
    return %c0_i32, %c0_i32_0 : i32, i32
  }
  func.func @transform_7(%arg0: i32) -> (i32, i32) {
    %c0_i32 = arith.constant 0 : i32
    %c0_i32_0 = arith.constant 0 : i32
    %c0_i32_1 = arith.constant 0 : i32
    return %c0_i32, %c0_i32_0 : i32, i32
  }
  func.func @transform_8(%arg0: i32) -> (i32, i32) {
    %c0_i32 = arith.constant 0 : i32
    %c0_i32_0 = arith.constant 0 : i32
    %c0_i32_1 = arith.constant 0 : i32
    return %c0_i32, %c0_i32_0 : i32, i32
  }
  func.func @transform_9(%arg0: i32) -> (i32, i32) {
    %c0_i32 = arith.constant 0 : i32
    %c0_i32_0 = arith.constant 0 : i32
    %c0_i32_1 = arith.constant 0 : i32
    return %c0_i32, %c0_i32_0 : i32, i32
  }
  func.func @transform_10(%arg0: i32) -> (i32, i32) {
    %c0_i32 = arith.constant 0 : i32
    %c0_i32_0 = arith.constant 0 : i32
    %c0_i32_1 = arith.constant 0 : i32
    return %c0_i32, %c0_i32_0 : i32, i32
  }
  func.func @transform_11(%arg0: i32) -> (i32, i32) {
    %c0_i32 = arith.constant 0 : i32
    %c0_i32_0 = arith.constant 0 : i32
    %c0_i32_1 = arith.constant 0 : i32
    return %c0_i32, %c0_i32_0 : i32, i32
  }
  func.func @transform_12(%arg0: i32) -> (i32, i32, i32) {
    %c0_i32 = arith.constant 0 : i32
    %c0_i32_0 = arith.constant 0 : i32
    %c0_i32_1 = arith.constant 0 : i32
    return %arg0, %c0_i32, %c0_i32_0 : i32, i32, i32
  }
}

</mosaic_0001>

<llo_original>
// kernel: swin_transformer_block.1
$region0: #{swin_transformer_block.1}
  #allocation0 [shape = 'u32[]', space=smem, size = 0x4, offset = 0x4, fixed_abs, tag = 'smem constant byte address 0x4 - core index']
  #allocation1 [shape = 'u32[144,128]{1,0:T(1,128)}', space=vmem, size = 0x12000, scoped, tag = 'internal scratch']
  %s0 = inlined_call_operand.vmem [shape: f32[2,18,18,32], index: 0, kind: input, shape index: {}]
  %s1 = inlined_call_operand.vmem [shape: f32[3,3,32], index: 1, kind: input, shape index: {}]
  %s2 = inlined_call_operand.vmem [shape: f32[1,32], index: 2, kind: input, shape index: {}]
  %s3 = inlined_call_operand.vmem [shape: f32[256,256], index: 3, kind: input, shape index: {}]
  %s4 = inlined_call_operand.vmem [shape: f32[32,96], index: 4, kind: input, shape index: {}]
  %s5 = inlined_call_operand.vmem [shape: f32[1,96], index: 5, kind: input, shape index: {}]
  %s6 = inlined_call_operand.vmem [shape: f32[32,32], index: 6, kind: input, shape index: {}]
  %s7 = inlined_call_operand.vmem [shape: f32[1,32], index: 7, kind: input, shape index: {}]
  %s8 = inlined_call_operand.vmem [shape: f32[32,128], index: 8, kind: input, shape index: {}]
  %s9 = inlined_call_operand.vmem [shape: f32[1,128], index: 9, kind: input, shape index: {}]
  %s10 = inlined_call_operand.vmem [shape: f32[128,32], index: 10, kind: input, shape index: {}]
  %s11 = inlined_call_operand.vmem [shape: f32[1,32], index: 11, kind: input, shape index: {}]
  %s12 = inlined_call_operand.hbm [shape: f32[2,256,32], index: 12, kind: output, shape index: {}]
  %s13 = sld [smem:[#allocation0]]
  $region81: #{swin_transformer_block.1} parent=0
    _
  %s15 = ssub.s32 1, %s13
  %s16 = scalar_select 0, %s15, %s13
  $region1: #{swin_transformer_block.1} parent=0
    #allocation2 [shape = 'u8[262144]{0}', space=vmem, size = 0x40000, scoped, tag = 'output window, operand 0']
    #allocation3 [shape = 's32[2]{0}', space=sflag, size = 0x8, scoped, tag = 'scoped memory for swin_transformer_block.1']
    %17 = vsyncpa [#allocation3], 0
    %s18 = scalar_lea.sflag [#allocation3], 1
    %19 = vsyncpa %s18, 0
    loop: start=0, step=1, limit=4
    $region2: #{swin_transformer_block.1} parent=1 // loop_pre_header
      _
    $region3: #{swin_transformer_block.1} parent=1 // loop_header
      %s21 = sphi 0, %s25
      %p22 = scmp.ge.s32.totalorder %s21, 4
      %s31 = sphi 0, %s33
      %s34 = sphi 0, %s31
      %s35 = sphi 0, %s34
      %s51 = sphi 0, %s35
      %s55 = sphi 0, %s55
      %s57 = sphi 0, %s55
      %s58 = sphi 0, %s57
      %s72 = sphi 0, %s58
      %s76 = sphi 0, %s76
      %s78 = sphi 0, %s76
      %s79 = sphi 0, %s78
      %s93 = sphi 0, %s79
      %s97 = sphi 0, %s97
      %s99 = sphi 0, %s97
      %s100 = sphi 0, %s99
      %s114 = sphi 0, %s100
      %s118 = sphi 0, %s118
      %s120 = sphi 0, %s118
      %s121 = sphi 0, %s120
      %s135 = sphi 0, %s121
      %s139 = sphi 0, %s139
      %s141 = sphi 0, %s139
      %s142 = sphi 0, %s141
      %s156 = sphi 0, %s142
      %s160 = sphi 0, %s160
      %s162 = sphi 0, %s160
      %s163 = sphi 0, %s162
      %s177 = sphi 0, %s163
      %s181 = sphi 0, %s181
      %s183 = sphi 0, %s181
      %s184 = sphi 0, %s183
      %s198 = sphi 0, %s184
      %s202 = sphi 0, %s202
      %s204 = sphi 0, %s202
      %s205 = sphi 0, %s204
      %s219 = sphi 0, %s205
      %s223 = sphi 0, %s223
      %s225 = sphi 0, %s223
      %s226 = sphi 0, %s225
      %s240 = sphi 0, %s226
      %s244 = sphi 0, %s244
      %s246 = sphi 0, %s244
      %s247 = sphi 0, %s246
      %s261 = sphi 0, %s247
      %s265 = sphi 0, %s265
      %s267 = sphi 0, %s265
      %s268 = sphi 0, %s267
      %s282 = sphi 0, %s268
      %s288 = sphi 0, %s290
      %s291 = sphi 0, %s288
      %s292 = sphi 0, %s291
      %s308 = sphi 0, %s292
    $region4: #{swin_transformer_block.1} parent=1 // loop_header_branch
      %24 = sbr.rel (%p22) target = $region8
    $region5: #{swin_transformer_block.1} parent=1 // loop_body
      %s26 = ssub.s32 %s21, 1
      %s27 = ssub.s32 %s21, 2
      %s28 = sadd.s32 %s21, 1
      %s29 = ssub.s32 %s21, %s28
      %p30 = scmp.eq.s32.totalorder %s29, 0
      %s32 = sadd.s32 %s31, 1
      %s33 = scalar_select %p30, %s31, %s32
      %p36 = pneg %p30
      %p37 = scmp.eq.s32.totalorder %s21, 1
      %p38 = por %p36, %p37
      %p39 = scmp.ne.s32.totalorder %s31, %s34
      %p40 = scmp.eq.s32.totalorder %s21, 0
      %p41 = por %p39, %p40
      %p42 = scmp.ne.s32.totalorder %s31, %s34
      %p43 = scmp.eq.s32.totalorder %s26, 1
      %p44 = por %p42, %p43
      %p45 = scmp.ne.s32.totalorder %s34, %s35
      %p46 = scmp.eq.s32.totalorder %s26, 0
      %p47 = por %p45, %p46
      %p48 = scmp.ne.s32.totalorder %s34, %s35
      %p49 = scmp.eq.s32.totalorder %s27, 1
      %p50 = por %p48, %p49
      %p52 = scmp.ne.s32.totalorder %s35, %s51
      %p53 = scmp.eq.s32.totalorder %s27, 0
      %p54 = por %p52, %p53
      %s56 = sadd.s32 %s55, 1
      %p59 = scmp.eq.s32.totalorder %s21, 1
      %p60 = scmp.ne.s32.totalorder %s55, %s57
      %p61 = scmp.eq.s32.totalorder %s21, 0
      %p62 = por %p60, %p61
      %p63 = scmp.ne.s32.totalorder %s55, %s57
      %p64 = scmp.eq.s32.totalorder %s26, 1
      %p65 = por %p63, %p64
      %p66 = scmp.ne.s32.totalorder %s57, %s58
      %p67 = scmp.eq.s32.totalorder %s26, 0
      %p68 = por %p66, %p67
      %p69 = scmp.ne.s32.totalorder %s57, %s58
      %p70 = scmp.eq.s32.totalorder %s27, 1
      %p71 = por %p69, %p70
      %p73 = scmp.ne.s32.totalorder %s58, %s72
      %p74 = scmp.eq.s32.totalorder %s27, 0
      %p75 = por %p73, %p74
      %s77 = sadd.s32 %s76, 1
      %p80 = scmp.eq.s32.totalorder %s21, 1
      %p81 = scmp.ne.s32.totalorder %s76, %s78
      %p82 = scmp.eq.s32.totalorder %s21, 0
      %p83 = por %p81, %p82
      %p84 = scmp.ne.s32.totalorder %s76, %s78
      %p85 = scmp.eq.s32.totalorder %s26, 1
      %p86 = por %p84, %p85
      %p87 = scmp.ne.s32.totalorder %s78, %s79
      %p88 = scmp.eq.s32.totalorder %s26, 0
      %p89 = por %p87, %p88
      %p90 = scmp.ne.s32.totalorder %s78, %s79
      %p91 = scmp.eq.s32.totalorder %s27, 1
      %p92 = por %p90, %p91
      %p94 = scmp.ne.s32.totalorder %s79, %s93
      %p95 = scmp.eq.s32.totalorder %s27, 0
      %p96 = por %p94, %p95
      %s98 = sadd.s32 %s97, 1
      %p101 = scmp.eq.s32.totalorder %s21, 1
      %p102 = scmp.ne.s32.totalorder %s97, %s99
      %p103 = scmp.eq.s32.totalorder %s21, 0
      %p104 = por %p102, %p103
      %p105 = scmp.ne.s32.totalorder %s97, %s99
      %p106 = scmp.eq.s32.totalorder %s26, 1
      %p107 = por %p105, %p106
      %p108 = scmp.ne.s32.totalorder %s99, %s100
      %p109 = scmp.eq.s32.totalorder %s26, 0
      %p110 = por %p108, %p109
      %p111 = scmp.ne.s32.totalorder %s99, %s100
      %p112 = scmp.eq.s32.totalorder %s27, 1
      %p113 = por %p111, %p112
      %p115 = scmp.ne.s32.totalorder %s100, %s114
      %p116 = scmp.eq.s32.totalorder %s27, 0
      %p117 = por %p115, %p116
      %s119 = sadd.s32 %s118, 1
      %p122 = scmp.eq.s32.totalorder %s21, 1
      %p123 = scmp.ne.s32.totalorder %s118, %s120
      %p124 = scmp.eq.s32.totalorder %s21, 0
      %p125 = por %p123, %p124
      %p126 = scmp.ne.s32.totalorder %s118, %s120
      %p127 = scmp.eq.s32.totalorder %s26, 1
      %p128 = por %p126, %p127
      %p129 = scmp.ne.s32.totalorder %s120, %s121
      %p130 = scmp.eq.s32.totalorder %s26, 0
      %p131 = por %p129, %p130
      %p132 = scmp.ne.s32.totalorder %s120, %s121
      %p133 = scmp.eq.s32.totalorder %s27, 1
      %p134 = por %p132, %p133
      %p136 = scmp.ne.s32.totalorder %s121, %s135
      %p137 = scmp.eq.s32.totalorder %s27, 0
      %p138 = por %p136, %p137
      %s140 = sadd.s32 %s139, 1
      %p143 = scmp.eq.s32.totalorder %s21, 1
      %p144 = scmp.ne.s32.totalorder %s139, %s141
      %p145 = scmp.eq.s32.totalorder %s21, 0
      %p146 = por %p144, %p145
      %p147 = scmp.ne.s32.totalorder %s139, %s141
      %p148 = scmp.eq.s32.totalorder %s26, 1
      %p149 = por %p147, %p148
      %p150 = scmp.ne.s32.totalorder %s141, %s142
      %p151 = scmp.eq.s32.totalorder %s26, 0
      %p152 = por %p150, %p151
      %p153 = scmp.ne.s32.totalorder %s141, %s142
      %p154 = scmp.eq.s32.totalorder %s27, 1
      %p155 = por %p153, %p154
      %p157 = scmp.ne.s32.totalorder %s142, %s156
      %p158 = scmp.eq.s32.totalorder %s27, 0
      %p159 = por %p157, %p158
      %s161 = sadd.s32 %s160, 1
      %p164 = scmp.eq.s32.totalorder %s21, 1
      %p165 = scmp.ne.s32.totalorder %s160, %s162
      %p166 = scmp.eq.s32.totalorder %s21, 0
      %p167 = por %p165, %p166
      %p168 = scmp.ne.s32.totalorder %s160, %s162
      %p169 = scmp.eq.s32.totalorder %s26, 1
      %p170 = por %p168, %p169
      %p171 = scmp.ne.s32.totalorder %s162, %s163
      %p172 = scmp.eq.s32.totalorder %s26, 0
      %p173 = por %p171, %p172
      %p174 = scmp.ne.s32.totalorder %s162, %s163
      %p175 = scmp.eq.s32.totalorder %s27, 1
      %p176 = por %p174, %p175
      %p178 = scmp.ne.s32.totalorder %s163, %s177
      %p179 = scmp.eq.s32.totalorder %s27, 0
      %p180 = por %p178, %p179
      %s182 = sadd.s32 %s181, 1
      %p185 = scmp.eq.s32.totalorder %s21, 1
      %p186 = scmp.ne.s32.totalorder %s181, %s183
      %p187 = scmp.eq.s32.totalorder %s21, 0
      %p188 = por %p186, %p187
      %p189 = scmp.ne.s32.totalorder %s181, %s183
      %p190 = scmp.eq.s32.totalorder %s26, 1
      %p191 = por %p189, %p190
      %p192 = scmp.ne.s32.totalorder %s183, %s184
      %p193 = scmp.eq.s32.totalorder %s26, 0
      %p194 = por %p192, %p193
      %p195 = scmp.ne.s32.totalorder %s183, %s184
      %p196 = scmp.eq.s32.totalorder %s27, 1
      %p197 = por %p195, %p196
      %p199 = scmp.ne.s32.totalorder %s184, %s198
      %p200 = scmp.eq.s32.totalorder %s27, 0
      %p201 = por %p199, %p200
      %s203 = sadd.s32 %s202, 1
      %p206 = scmp.eq.s32.totalorder %s21, 1
      %p207 = scmp.ne.s32.totalorder %s202, %s204
      %p208 = scmp.eq.s32.totalorder %s21, 0
      %p209 = por %p207, %p208
      %p210 = scmp.ne.s32.totalorder %s202, %s204
      %p211 = scmp.eq.s32.totalorder %s26, 1
      %p212 = por %p210, %p211
      %p213 = scmp.ne.s32.totalorder %s204, %s205
      %p214 = scmp.eq.s32.totalorder %s26, 0
      %p215 = por %p213, %p214
      %p216 = scmp.ne.s32.totalorder %s204, %s205
      %p217 = scmp.eq.s32.totalorder %s27, 1
      %p218 = por %p216, %p217
      %p220 = scmp.ne.s32.totalorder %s205, %s219
      %p221 = scmp.eq.s32.totalorder %s27, 0
      %p222 = por %p220, %p221
      %s224 = sadd.s32 %s223, 1
      %p227 = scmp.eq.s32.totalorder %s21, 1
      %p228 = scmp.ne.s32.totalorder %s223, %s225
      %p229 = scmp.eq.s32.totalorder %s21, 0
      %p230 = por %p228, %p229
      %p231 = scmp.ne.s32.totalorder %s223, %s225
      %p232 = scmp.eq.s32.totalorder %s26, 1
      %p233 = por %p231, %p232
      %p234 = scmp.ne.s32.totalorder %s225, %s226
      %p235 = scmp.eq.s32.totalorder %s26, 0
      %p236 = por %p234, %p235
      %p237 = scmp.ne.s32.totalorder %s225, %s226
      %p238 = scmp.eq.s32.totalorder %s27, 1
      %p239 = por %p237, %p238
      %p241 = scmp.ne.s32.totalorder %s226, %s240
      %p242 = scmp.eq.s32.totalorder %s27, 0
      %p243 = por %p241, %p242
      %s245 = sadd.s32 %s244, 1
      %p248 = scmp.eq.s32.totalorder %s21, 1
      %p249 = scmp.ne.s32.totalorder %s244, %s246
      %p250 = scmp.eq.s32.totalorder %s21, 0
      %p251 = por %p249, %p250
      %p252 = scmp.ne.s32.totalorder %s244, %s246
      %p253 = scmp.eq.s32.totalorder %s26, 1
      %p254 = por %p252, %p253
      %p255 = scmp.ne.s32.totalorder %s246, %s247
      %p256 = scmp.eq.s32.totalorder %s26, 0
      %p257 = por %p255, %p256
      %p258 = scmp.ne.s32.totalorder %s246, %s247
      %p259 = scmp.eq.s32.totalorder %s27, 1
      %p260 = por %p258, %p259
      %p262 = scmp.ne.s32.totalorder %s247, %s261
      %p263 = scmp.eq.s32.totalorder %s27, 0
      %p264 = por %p262, %p263
      %s266 = sadd.s32 %s265, 1
      %p269 = scmp.eq.s32.totalorder %s21, 1
      %p270 = scmp.ne.s32.totalorder %s265, %s267
      %p271 = scmp.eq.s32.totalorder %s21, 0
      %p272 = por %p270, %p271
      %p273 = scmp.ne.s32.totalorder %s265, %s267
      %p274 = scmp.eq.s32.totalorder %s26, 1
      %p275 = por %p273, %p274
      %p276 = scmp.ne.s32.totalorder %s267, %s268
      %p277 = scmp.eq.s32.totalorder %s26, 0
      %p278 = por %p276, %p277
      %p279 = scmp.ne.s32.totalorder %s267, %s268
      %p280 = scmp.eq.s32.totalorder %s27, 1
      %p281 = por %p279, %p280
      %p283 = scmp.ne.s32.totalorder %s268, %s282
      %p284 = scmp.eq.s32.totalorder %s27, 0
      %p285 = por %p283, %p284
      %s286 = ssub.s32 %s21, %s28
      %p287 = scmp.eq.s32.totalorder %s286, 0
      %s289 = sadd.s32 %s288, 1
      %s290 = scalar_select %p287, %s288, %s289
      %p293 = pneg %p287
      %p294 = scmp.eq.s32.totalorder %s21, 1
      %p295 = por %p293, %p294
      %p296 = scmp.ne.s32.totalorder %s288, %s291
      %p297 = scmp.eq.s32.totalorder %s21, 0
      %p298 = por %p296, %p297
      %p299 = scmp.ne.s32.totalorder %s288, %s291
      %p300 = scmp.eq.s32.totalorder %s26, 1
      %p301 = por %p299, %p300
      %p302 = scmp.ne.s32.totalorder %s291, %s292
      %p303 = scmp.eq.s32.totalorder %s26, 0
      %p304 = por %p302, %p303
      %p305 = scmp.ne.s32.totalorder %s291, %s292
      %p306 = scmp.eq.s32.totalorder %s27, 1
      %p307 = por %p305, %p306
      %p309 = scmp.ne.s32.totalorder %s292, %s308
      %p310 = scmp.eq.s32.totalorder %s27, 0
      %p311 = por %p309, %p310
      %p312 = scmp.le.s32.totalorder 1, %s21
      %p313 = scmp.lt.s32.totalorder %s21, 3
      %p314 = pnand %p312, %p313
      %p315 = pneg %p314
      // Predicated region
      $region9: #{swin_transformer_block.1} parent=5 // pred_check
        _
      $region10: #{swin_transformer_block.1} parent=5 // pred_check_branch
        %317 = sbr.rel (%p314) target = $region12
      $region11: #{swin_transformer_block.1} parent=5 // pred_region
        %s318 = ssub.s32 %s21, 1
        // Predicated region
        $region13: #{swin_transformer_block.1} parent=11 // pred_check
          %p319 = pneg %p68
        $region14: #{swin_transformer_block.1} parent=11 // pred_check_branch
          %321 = sbr.rel (%p319) target = $region16
        $region15: #{swin_transformer_block.1} parent=11 // pred_region
          _
        $region16: #{swin_transformer_block.1} parent=11 // pred_fallthru
          _
        // Predicated region
        $region17: #{swin_transformer_block.1} parent=11 // pred_check
          %p322 = pneg %p89
        $region18: #{swin_transformer_block.1} parent=11 // pred_check_branch
          %324 = sbr.rel (%p322) target = $region20
        $region19: #{swin_transformer_block.1} parent=11 // pred_region
          _
        $region20: #{swin_transformer_block.1} parent=11 // pred_fallthru
          _
        // Predicated region
        $region21: #{swin_transformer_block.1} parent=11 // pred_check
          %p325 = pneg %p110
        $region22: #{swin_transformer_block.1} parent=11 // pred_check_branch
          %327 = sbr.rel (%p325) target = $region24
        $region23: #{swin_transformer_block.1} parent=11 // pred_region
          _
        $region24: #{swin_transformer_block.1} parent=11 // pred_fallthru
          _
        // Predicated region
        $region25: #{swin_transformer_block.1} parent=11 // pred_check
          %p328 = pneg %p131
        $region26: #{swin_transformer_block.1} parent=11 // pred_check_branch
          %330 = sbr.rel (%p328) target = $region28
        $region27: #{swin_transformer_block.1} parent=11 // pred_region
          _
        $region28: #{swin_transformer_block.1} parent=11 // pred_fallthru
          _
        // Predicated region
        $region29: #{swin_transformer_block.1} parent=11 // pred_check
          %p331 = pneg %p152
        $region30: #{swin_transformer_block.1} parent=11 // pred_check_branch
          %333 = sbr.rel (%p331) target = $region32
        $region31: #{swin_transformer_block.1} parent=11 // pred_region
          _
        $region32: #{swin_transformer_block.1} parent=11 // pred_fallthru
          _
        // Predicated region
        $region33: #{swin_transformer_block.1} parent=11 // pred_check
          %p334 = pneg %p173
        $region34: #{swin_transformer_block.1} parent=11 // pred_check_branch
          %336 = sbr.rel (%p334) target = $region36
        $region35: #{swin_transformer_block.1} parent=11 // pred_region
          _
        $region36: #{swin_transformer_block.1} parent=11 // pred_fallthru
          _
        // Predicated region
        $region37: #{swin_transformer_block.1} parent=11 // pred_check
          %p337 = pneg %p194
        $region38: #{swin_transformer_block.1} parent=11 // pred_check_branch
          %339 = sbr.rel (%p337) target = $region40
        $region39: #{swin_transformer_block.1} parent=11 // pred_region
          _
        $region40: #{swin_transformer_block.1} parent=11 // pred_fallthru
          _
        // Predicated region
        $region41: #{swin_transformer_block.1} parent=11 // pred_check
          %p340 = pneg %p215
        $region42: #{swin_transformer_block.1} parent=11 // pred_check_branch
          %342 = sbr.rel (%p340) target = $region44
        $region43: #{swin_transformer_block.1} parent=11 // pred_region
          _
        $region44: #{swin_transformer_block.1} parent=11 // pred_fallthru
          _
        // Predicated region
        $region45: #{swin_transformer_block.1} parent=11 // pred_check
          %p343 = pneg %p236
        $region46: #{swin_transformer_block.1} parent=11 // pred_check_branch
          %345 = sbr.rel (%p343) target = $region48
        $region47: #{swin_transformer_block.1} parent=11 // pred_region
          _
        $region48: #{swin_transformer_block.1} parent=11 // pred_fallthru
          _
        // Predicated region
        $region49: #{swin_transformer_block.1} parent=11 // pred_check
          %p346 = pneg %p257
        $region50: #{swin_transformer_block.1} parent=11 // pred_check_branch
          %348 = sbr.rel (%p346) target = $region52
        $region51: #{swin_transformer_block.1} parent=11 // pred_region
          _
        $region52: #{swin_transformer_block.1} parent=11 // pred_fallthru
          _
        // Predicated region
        $region53: #{swin_transformer_block.1} parent=11 // pred_check
          %p349 = pneg %p278
        $region54: #{swin_transformer_block.1} parent=11 // pred_check_branch
          %351 = sbr.rel (%p349) target = $region56
        $region55: #{swin_transformer_block.1} parent=11 // pred_region
          _
        $region56: #{swin_transformer_block.1} parent=11 // pred_fallthru
          _
      $region12: #{swin_transformer_block.1} parent=5 // pred_fallthru
        _
      %p352 = scmp.lt.s32.totalorder %s21, 2
      // Predicated region
      $region57: #{swin_transformer_block.1} parent=5 // pred_check
        %p353 = pneg %p352
      $region58: #{swin_transformer_block.1} parent=5 // pred_check_branch
        %355 = sbr.rel (%p353) target = $region60
      $region59: #{swin_transformer_block.1} parent=5 // pred_region
        // Predicated region
        $region61: #{swin_transformer_block.1} parent=59 // pred_check
          %p356 = pneg %p41
        $region62: #{swin_transformer_block.1} parent=59 // pred_check_branch
          %358 = sbr.rel (%p356) target = $region64
        $region63: #{swin_transformer_block.1} parent=59 // pred_region
          %p359 = scmp.lt.s32.totalorder %s21, 1
          %s360 = scalar_select %p359, %s21, 1
          %s361 = smul.addr %s360, 54
          %s362 = smul.addr %s361, 8
          %s363 = scalar_lea.vmem %s0, %s362
        $region64: #{swin_transformer_block.1} parent=59 // pred_fallthru
          _
      $region60: #{swin_transformer_block.1} parent=5 // pred_fallthru
        _
      %p364 = scmp.le.s32.totalorder 1, %s21
      %p365 = scmp.lt.s32.totalorder %s21, 3
      %p366 = pnand %p364, %p365
      %p367 = pneg %p366
      // Predicated region
      $region65: #{swin_transformer_block.1} parent=5 // pred_check
        _
      $region66: #{swin_transformer_block.1} parent=5 // pred_check_branch
        %369 = sbr.rel (%p366) target = $region68
      $region67: #{swin_transformer_block.1} parent=5 // pred_region
        %s370 = ssub.s32 %s21, 1
        %p371 = scmp.lt.s32.totalorder %s26, 1
        %s372 = scalar_select %p371, %s26, 1
        %s373 = smul.addr %s372, 54
        %s374 = smul.addr %s373, 8
        %s375 = scalar_lea.vmem %s0, %s374
        %p376 = pneg %p47
        %p377 = pneg %p44
        %p378 = pneg %p68
        %p379 = pneg %p65
        %p380 = pneg %p89
        %p381 = pneg %p86
        %p382 = pneg %p110
        %p383 = pneg %p107
        %p384 = pneg %p131
        %p385 = pneg %p128
        %p386 = pneg %p152
        %p387 = pneg %p149
        %p388 = pneg %p173
        %p389 = pneg %p170
        %p390 = pneg %p194
        %p391 = pneg %p191
        %p392 = pneg %p215
        %p393 = pneg %p212
        %p394 = pneg %p236
        %p395 = pneg %p233
        %p396 = pneg %p257
        %p397 = pneg %p254
        %p398 = pneg %p278
        %p399 = pneg %p275
        %p400 = pneg %p304
        %p401 = pneg %p301
        %s402 = sand.u32 %s291, 1
        %s403 = scalar_lea.sflag [#allocation3], %s402
        %s404 = sand.u32 %s291, 1
        %s405 = smul.addr %s404, 256
        %s406 = scalar_lea.vmem [#allocation2], %s405
        %p407 = scmp.lt.s32.totalorder %s26, 1
        %s408 = scalar_select %p407, %s26, 1
        %s409 = smul.addr %s408, 54
        %s410 = smul.addr %s409, 8
        %s411 = scalar_lea.vmem %s0, %s410
        %v412 = vld [vmem:[%s411] sm:$0xff]
        %v413 = vld [vmem:[%s411 + $0x8] sm:$0xff]
        %v414 = vld [vmem:[%s411 + $0x10] sm:$0x3]
        %v415 = vld [vmem:[%s411 + $0x18] sm:$0xff]
        %v416 = vld [vmem:[%s411 + $0x20] sm:$0xff]
        %v417 = vld [vmem:[%s411 + $0x28] sm:$0x3]
        %v418 = vld [vmem:[%s411 + $0x30] sm:$0xff]
        %v419 = vld [vmem:[%s411 + $0x38] sm:$0xff]
        %v420 = vld [vmem:[%s411 + $0x40] sm:$0x3]
        %v421 = vld [vmem:[%s411 + $0x48] sm:$0xff]
        %v422 = vld [vmem:[%s411 + $0x50] sm:$0xff]
        %v423 = vld [vmem:[%s411 + $0x58] sm:$0x3]
        %v424 = vld [vmem:[%s411 + $0x60] sm:$0xff]
        %v425 = vld [vmem:[%s411 + $0x68] sm:$0xff]
        %v426 = vld [vmem:[%s411 + $0x70] sm:$0x3]
        %v427 = vld [vmem:[%s411 + $0x78] sm:$0xff]
        %v428 = vld [vmem:[%s411 + $0x80] sm:$0xff]
        %v429 = vld [vmem:[%s411 + $0x88] sm:$0x3]
        %v430 = vld [vmem:[%s411 + $0x90] sm:$0xff]
        %v431 = vld [vmem:[%s411 + $0x98] sm:$0xff]
        %v432 = vld [vmem:[%s411 + $0xa0] sm:$0x3]
        %v433 = vld [vmem:[%s411 + $0xa8] sm:$0xff]
        %v434 = vld [vmem:[%s411 + $0xb0] sm:$0xff]
        %v435 = vld [vmem:[%s411 + $0xb8] sm:$0x3]
        %v436 = vld [vmem:[%s411 + $0xc0] sm:$0xff]
        %v437 = vld [vmem:[%s411 + $0xc8] sm:$0xff]
        %v438 = vld [vmem:[%s411 + $0xd0] sm:$0x3]
        %v439 = vld [vmem:[%s411 + $0xd8] sm:$0xff]
        %v440 = vld [vmem:[%s411 + $0xe0] sm:$0xff]
        %v441 = vld [vmem:[%s411 + $0xe8] sm:$0x3]
        %v442 = vld [vmem:[%s411 + $0xf0] sm:$0xff]
        %v443 = vld [vmem:[%s411 + $0xf8] sm:$0xff]
        %v444 = vld [vmem:[%s411 + $0x100] sm:$0x3]
        %v445 = vld [vmem:[%s411 + $0x108] sm:$0xff]
        %v446 = vld [vmem:[%s411 + $0x110] sm:$0xff]
        %v447 = vld [vmem:[%s411 + $0x118] sm:$0x3]
        %v448 = vld [vmem:[%s411 + $0x120] sm:$0xff]
        %v449 = vld [vmem:[%s411 + $0x128] sm:$0xff]
        %v450 = vld [vmem:[%s411 + $0x130] sm:$0x3]
        %v451 = vld [vmem:[%s411 + $0x138] sm:$0xff]
        %v452 = vld [vmem:[%s411 + $0x140] sm:$0xff]
        %v453 = vld [vmem:[%s411 + $0x148] sm:$0x3]
        %v454 = vld [vmem:[%s411 + $0x150] sm:$0xff]
        %v455 = vld [vmem:[%s411 + $0x158] sm:$0xff]
        %v456 = vld [vmem:[%s411 + $0x160] sm:$0x3]
        %v457 = vld [vmem:[%s411 + $0x168] sm:$0xff]
        %v458 = vld [vmem:[%s411 + $0x170] sm:$0xff]
        %v459 = vld [vmem:[%s411 + $0x178] sm:$0x3]
        %v460 = vld [vmem:[%s411 + $0x180] sm:$0xff]
        %v461 = vld [vmem:[%s411 + $0x188] sm:$0xff]
        %v462 = vld [vmem:[%s411 + $0x190] sm:$0x3]
        %v463 = vld [vmem:[%s411 + $0x198] sm:$0xff]
        %v464 = vld [vmem:[%s411 + $0x1a0] sm:$0xff]
        %v465 = vld [vmem:[%s411 + $0x1a8] sm:$0x3]
        %v466 = vld [vmem:[%s2] sm:$0x1]
        %v468 = vlaneseq
        %v469 = vshrl.u32 %v468, 7
        %v470 = vsub.s32 0, %v469
        %v471 = vrot.slane %v466, %v470
        %v473 = vadd.f32 %v415, %v471
        %v474 = vadd.f32 %v416, %v471
        %v475 = vadd.f32 %v417, %v471
        %v476 = vadd.f32 %v418, %v471
        %v477 = vadd.f32 %v419, %v471
        %v478 = vadd.f32 %v420, %v471
        %v479 = vadd.f32 %v421, %v471
        %v480 = vadd.f32 %v422, %v471
        %v481 = vadd.f32 %v423, %v471
        %v482 = vadd.f32 %v424, %v471
        %v483 = vadd.f32 %v425, %v471
        %v484 = vadd.f32 %v426, %v471
        %v485 = vadd.f32 %v427, %v471
        %v486 = vadd.f32 %v428, %v471
        %v487 = vadd.f32 %v429, %v471
        %v488 = vadd.f32 %v430, %v471
        %v489 = vadd.f32 %v431, %v471
        %v490 = vadd.f32 %v432, %v471
        %v491 = vadd.f32 %v433, %v471
        %v492 = vadd.f32 %v434, %v471
        %v493 = vadd.f32 %v435, %v471
        %v494 = vadd.f32 %v436, %v471
        %v495 = vadd.f32 %v437, %v471
        %v496 = vadd.f32 %v438, %v471
        %v497 = vadd.f32 %v439, %v471
        %v498 = vadd.f32 %v440, %v471
        %v499 = vadd.f32 %v441, %v471
        %v500 = vadd.f32 %v442, %v471
        %v501 = vadd.f32 %v443, %v471
        %v502 = vadd.f32 %v444, %v471
        %v503 = vadd.f32 %v445, %v471
        %v504 = vadd.f32 %v446, %v471
        %v505 = vadd.f32 %v447, %v471
        %v506 = vadd.f32 %v448, %v471
        %v507 = vadd.f32 %v449, %v471
        %v508 = vadd.f32 %v450, %v471
        %v509 = vadd.f32 %v451, %v471
        %v510 = vadd.f32 %v452, %v471
        %v511 = vadd.f32 %v453, %v471
        %v512 = vadd.f32 %v454, %v471
        %v513 = vadd.f32 %v455, %v471
        %v514 = vadd.f32 %v456, %v471
        %v515 = vadd.f32 %v457, %v471
        %v516 = vadd.f32 %v458, %v471
        %v517 = vadd.f32 %v459, %v471
        %v518 = vadd.f32 %v460, %v471
        %v519 = vadd.f32 %v461, %v471
        %v520 = vadd.f32 %v462, %v471
        %v521 = vld [vmem:[%s1] sm:$0x1]
        %v522 = vlaneseq
        %v523 = vshrl.u32 %v522, 7
        %v524 = vsub.s32 0, %v523
        %v525 = vrot.slane %v521, %v524
        %v526 = vmul.f32 %v412, %v525
        %v527 = vmul.f32 %v413, %v525
        %v528 = vmul.f32 %v415, %v525
        %v529 = vmul.f32 %v416, %v525
        %v530 = vmul.f32 %v418, %v525
        %v531 = vmul.f32 %v419, %v525
        %v532 = vmul.f32 %v421, %v525
        %v533 = vmul.f32 %v422, %v525
        %v534 = vmul.f32 %v424, %v525
        %v535 = vmul.f32 %v425, %v525
        %v536 = vmul.f32 %v427, %v525
        %v537 = vmul.f32 %v428, %v525
        %v538 = vmul.f32 %v430, %v525
        %v539 = vmul.f32 %v431, %v525
        %v540 = vmul.f32 %v433, %v525
        %v541 = vmul.f32 %v434, %v525
        %v542 = vmul.f32 %v436, %v525
        %v543 = vmul.f32 %v437, %v525
        %v544 = vmul.f32 %v439, %v525
        %v545 = vmul.f32 %v440, %v525
        %v546 = vmul.f32 %v442, %v525
        %v547 = vmul.f32 %v443, %v525
        %v548 = vmul.f32 %v445, %v525
        %v549 = vmul.f32 %v446, %v525
        %v550 = vmul.f32 %v448, %v525
        %v551 = vmul.f32 %v449, %v525
        %v552 = vmul.f32 %v451, %v525
        %v553 = vmul.f32 %v452, %v525
        %v554 = vmul.f32 %v454, %v525
        %v555 = vmul.f32 %v455, %v525
        %v556 = vmul.f32 %v457, %v525
        %v557 = vmul.f32 %v458, %v525
        %vm590 = vcmask 1040384
        %v591 = vrot.slane %v526, 7
        %v592 = vrot.slane %v527, 7
        %v593 = vsel %vm590, %v591, %v592
        %v594 = vrot.slane %v528, 7
        %v595 = vrot.slane %v529, 7
        %v596 = vsel %vm590, %v594, %v595
        %v597 = vrot.slane %v530, 7
        %v598 = vrot.slane %v531, 7
        %v599 = vsel %vm590, %v597, %v598
        %v600 = vrot.slane %v532, 7
        %v601 = vrot.slane %v533, 7
        %v602 = vsel %vm590, %v600, %v601
        %v603 = vrot.slane %v534, 7
        %v604 = vrot.slane %v535, 7
        %v605 = vsel %vm590, %v603, %v604
        %v606 = vrot.slane %v536, 7
        %v607 = vrot.slane %v537, 7
        %v608 = vsel %vm590, %v606, %v607
        %v609 = vrot.slane %v538, 7
        %v610 = vrot.slane %v539, 7
        %v611 = vsel %vm590, %v609, %v610
        %v612 = vrot.slane %v540, 7
        %v613 = vrot.slane %v541, 7
        %v614 = vsel %vm590, %v612, %v613
        %v615 = vrot.slane %v542, 7
        %v616 = vrot.slane %v543, 7
        %v617 = vsel %vm590, %v615, %v616
        %v618 = vrot.slane %v544, 7
        %v619 = vrot.slane %v545, 7
        %v620 = vsel %vm590, %v618, %v619
        %v621 = vrot.slane %v546, 7
        %v622 = vrot.slane %v547, 7
        %v623 = vsel %vm590, %v621, %v622
        %v624 = vrot.slane %v548, 7
        %v625 = vrot.slane %v549, 7
        %v626 = vsel %vm590, %v624, %v625
        %v627 = vrot.slane %v550, 7
        %v628 = vrot.slane %v551, 7
        %v629 = vsel %vm590, %v627, %v628
        %v630 = vrot.slane %v552, 7
        %v631 = vrot.slane %v553, 7
        %v632 = vsel %vm590, %v630, %v631
        %v633 = vrot.slane %v554, 7
        %v634 = vrot.slane %v555, 7
        %v635 = vsel %vm590, %v633, %v634
        %v636 = vrot.slane %v556, 7
        %v637 = vrot.slane %v557, 7
        %v638 = vsel %vm590, %v636, %v637
        %v687 = vadd.f32 %v473, %v591
        %v688 = vadd.f32 %v474, %v593
        %v689 = vadd.f32 %v475, %v592
        %v690 = vadd.f32 %v476, %v594
        %v691 = vadd.f32 %v477, %v596
        %v692 = vadd.f32 %v478, %v595
        %v693 = vadd.f32 %v479, %v597
        %v694 = vadd.f32 %v480, %v599
        %v695 = vadd.f32 %v481, %v598
        %v696 = vadd.f32 %v482, %v600
        %v697 = vadd.f32 %v483, %v602
        %v698 = vadd.f32 %v484, %v601
        %v699 = vadd.f32 %v485, %v603
        %v700 = vadd.f32 %v486, %v605
        %v701 = vadd.f32 %v487, %v604
        %v702 = vadd.f32 %v488, %v606
        %v703 = vadd.f32 %v489, %v608
        %v704 = vadd.f32 %v490, %v607
        %v705 = vadd.f32 %v491, %v609
        %v706 = vadd.f32 %v492, %v611
        %v707 = vadd.f32 %v493, %v610
        %v708 = vadd.f32 %v494, %v612
        %v709 = vadd.f32 %v495, %v614
        %v710 = vadd.f32 %v496, %v613
        %v711 = vadd.f32 %v497, %v615
        %v712 = vadd.f32 %v498, %v617
        %v713 = vadd.f32 %v499, %v616
        %v714 = vadd.f32 %v500, %v618
        %v715 = vadd.f32 %v501, %v620
        %v716 = vadd.f32 %v502, %v619
        %v717 = vadd.f32 %v503, %v621
        %v718 = vadd.f32 %v504, %v623
        %v719 = vadd.f32 %v505, %v622
        %v720 = vadd.f32 %v506, %v624
        %v721 = vadd.f32 %v507, %v626
        %v722 = vadd.f32 %v508, %v625
        %v723 = vadd.f32 %v509, %v627
        %v724 = vadd.f32 %v510, %v629
        %v725 = vadd.f32 %v511, %v628
        %v726 = vadd.f32 %v512, %v630
        %v727 = vadd.f32 %v513, %v632
        %v728 = vadd.f32 %v514, %v631
        %v729 = vadd.f32 %v515, %v633
        %v730 = vadd.f32 %v516, %v635
        %v731 = vadd.f32 %v517, %v634
        %v732 = vadd.f32 %v518, %v636
        %v733 = vadd.f32 %v519, %v638
        %v734 = vadd.f32 %v520, %v637
        %v735 = vld [vmem:[%s1 + $0x1] sm:$0x1]
        %v736 = vlaneseq
        %v737 = vshrl.u32 %v736, 7
        %v738 = vsub.s32 0, %v737
        %v739 = vrot.slane %v735, %v738
        %v740 = vmul.f32 %v412, %v739
        %v741 = vmul.f32 %v413, %v739
        %v742 = vmul.f32 %v414, %v739
        %v743 = vmul.f32 %v415, %v739
        %v744 = vmul.f32 %v416, %v739
        %v745 = vmul.f32 %v417, %v739
        %v746 = vmul.f32 %v418, %v739
        %v747 = vmul.f32 %v419, %v739
        %v748 = vmul.f32 %v420, %v739
        %v749 = vmul.f32 %v421, %v739
        %v750 = vmul.f32 %v422, %v739
        %v751 = vmul.f32 %v423, %v739
        %v752 = vmul.f32 %v424, %v739
        %v753 = vmul.f32 %v425, %v739
        %v754 = vmul.f32 %v426, %v739
        %v755 = vmul.f32 %v427, %v739
        %v756 = vmul.f32 %v428, %v739
        %v757 = vmul.f32 %v429, %v739
        %v758 = vmul.f32 %v430, %v739
        %v759 = vmul.f32 %v431, %v739
        %v760 = vmul.f32 %v432, %v739
        %v761 = vmul.f32 %v433, %v739
        %v762 = vmul.f32 %v434, %v739
        %v763 = vmul.f32 %v435, %v739
        %v764 = vmul.f32 %v436, %v739
        %v765 = vmul.f32 %v437, %v739
        %v766 = vmul.f32 %v438, %v739
        %v767 = vmul.f32 %v439, %v739
        %v768 = vmul.f32 %v440, %v739
        %v769 = vmul.f32 %v441, %v739
        %v770 = vmul.f32 %v442, %v739
        %v771 = vmul.f32 %v443, %v739
        %v772 = vmul.f32 %v444, %v739
        %v773 = vmul.f32 %v445, %v739
        %v774 = vmul.f32 %v446, %v739
        %v775 = vmul.f32 %v447, %v739
        %v776 = vmul.f32 %v448, %v739
        %v777 = vmul.f32 %v449, %v739
        %v778 = vmul.f32 %v450, %v739
        %v779 = vmul.f32 %v451, %v739
        %v780 = vmul.f32 %v452, %v739
        %v781 = vmul.f32 %v453, %v739
        %v782 = vmul.f32 %v454, %v739
        %v783 = vmul.f32 %v455, %v739
        %v784 = vmul.f32 %v456, %v739
        %v785 = vmul.f32 %v457, %v739
        %v786 = vmul.f32 %v458, %v739
        %v787 = vmul.f32 %v459, %v739
        %v788 = vadd.f32 %v687, %v740
        %v789 = vadd.f32 %v688, %v741
        %v790 = vadd.f32 %v689, %v742
        %v791 = vadd.f32 %v690, %v743
        %v792 = vadd.f32 %v691, %v744
        %v793 = vadd.f32 %v692, %v745
        %v794 = vadd.f32 %v693, %v746
        %v795 = vadd.f32 %v694, %v747
        %v796 = vadd.f32 %v695, %v748
        %v797 = vadd.f32 %v696, %v749
        %v798 = vadd.f32 %v697, %v750
        %v799 = vadd.f32 %v698, %v751
        %v800 = vadd.f32 %v699, %v752
        %v801 = vadd.f32 %v700, %v753
        %v802 = vadd.f32 %v701, %v754
        %v803 = vadd.f32 %v702, %v755
        %v804 = vadd.f32 %v703, %v756
        %v805 = vadd.f32 %v704, %v757
        %v806 = vadd.f32 %v705, %v758
        %v807 = vadd.f32 %v706, %v759
        %v808 = vadd.f32 %v707, %v760
        %v809 = vadd.f32 %v708, %v761
        %v810 = vadd.f32 %v709, %v762
        %v811 = vadd.f32 %v710, %v763
        %v812 = vadd.f32 %v711, %v764
        %v813 = vadd.f32 %v712, %v765
        %v814 = vadd.f32 %v713, %v766
        %v815 = vadd.f32 %v714, %v767
        %v816 = vadd.f32 %v715, %v768
        %v817 = vadd.f32 %v716, %v769
        %v818 = vadd.f32 %v717, %v770
        %v819 = vadd.f32 %v718, %v771
        %v820 = vadd.f32 %v719, %v772
        %v821 = vadd.f32 %v720, %v773
        %v822 = vadd.f32 %v721, %v774
        %v823 = vadd.f32 %v722, %v775
        %v824 = vadd.f32 %v723, %v776
        %v825 = vadd.f32 %v724, %v777
        %v826 = vadd.f32 %v725, %v778
        %v827 = vadd.f32 %v726, %v779
        %v828 = vadd.f32 %v727, %v780
        %v829 = vadd.f32 %v728, %v781
        %v830 = vadd.f32 %v729, %v782
        %v831 = vadd.f32 %v730, %v783
        %v832 = vadd.f32 %v731, %v784
        %v833 = vadd.f32 %v732, %v785
        %v834 = vadd.f32 %v733, %v786
        %v835 = vadd.f32 %v734, %v787
        %v836 = vld [vmem:[%s1 + $0x2] sm:$0x1]
        %v837 = vlaneseq
        %v838 = vshrl.u32 %v837, 7
        %v839 = vsub.s32 0, %v838
        %v840 = vrot.slane %v836, %v839
        %v841 = vmul.f32 %v412, %v840
        %v842 = vmul.f32 %v413, %v840
        %v843 = vmul.f32 %v414, %v840
        %v844 = vmul.f32 %v415, %v840
        %v845 = vmul.f32 %v416, %v840
        %v846 = vmul.f32 %v417, %v840
        %v847 = vmul.f32 %v418, %v840
        %v848 = vmul.f32 %v419, %v840
        %v849 = vmul.f32 %v420, %v840
        %v850 = vmul.f32 %v421, %v840
        %v851 = vmul.f32 %v422, %v840
        %v852 = vmul.f32 %v423, %v840
        %v853 = vmul.f32 %v424, %v840
        %v854 = vmul.f32 %v425, %v840
        %v855 = vmul.f32 %v426, %v840
        %v856 = vmul.f32 %v427, %v840
        %v857 = vmul.f32 %v428, %v840
        %v858 = vmul.f32 %v429, %v840
        %v859 = vmul.f32 %v430, %v840
        %v860 = vmul.f32 %v431, %v840
        %v861 = vmul.f32 %v432, %v840
        %v862 = vmul.f32 %v433, %v840
        %v863 = vmul.f32 %v434, %v840
        %v864 = vmul.f32 %v435, %v840
        %v865 = vmul.f32 %v436, %v840
        %v866 = vmul.f32 %v437, %v840
        %v867 = vmul.f32 %v438, %v840
        %v868 = vmul.f32 %v439, %v840
        %v869 = vmul.f32 %v440, %v840
        %v870 = vmul.f32 %v441, %v840
        %v871 = vmul.f32 %v442, %v840
        %v872 = vmul.f32 %v443, %v840
        %v873 = vmul.f32 %v444, %v840
        %v874 = vmul.f32 %v445, %v840
        %v875 = vmul.f32 %v446, %v840
        %v876 = vmul.f32 %v447, %v840
        %v877 = vmul.f32 %v448, %v840
        %v878 = vmul.f32 %v449, %v840
        %v879 = vmul.f32 %v450, %v840
        %v880 = vmul.f32 %v451, %v840
        %v881 = vmul.f32 %v452, %v840
        %v882 = vmul.f32 %v453, %v840
        %v883 = vmul.f32 %v454, %v840
        %v884 = vmul.f32 %v455, %v840
        %v885 = vmul.f32 %v456, %v840
        %v886 = vmul.f32 %v457, %v840
        %v887 = vmul.f32 %v458, %v840
        %v888 = vmul.f32 %v459, %v840
        %vm937 = vcmask 1046528
        %v938 = vrot.slane %v841, 1
        %v939 = vrot.slane %v842, 1
        %v940 = vsel %vm937, %v938, %v939
        %v941 = vrot.slane %v843, 1
        %v942 = vsel %vm937, %v939, %v941
        %v943 = vrot.slane %v844, 1
        %v944 = vrot.slane %v845, 1
        %v945 = vsel %vm937, %v943, %v944
        %v946 = vrot.slane %v846, 1
        %v947 = vsel %vm937, %v944, %v946
        %v948 = vrot.slane %v847, 1
        %v949 = vrot.slane %v848, 1
        %v950 = vsel %vm937, %v948, %v949
        %v951 = vrot.slane %v849, 1
        %v952 = vsel %vm937, %v949, %v951
        %v953 = vrot.slane %v850, 1
        %v954 = vrot.slane %v851, 1
        %v955 = vsel %vm937, %v953, %v954
        %v956 = vrot.slane %v852, 1
        %v957 = vsel %vm937, %v954, %v956
        %v958 = vrot.slane %v853, 1
        %v959 = vrot.slane %v854, 1
        %v960 = vsel %vm937, %v958, %v959
        %v961 = vrot.slane %v855, 1
        %v962 = vsel %vm937, %v959, %v961
        %v963 = vrot.slane %v856, 1
        %v964 = vrot.slane %v857, 1
        %v965 = vsel %vm937, %v963, %v964
        %v966 = vrot.slane %v858, 1
        %v967 = vsel %vm937, %v964, %v966
        %v968 = vrot.slane %v859, 1
        %v969 = vrot.slane %v860, 1
        %v970 = vsel %vm937, %v968, %v969
        %v971 = vrot.slane %v861, 1
        %v972 = vsel %vm937, %v969, %v971
        %v973 = vrot.slane %v862, 1
        %v974 = vrot.slane %v863, 1
        %v975 = vsel %vm937, %v973, %v974
        %v976 = vrot.slane %v864, 1
        %v977 = vsel %vm937, %v974, %v976
        %v978 = vrot.slane %v865, 1
        %v979 = vrot.slane %v866, 1
        %v980 = vsel %vm937, %v978, %v979
        %v981 = vrot.slane %v867, 1
        %v982 = vsel %vm937, %v979, %v981
        %v983 = vrot.slane %v868, 1
        %v984 = vrot.slane %v869, 1
        %v985 = vsel %vm937, %v983, %v984
        %v986 = vrot.slane %v870, 1
        %v987 = vsel %vm937, %v984, %v986
        %v988 = vrot.slane %v871, 1
        %v989 = vrot.slane %v872, 1
        %v990 = vsel %vm937, %v988, %v989
        %v991 = vrot.slane %v873, 1
        %v992 = vsel %vm937, %v989, %v991
        %v993 = vrot.slane %v874, 1
        %v994 = vrot.slane %v875, 1
        %v995 = vsel %vm937, %v993, %v994
        %v996 = vrot.slane %v876, 1
        %v997 = vsel %vm937, %v994, %v996
        %v998 = vrot.slane %v877, 1
        %v999 = vrot.slane %v878, 1
        %v1000 = vsel %vm937, %v998, %v999
        %v1001 = vrot.slane %v879, 1
        %v1002 = vsel %vm937, %v999, %v1001
        %v1003 = vrot.slane %v880, 1
        %v1004 = vrot.slane %v881, 1
        %v1005 = vsel %vm937, %v1003, %v1004
        %v1006 = vrot.slane %v882, 1
        %v1007 = vsel %vm937, %v1004, %v1006
        %v1008 = vrot.slane %v883, 1
        %v1009 = vrot.slane %v884, 1
        %v1010 = vsel %vm937, %v1008, %v1009
        %v1011 = vrot.slane %v885, 1
        %v1012 = vsel %vm937, %v1009, %v1011
        %v1013 = vrot.slane %v886, 1
        %v1014 = vrot.slane %v887, 1
        %v1015 = vsel %vm937, %v1013, %v1014
        %v1016 = vrot.slane %v888, 1
        %v1017 = vsel %vm937, %v1014, %v1016
        %v1066 = vadd.f32 %v788, %v940
        %v1067 = vadd.f32 %v789, %v942
        %v1068 = vadd.f32 %v790, %v941
        %v1069 = vadd.f32 %v791, %v945
        %v1070 = vadd.f32 %v792, %v947
        %v1071 = vadd.f32 %v793, %v946
        %v1072 = vadd.f32 %v794, %v950
        %v1073 = vadd.f32 %v795, %v952
        %v1074 = vadd.f32 %v796, %v951
        %v1075 = vadd.f32 %v797, %v955
        %v1076 = vadd.f32 %v798, %v957
        %v1077 = vadd.f32 %v799, %v956
        %v1078 = vadd.f32 %v800, %v960
        %v1079 = vadd.f32 %v801, %v962
        %v1080 = vadd.f32 %v802, %v961
        %v1081 = vadd.f32 %v803, %v965
        %v1082 = vadd.f32 %v804, %v967
        %v1083 = vadd.f32 %v805, %v966
        %v1084 = vadd.f32 %v806, %v970
        %v1085 = vadd.f32 %v807, %v972
        %v1086 = vadd.f32 %v808, %v971
        %v1087 = vadd.f32 %v809, %v975
        %v1088 = vadd.f32 %v810, %v977
        %v1089 = vadd.f32 %v811, %v976
        %v1090 = vadd.f32 %v812, %v980
        %v1091 = vadd.f32 %v813, %v982
        %v1092 = vadd.f32 %v814, %v981
        %v1093 = vadd.f32 %v815, %v985
        %v1094 = vadd.f32 %v816, %v987
        %v1095 = vadd.f32 %v817, %v986
        %v1096 = vadd.f32 %v818, %v990
        %v1097 = vadd.f32 %v819, %v992
        %v1098 = vadd.f32 %v820, %v991
        %v1099 = vadd.f32 %v821, %v995
        %v1100 = vadd.f32 %v822, %v997
        %v1101 = vadd.f32 %v823, %v996
        %v1102 = vadd.f32 %v824, %v1000
        %v1103 = vadd.f32 %v825, %v1002
        %v1104 = vadd.f32 %v826, %v1001
        %v1105 = vadd.f32 %v827, %v1005
        %v1106 = vadd.f32 %v828, %v1007
        %v1107 = vadd.f32 %v829, %v1006
        %v1108 = vadd.f32 %v830, %v1010
        %v1109 = vadd.f32 %v831, %v1012
        %v1110 = vadd.f32 %v832, %v1011
        %v1111 = vadd.f32 %v833, %v1015
        %v1112 = vadd.f32 %v834, %v1017
        %v1113 = vadd.f32 %v835, %v1016
        %s1114 = scalar_lea.vmem %s1, 4
        %v1115 = vld [vmem:[%s1114] sm:$0x1]
        %v1116 = vlaneseq
        %v1117 = vshrl.u32 %v1116, 7
        %v1118 = vsub.s32 0, %v1117
        %v1119 = vrot.slane %v1115, %v1118
        %v1120 = vmul.f32 %v415, %v1119
        %v1121 = vmul.f32 %v416, %v1119
        %v1122 = vmul.f32 %v418, %v1119
        %v1123 = vmul.f32 %v419, %v1119
        %v1124 = vmul.f32 %v421, %v1119
        %v1125 = vmul.f32 %v422, %v1119
        %v1126 = vmul.f32 %v424, %v1119
        %v1127 = vmul.f32 %v425, %v1119
        %v1128 = vmul.f32 %v427, %v1119
        %v1129 = vmul.f32 %v428, %v1119
        %v1130 = vmul.f32 %v430, %v1119
        %v1131 = vmul.f32 %v431, %v1119
        %v1132 = vmul.f32 %v433, %v1119
        %v1133 = vmul.f32 %v434, %v1119
        %v1134 = vmul.f32 %v436, %v1119
        %v1135 = vmul.f32 %v437, %v1119
        %v1136 = vmul.f32 %v439, %v1119
        %v1137 = vmul.f32 %v440, %v1119
        %v1138 = vmul.f32 %v442, %v1119
        %v1139 = vmul.f32 %v443, %v1119
        %v1140 = vmul.f32 %v445, %v1119
        %v1141 = vmul.f32 %v446, %v1119
        %v1142 = vmul.f32 %v448, %v1119
        %v1143 = vmul.f32 %v449, %v1119
        %v1144 = vmul.f32 %v451, %v1119
        %v1145 = vmul.f32 %v452, %v1119
        %v1146 = vmul.f32 %v454, %v1119
        %v1147 = vmul.f32 %v455, %v1119
        %v1148 = vmul.f32 %v457, %v1119
        %v1149 = vmul.f32 %v458, %v1119
        %v1150 = vmul.f32 %v460, %v1119
        %v1151 = vmul.f32 %v461, %v1119
        %v1184 = vrot.slane %v1120, 7
        %v1185 = vrot.slane %v1121, 7
        %v1186 = vsel %vm590, %v1184, %v1185
        %v1187 = vrot.slane %v1122, 7
        %v1188 = vrot.slane %v1123, 7
        %v1189 = vsel %vm590, %v1187, %v1188
        %v1190 = vrot.slane %v1124, 7
        %v1191 = vrot.slane %v1125, 7
        %v1192 = vsel %vm590, %v1190, %v1191
        %v1193 = vrot.slane %v1126, 7
        %v1194 = vrot.slane %v1127, 7
        %v1195 = vsel %vm590, %v1193, %v1194
        %v1196 = vrot.slane %v1128, 7
        %v1197 = vrot.slane %v1129, 7
        %v1198 = vsel %vm590, %v1196, %v1197
        %v1199 = vrot.slane %v1130, 7
        %v1200 = vrot.slane %v1131, 7
        %v1201 = vsel %vm590, %v1199, %v1200
        %v1202 = vrot.slane %v1132, 7
        %v1203 = vrot.slane %v1133, 7
        %v1204 = vsel %vm590, %v1202, %v1203
        %v1205 = vrot.slane %v1134, 7
        %v1206 = vrot.slane %v1135, 7
        %v1207 = vsel %vm590, %v1205, %v1206
        %v1208 = vrot.slane %v1136, 7
        %v1209 = vrot.slane %v1137, 7
        %v1210 = vsel %vm590, %v1208, %v1209
        %v1211 = vrot.slane %v1138, 7
        %v1212 = vrot.slane %v1139, 7
        %v1213 = vsel %vm590, %v1211, %v1212
        %v1214 = vrot.slane %v1140, 7
        %v1215 = vrot.slane %v1141, 7
        %v1216 = vsel %vm590, %v1214, %v1215
        %v1217 = vrot.slane %v1142, 7
        %v1218 = vrot.slane %v1143, 7
        %v1219 = vsel %vm590, %v1217, %v1218
        %v1220 = vrot.slane %v1144, 7
        %v1221 = vrot.slane %v1145, 7
        %v1222 = vsel %vm590, %v1220, %v1221
        %v1223 = vrot.slane %v1146, 7
        %v1224 = vrot.slane %v1147, 7
        %v1225 = vsel %vm590, %v1223, %v1224
        %v1226 = vrot.slane %v1148, 7
        %v1227 = vrot.slane %v1149, 7
        %v1228 = vsel %vm590, %v1226, %v1227
        %v1229 = vrot.slane %v1150, 7
        %v1230 = vrot.slane %v1151, 7
        %v1231 = vsel %vm590, %v1229, %v1230
        %v1280 = vadd.f32 %v1066, %v1184
        %v1281 = vadd.f32 %v1067, %v1186
        %v1282 = vadd.f32 %v1068, %v1185
        %v1283 = vadd.f32 %v1069, %v1187
        %v1284 = vadd.f32 %v1070, %v1189
        %v1285 = vadd.f32 %v1071, %v1188
        %v1286 = vadd.f32 %v1072, %v1190
        %v1287 = vadd.f32 %v1073, %v1192
        %v1288 = vadd.f32 %v1074, %v1191
        %v1289 = vadd.f32 %v1075, %v1193
        %v1290 = vadd.f32 %v1076, %v1195
        %v1291 = vadd.f32 %v1077, %v1194
        %v1292 = vadd.f32 %v1078, %v1196
        %v1293 = vadd.f32 %v1079, %v1198
        %v1294 = vadd.f32 %v1080, %v1197
        %v1295 = vadd.f32 %v1081, %v1199
        %v1296 = vadd.f32 %v1082, %v1201
        %v1297 = vadd.f32 %v1083, %v1200
        %v1298 = vadd.f32 %v1084, %v1202
        %v1299 = vadd.f32 %v1085, %v1204
        %v1300 = vadd.f32 %v1086, %v1203
        %v1301 = vadd.f32 %v1087, %v1205
        %v1302 = vadd.f32 %v1088, %v1207
        %v1303 = vadd.f32 %v1089, %v1206
        %v1304 = vadd.f32 %v1090, %v1208
        %v1305 = vadd.f32 %v1091, %v1210
        %v1306 = vadd.f32 %v1092, %v1209
        %v1307 = vadd.f32 %v1093, %v1211
        %v1308 = vadd.f32 %v1094, %v1213
        %v1309 = vadd.f32 %v1095, %v1212
        %v1310 = vadd.f32 %v1096, %v1214
        %v1311 = vadd.f32 %v1097, %v1216
        %v1312 = vadd.f32 %v1098, %v1215
        %v1313 = vadd.f32 %v1099, %v1217
        %v1314 = vadd.f32 %v1100, %v1219
        %v1315 = vadd.f32 %v1101, %v1218
        %v1316 = vadd.f32 %v1102, %v1220
        %v1317 = vadd.f32 %v1103, %v1222
        %v1318 = vadd.f32 %v1104, %v1221
        %v1319 = vadd.f32 %v1105, %v1223
        %v1320 = vadd.f32 %v1106, %v1225
        %v1321 = vadd.f32 %v1107, %v1224
        %v1322 = vadd.f32 %v1108, %v1226
        %v1323 = vadd.f32 %v1109, %v1228
        %v1324 = vadd.f32 %v1110, %v1227
        %v1325 = vadd.f32 %v1111, %v1229
        %v1326 = vadd.f32 %v1112, %v1231
        %v1327 = vadd.f32 %v1113, %v1230
        %v1328 = vld [vmem:[%s1114 + $0x1] sm:$0x1]
        %v1329 = vlaneseq
        %v1330 = vshrl.u32 %v1329, 7
        %v1331 = vsub.s32 0, %v1330
        %v1332 = vrot.slane %v1328, %v1331
        %v1333 = vmul.f32 %v415, %v1332
        %v1334 = vmul.f32 %v416, %v1332
        %v1335 = vmul.f32 %v417, %v1332
        %v1336 = vmul.f32 %v418, %v1332
        %v1337 = vmul.f32 %v419, %v1332
        %v1338 = vmul.f32 %v420, %v1332
        %v1339 = vmul.f32 %v421, %v1332
        %v1340 = vmul.f32 %v422, %v1332
        %v1341 = vmul.f32 %v423, %v1332
        %v1342 = vmul.f32 %v424, %v1332
        %v1343 = vmul.f32 %v425, %v1332
        %v1344 = vmul.f32 %v426, %v1332
        %v1345 = vmul.f32 %v427, %v1332
        %v1346 = vmul.f32 %v428, %v1332
        %v1347 = vmul.f32 %v429, %v1332
        %v1348 = vmul.f32 %v430, %v1332
        %v1349 = vmul.f32 %v431, %v1332
        %v1350 = vmul.f32 %v432, %v1332
        %v1351 = vmul.f32 %v433, %v1332
        %v1352 = vmul.f32 %v434, %v1332
        %v1353 = vmul.f32 %v435, %v1332
        %v1354 = vmul.f32 %v436, %v1332
        %v1355 = vmul.f32 %v437, %v1332
        %v1356 = vmul.f32 %v438, %v1332
        %v1357 = vmul.f32 %v439, %v1332
        %v1358 = vmul.f32 %v440, %v1332
        %v1359 = vmul.f32 %v441, %v1332
        %v1360 = vmul.f32 %v442, %v1332
        %v1361 = vmul.f32 %v443, %v1332
        %v1362 = vmul.f32 %v444, %v1332
        %v1363 = vmul.f32 %v445, %v1332
        %v1364 = vmul.f32 %v446, %v1332
        %v1365 = vmul.f32 %v447, %v1332
        %v1366 = vmul.f32 %v448, %v1332
        %v1367 = vmul.f32 %v449, %v1332
        %v1368 = vmul.f32 %v450, %v1332
        %v1369 = vmul.f32 %v451, %v1332
        %v1370 = vmul.f32 %v452, %v1332
        %v1371 = vmul.f32 %v453, %v1332
        %v1372 = vmul.f32 %v454, %v1332
        %v1373 = vmul.f32 %v455, %v1332
        %v1374 = vmul.f32 %v456, %v1332
        %v1375 = vmul.f32 %v457, %v1332
        %v1376 = vmul.f32 %v458, %v1332
        %v1377 = vmul.f32 %v459, %v1332
        %v1378 = vmul.f32 %v460, %v1332
        %v1379 = vmul.f32 %v461, %v1332
        %v1380 = vmul.f32 %v462, %v1332
        %v1381 = vadd.f32 %v1280, %v1333
        %v1382 = vadd.f32 %v1281, %v1334
        %v1383 = vadd.f32 %v1282, %v1335
        %v1384 = vadd.f32 %v1283, %v1336
        %v1385 = vadd.f32 %v1284, %v1337
        %v1386 = vadd.f32 %v1285, %v1338
        %v1387 = vadd.f32 %v1286, %v1339
        %v1388 = vadd.f32 %v1287, %v1340
        %v1389 = vadd.f32 %v1288, %v1341
        %v1390 = vadd.f32 %v1289, %v1342
        %v1391 = vadd.f32 %v1290, %v1343
        %v1392 = vadd.f32 %v1291, %v1344
        %v1393 = vadd.f32 %v1292, %v1345
        %v1394 = vadd.f32 %v1293, %v1346
        %v1395 = vadd.f32 %v1294, %v1347
        %v1396 = vadd.f32 %v1295, %v1348
        %v1397 = vadd.f32 %v1296, %v1349
        %v1398 = vadd.f32 %v1297, %v1350
        %v1399 = vadd.f32 %v1298, %v1351
        %v1400 = vadd.f32 %v1299, %v1352
        %v1401 = vadd.f32 %v1300, %v1353
        %v1402 = vadd.f32 %v1301, %v1354
        %v1403 = vadd.f32 %v1302, %v1355
        %v1404 = vadd.f32 %v1303, %v1356
        %v1405 = vadd.f32 %v1304, %v1357
        %v1406 = vadd.f32 %v1305, %v1358
        %v1407 = vadd.f32 %v1306, %v1359
        %v1408 = vadd.f32 %v1307, %v1360
        %v1409 = vadd.f32 %v1308, %v1361
        %v1410 = vadd.f32 %v1309, %v1362
        %v1411 = vadd.f32 %v1310, %v1363
        %v1412 = vadd.f32 %v1311, %v1364
        %v1413 = vadd.f32 %v1312, %v1365
        %v1414 = vadd.f32 %v1313, %v1366
        %v1415 = vadd.f32 %v1314, %v1367
        %v1416 = vadd.f32 %v1315, %v1368
        %v1417 = vadd.f32 %v1316, %v1369
        %v1418 = vadd.f32 %v1317, %v1370
        %v1419 = vadd.f32 %v1318, %v1371
        %v1420 = vadd.f32 %v1319, %v1372
        %v1421 = vadd.f32 %v1320, %v1373
        %v1422 = vadd.f32 %v1321, %v1374
        %v1423 = vadd.f32 %v1322, %v1375
        %v1424 = vadd.f32 %v1323, %v1376
        %v1425 = vadd.f32 %v1324, %v1377
        %v1426 = vadd.f32 %v1325, %v1378
        %v1427 = vadd.f32 %v1326, %v1379
        %v1428 = vadd.f32 %v1327, %v1380
        %v1429 = vld [vmem:[%s1114 + $0x2] sm:$0x1]
        %v1430 = vlaneseq
        %v1431 = vshrl.u32 %v1430, 7
        %v1432 = vsub.s32 0, %v1431
        %v1433 = vrot.slane %v1429, %v1432
        %v1434 = vmul.f32 %v415, %v1433
        %v1435 = vmul.f32 %v416, %v1433
        %v1436 = vmul.f32 %v417, %v1433
        %v1437 = vmul.f32 %v418, %v1433
        %v1438 = vmul.f32 %v419, %v1433
        %v1439 = vmul.f32 %v420, %v1433
        %v1440 = vmul.f32 %v421, %v1433
        %v1441 = vmul.f32 %v422, %v1433
        %v1442 = vmul.f32 %v423, %v1433
        %v1443 = vmul.f32 %v424, %v1433
        %v1444 = vmul.f32 %v425, %v1433
        %v1445 = vmul.f32 %v426, %v1433
        %v1446 = vmul.f32 %v427, %v1433
        %v1447 = vmul.f32 %v428, %v1433
        %v1448 = vmul.f32 %v429, %v1433
        %v1449 = vmul.f32 %v430, %v1433
        %v1450 = vmul.f32 %v431, %v1433
        %v1451 = vmul.f32 %v432, %v1433
        %v1452 = vmul.f32 %v433, %v1433
        %v1453 = vmul.f32 %v434, %v1433
        %v1454 = vmul.f32 %v435, %v1433
        %v1455 = vmul.f32 %v436, %v1433
        %v1456 = vmul.f32 %v437, %v1433
        %v1457 = vmul.f32 %v438, %v1433
        %v1458 = vmul.f32 %v439, %v1433
        %v1459 = vmul.f32 %v440, %v1433
        %v1460 = vmul.f32 %v441, %v1433
        %v1461 = vmul.f32 %v442, %v1433
        %v1462 = vmul.f32 %v443, %v1433
        %v1463 = vmul.f32 %v444, %v1433
        %v1464 = vmul.f32 %v445, %v1433
        %v1465 = vmul.f32 %v446, %v1433
        %v1466 = vmul.f32 %v447, %v1433
        %v1467 = vmul.f32 %v448, %v1433
        %v1468 = vmul.f32 %v449, %v1433
        %v1469 = vmul.f32 %v450, %v1433
        %v1470 = vmul.f32 %v451, %v1433
        %v1471 = vmul.f32 %v452, %v1433
        %v1472 = vmul.f32 %v453, %v1433
        %v1473 = vmul.f32 %v454, %v1433
        %v1474 = vmul.f32 %v455, %v1433
        %v1475 = vmul.f32 %v456, %v1433
        %v1476 = vmul.f32 %v457, %v1433
        %v1477 = vmul.f32 %v458, %v1433
        %v1478 = vmul.f32 %v459, %v1433
        %v1479 = vmul.f32 %v460, %v1433
        %v1480 = vmul.f32 %v461, %v1433
        %v1481 = vmul.f32 %v462, %v1433
        %v1530 = vrot.slane %v1434, 1
        %v1531 = vrot.slane %v1435, 1
        %v1532 = vsel %vm937, %v1530, %v1531
        %v1533 = vrot.slane %v1436, 1
        %v1534 = vsel %vm937, %v1531, %v1533
        %v1535 = vrot.slane %v1437, 1
        %v1536 = vrot.slane %v1438, 1
        %v1537 = vsel %vm937, %v1535, %v1536
        %v1538 = vrot.slane %v1439, 1
        %v1539 = vsel %vm937, %v1536, %v1538
        %v1540 = vrot.slane %v1440, 1
        %v1541 = vrot.slane %v1441, 1
        %v1542 = vsel %vm937, %v1540, %v1541
        %v1543 = vrot.slane %v1442, 1
        %v1544 = vsel %vm937, %v1541, %v1543
        %v1545 = vrot.slane %v1443, 1
        %v1546 = vrot.slane %v1444, 1
        %v1547 = vsel %vm937, %v1545, %v1546
        %v1548 = vrot.slane %v1445, 1
        %v1549 = vsel %vm937, %v1546, %v1548
        %v1550 = vrot.slane %v1446, 1
        %v1551 = vrot.slane %v1447, 1
        %v1552 = vsel %vm937, %v1550, %v1551
        %v1553 = vrot.slane %v1448, 1
        %v1554 = vsel %vm937, %v1551, %v1553
        %v1555 = vrot.slane %v1449, 1
        %v1556 = vrot.slane %v1450, 1
        %v1557 = vsel %vm937, %v1555, %v1556
        %v1558 = vrot.slane %v1451, 1
        %v1559 = vsel %vm937, %v1556, %v1558
        %v1560 = vrot.slane %v1452, 1
        %v1561 = vrot.slane %v1453, 1
        %v1562 = vsel %vm937, %v1560, %v1561
        %v1563 = vrot.slane %v1454, 1
        %v1564 = vsel %vm937, %v1561, %v1563
        %v1565 = vrot.slane %v1455, 1
        %v1566 = vrot.slane %v1456, 1
        %v1567 = vsel %vm937, %v1565, %v1566
        %v1568 = vrot.slane %v1457, 1
        %v1569 = vsel %vm937, %v1566, %v1568
        %v1570 = vrot.slane %v1458, 1
        %v1571 = vrot.slane %v1459, 1
        %v1572 = vsel %vm937, %v1570, %v1571
        %v1573 = vrot.slane %v1460, 1
        %v1574 = vsel %vm937, %v1571, %v1573
        %v1575 = vrot.slane %v1461, 1
        %v1576 = vrot.slane %v1462, 1
        %v1577 = vsel %vm937, %v1575, %v1576
        %v1578 = vrot.slane %v1463, 1
        %v1579 = vsel %vm937, %v1576, %v1578
        %v1580 = vrot.slane %v1464, 1
        %v1581 = vrot.slane %v1465, 1
        %v1582 = vsel %vm937, %v1580, %v1581
        %v1583 = vrot.slane %v1466, 1
        %v1584 = vsel %vm937, %v1581, %v1583
        %v1585 = vrot.slane %v1467, 1
        %v1586 = vrot.slane %v1468, 1
        %v1587 = vsel %vm937, %v1585, %v1586
        %v1588 = vrot.slane %v1469, 1
        %v1589 = vsel %vm937, %v1586, %v1588
        %v1590 = vrot.slane %v1470, 1
        %v1591 = vrot.slane %v1471, 1
        %v1592 = vsel %vm937, %v1590, %v1591
        %v1593 = vrot.slane %v1472, 1
        %v1594 = vsel %vm937, %v1591, %v1593
        %v1595 = vrot.slane %v1473, 1
        %v1596 = vrot.slane %v1474, 1
        %v1597 = vsel %vm937, %v1595, %v1596
        %v1598 = vrot.slane %v1475, 1
        %v1599 = vsel %vm937, %v1596, %v1598
        %v1600 = vrot.slane %v1476, 1
        %v1601 = vrot.slane %v1477, 1
        %v1602 = vsel %vm937, %v1600, %v1601
        %v1603 = vrot.slane %v1478, 1
        %v1604 = vsel %vm937, %v1601, %v1603
        %v1605 = vrot.slane %v1479, 1
        %v1606 = vrot.slane %v1480, 1
        %v1607 = vsel %vm937, %v1605, %v1606
        %v1608 = vrot.slane %v1481, 1
        %v1609 = vsel %vm937, %v1606, %v1608
        %v1658 = vadd.f32 %v1381, %v1532
        %v1659 = vadd.f32 %v1382, %v1534
        %v1660 = vadd.f32 %v1383, %v1533
        %v1661 = vadd.f32 %v1384, %v1537
        %v1662 = vadd.f32 %v1385, %v1539
        %v1663 = vadd.f32 %v1386, %v1538
        %v1664 = vadd.f32 %v1387, %v1542
        %v1665 = vadd.f32 %v1388, %v1544
        %v1666 = vadd.f32 %v1389, %v1543
        %v1667 = vadd.f32 %v1390, %v1547
        %v1668 = vadd.f32 %v1391, %v1549
        %v1669 = vadd.f32 %v1392, %v1548
        %v1670 = vadd.f32 %v1393, %v1552
        %v1671 = vadd.f32 %v1394, %v1554
        %v1672 = vadd.f32 %v1395, %v1553
        %v1673 = vadd.f32 %v1396, %v1557
        %v1674 = vadd.f32 %v1397, %v1559
        %v1675 = vadd.f32 %v1398, %v1558
        %v1676 = vadd.f32 %v1399, %v1562
        %v1677 = vadd.f32 %v1400, %v1564
        %v1678 = vadd.f32 %v1401, %v1563
        %v1679 = vadd.f32 %v1402, %v1567
        %v1680 = vadd.f32 %v1403, %v1569
        %v1681 = vadd.f32 %v1404, %v1568
        %v1682 = vadd.f32 %v1405, %v1572
        %v1683 = vadd.f32 %v1406, %v1574
        %v1684 = vadd.f32 %v1407, %v1573
        %v1685 = vadd.f32 %v1408, %v1577
        %v1686 = vadd.f32 %v1409, %v1579
        %v1687 = vadd.f32 %v1410, %v1578
        %v1688 = vadd.f32 %v1411, %v1582
        %v1689 = vadd.f32 %v1412, %v1584
        %v1690 = vadd.f32 %v1413, %v1583
        %v1691 = vadd.f32 %v1414, %v1587
        %v1692 = vadd.f32 %v1415, %v1589
        %v1693 = vadd.f32 %v1416, %v1588
        %v1694 = vadd.f32 %v1417, %v1592
        %v1695 = vadd.f32 %v1418, %v1594
        %v1696 = vadd.f32 %v1419, %v1593
        %v1697 = vadd.f32 %v1420, %v1597
        %v1698 = vadd.f32 %v1421, %v1599
        %v1699 = vadd.f32 %v1422, %v1598
        %v1700 = vadd.f32 %v1423, %v1602
        %v1701 = vadd.f32 %v1424, %v1604
        %v1702 = vadd.f32 %v1425, %v1603
        %v1703 = vadd.f32 %v1426, %v1607
        %v1704 = vadd.f32 %v1427, %v1609
        %v1705 = vadd.f32 %v1428, %v1608
        %s1706 = scalar_lea.vmem %s1, 8
        %v1707 = vld [vmem:[%s1706] sm:$0x1]
        %v1708 = vlaneseq
        %v1709 = vshrl.u32 %v1708, 7
        %v1710 = vsub.s32 0, %v1709
        %v1711 = vrot.slane %v1707, %v1710
        %v1712 = vmul.f32 %v418, %v1711
        %v1713 = vmul.f32 %v419, %v1711
        %v1714 = vmul.f32 %v421, %v1711
        %v1715 = vmul.f32 %v422, %v1711
        %v1716 = vmul.f32 %v424, %v1711
        %v1717 = vmul.f32 %v425, %v1711
        %v1718 = vmul.f32 %v427, %v1711
        %v1719 = vmul.f32 %v428, %v1711
        %v1720 = vmul.f32 %v430, %v1711
        %v1721 = vmul.f32 %v431, %v1711
        %v1722 = vmul.f32 %v433, %v1711
        %v1723 = vmul.f32 %v434, %v1711
        %v1724 = vmul.f32 %v436, %v1711
        %v1725 = vmul.f32 %v437, %v1711
        %v1726 = vmul.f32 %v439, %v1711
        %v1727 = vmul.f32 %v440, %v1711
        %v1728 = vmul.f32 %v442, %v1711
        %v1729 = vmul.f32 %v443, %v1711
        %v1730 = vmul.f32 %v445, %v1711
        %v1731 = vmul.f32 %v446, %v1711
        %v1732 = vmul.f32 %v448, %v1711
        %v1733 = vmul.f32 %v449, %v1711
        %v1734 = vmul.f32 %v451, %v1711
        %v1735 = vmul.f32 %v452, %v1711
        %v1736 = vmul.f32 %v454, %v1711
        %v1737 = vmul.f32 %v455, %v1711
        %v1738 = vmul.f32 %v457, %v1711
        %v1739 = vmul.f32 %v458, %v1711
        %v1740 = vmul.f32 %v460, %v1711
        %v1741 = vmul.f32 %v461, %v1711
        %v1742 = vmul.f32 %v463, %v1711
        %v1743 = vmul.f32 %v464, %v1711
        %v1776 = vrot.slane %v1712, 7
        %v1777 = vrot.slane %v1713, 7
        %v1778 = vsel %vm590, %v1776, %v1777
        %v1779 = vrot.slane %v1714, 7
        %v1780 = vrot.slane %v1715, 7
        %v1781 = vsel %vm590, %v1779, %v1780
        %v1782 = vrot.slane %v1716, 7
        %v1783 = vrot.slane %v1717, 7
        %v1784 = vsel %vm590, %v1782, %v1783
        %v1785 = vrot.slane %v1718, 7
        %v1786 = vrot.slane %v1719, 7
        %v1787 = vsel %vm590, %v1785, %v1786
        %v1788 = vrot.slane %v1720, 7
        %v1789 = vrot.slane %v1721, 7
        %v1790 = vsel %vm590, %v1788, %v1789
        %v1791 = vrot.slane %v1722, 7
        %v1792 = vrot.slane %v1723, 7
        %v1793 = vsel %vm590, %v1791, %v1792
        %v1794 = vrot.slane %v1724, 7
        %v1795 = vrot.slane %v1725, 7
        %v1796 = vsel %vm590, %v1794, %v1795
        %v1797 = vrot.slane %v1726, 7
        %v1798 = vrot.slane %v1727, 7
        %v1799 = vsel %vm590, %v1797, %v1798
        %v1800 = vrot.slane %v1728, 7
        %v1801 = vrot.slane %v1729, 7
        %v1802 = vsel %vm590, %v1800, %v1801
        %v1803 = vrot.slane %v1730, 7
        %v1804 = vrot.slane %v1731, 7
        %v1805 = vsel %vm590, %v1803, %v1804
        %v1806 = vrot.slane %v1732, 7
        %v1807 = vrot.slane %v1733, 7
        %v1808 = vsel %vm590, %v1806, %v1807
        %v1809 = vrot.slane %v1734, 7
        %v1810 = vrot.slane %v1735, 7
        %v1811 = vsel %vm590, %v1809, %v1810
        %v1812 = vrot.slane %v1736, 7
        %v1813 = vrot.slane %v1737, 7
        %v1814 = vsel %vm590, %v1812, %v1813
        %v1815 = vrot.slane %v1738, 7
        %v1816 = vrot.slane %v1739, 7
        %v1817 = vsel %vm590, %v1815, %v1816
        %v1818 = vrot.slane %v1740, 7
        %v1819 = vrot.slane %v1741, 7
        %v1820 = vsel %vm590, %v1818, %v1819
        %v1821 = vrot.slane %v1742, 7
        %v1822 = vrot.slane %v1743, 7
        %v1823 = vsel %vm590, %v1821, %v1822
        %v1872 = vadd.f32 %v1658, %v1776
        %v1873 = vadd.f32 %v1659, %v1778
        %v1874 = vadd.f32 %v1660, %v1777
        %v1875 = vadd.f32 %v1661, %v1779
        %v1876 = vadd.f32 %v1662, %v1781
        %v1877 = vadd.f32 %v1663, %v1780
        %v1878 = vadd.f32 %v1664, %v1782
        %v1879 = vadd.f32 %v1665, %v1784
        %v1880 = vadd.f32 %v1666, %v1783
        %v1881 = vadd.f32 %v1667, %v1785
        %v1882 = vadd.f32 %v1668, %v1787
        %v1883 = vadd.f32 %v1669, %v1786
        %v1884 = vadd.f32 %v1670, %v1788
        %v1885 = vadd.f32 %v1671, %v1790
        %v1886 = vadd.f32 %v1672, %v1789
        %v1887 = vadd.f32 %v1673, %v1791
        %v1888 = vadd.f32 %v1674, %v1793
        %v1889 = vadd.f32 %v1675, %v1792
        %v1890 = vadd.f32 %v1676, %v1794
        %v1891 = vadd.f32 %v1677, %v1796
        %v1892 = vadd.f32 %v1678, %v1795
        %v1893 = vadd.f32 %v1679, %v1797
        %v1894 = vadd.f32 %v1680, %v1799
        %v1895 = vadd.f32 %v1681, %v1798
        %v1896 = vadd.f32 %v1682, %v1800
        %v1897 = vadd.f32 %v1683, %v1802
        %v1898 = vadd.f32 %v1684, %v1801
        %v1899 = vadd.f32 %v1685, %v1803
        %v1900 = vadd.f32 %v1686, %v1805
        %v1901 = vadd.f32 %v1687, %v1804
        %v1902 = vadd.f32 %v1688, %v1806
        %v1903 = vadd.f32 %v1689, %v1808
        %v1904 = vadd.f32 %v1690, %v1807
        %v1905 = vadd.f32 %v1691, %v1809
        %v1906 = vadd.f32 %v1692, %v1811
        %v1907 = vadd.f32 %v1693, %v1810
        %v1908 = vadd.f32 %v1694, %v1812
        %v1909 = vadd.f32 %v1695, %v1814
        %v1910 = vadd.f32 %v1696, %v1813
        %v1911 = vadd.f32 %v1697, %v1815
        %v1912 = vadd.f32 %v1698, %v1817
        %v1913 = vadd.f32 %v1699, %v1816
        %v1914 = vadd.f32 %v1700, %v1818
        %v1915 = vadd.f32 %v1701, %v1820
        %v1916 = vadd.f32 %v1702, %v1819
        %v1917 = vadd.f32 %v1703, %v1821
        %v1918 = vadd.f32 %v1704, %v1823
        %v1919 = vadd.f32 %v1705, %v1822
        %v1920 = vld [vmem:[%s1706 + $0x1] sm:$0x1]
        %v1921 = vlaneseq
        %v1922 = vshrl.u32 %v1921, 7
        %v1923 = vsub.s32 0, %v1922
        %v1924 = vrot.slane %v1920, %v1923
        %v1925 = vmul.f32 %v418, %v1924
        %v1926 = vmul.f32 %v419, %v1924
        %v1927 = vmul.f32 %v420, %v1924
        %v1928 = vmul.f32 %v421, %v1924
        %v1929 = vmul.f32 %v422, %v1924
        %v1930 = vmul.f32 %v423, %v1924
        %v1931 = vmul.f32 %v424, %v1924
        %v1932 = vmul.f32 %v425, %v1924
        %v1933 = vmul.f32 %v426, %v1924
        %v1934 = vmul.f32 %v427, %v1924
        %v1935 = vmul.f32 %v428, %v1924
        %v1936 = vmul.f32 %v429, %v1924
        %v1937 = vmul.f32 %v430, %v1924
        %v1938 = vmul.f32 %v431, %v1924
        %v1939 = vmul.f32 %v432, %v1924
        %v1940 = vmul.f32 %v433, %v1924
        %v1941 = vmul.f32 %v434, %v1924
        %v1942 = vmul.f32 %v435, %v1924
        %v1943 = vmul.f32 %v436, %v1924
        %v1944 = vmul.f32 %v437, %v1924
        %v1945 = vmul.f32 %v438, %v1924
        %v1946 = vmul.f32 %v439, %v1924
        %v1947 = vmul.f32 %v440, %v1924
        %v1948 = vmul.f32 %v441, %v1924
        %v1949 = vmul.f32 %v442, %v1924
        %v1950 = vmul.f32 %v443, %v1924
        %v1951 = vmul.f32 %v444, %v1924
        %v1952 = vmul.f32 %v445, %v1924
        %v1953 = vmul.f32 %v446, %v1924
        %v1954 = vmul.f32 %v447, %v1924
        %v1955 = vmul.f32 %v448, %v1924
        %v1956 = vmul.f32 %v449, %v1924
        %v1957 = vmul.f32 %v450, %v1924
        %v1958 = vmul.f32 %v451, %v1924
        %v1959 = vmul.f32 %v452, %v1924
        %v1960 = vmul.f32 %v453, %v1924
        %v1961 = vmul.f32 %v454, %v1924
        %v1962 = vmul.f32 %v455, %v1924
        %v1963 = vmul.f32 %v456, %v1924
        %v1964 = vmul.f32 %v457, %v1924
        %v1965 = vmul.f32 %v458, %v1924
        %v1966 = vmul.f32 %v459, %v1924
        %v1967 = vmul.f32 %v460, %v1924
        %v1968 = vmul.f32 %v461, %v1924
        %v1969 = vmul.f32 %v462, %v1924
        %v1970 = vmul.f32 %v463, %v1924
        %v1971 = vmul.f32 %v464, %v1924
        %v1972 = vmul.f32 %v465, %v1924
        %v1973 = vadd.f32 %v1872, %v1925
        %v1974 = vadd.f32 %v1873, %v1926
        %v1975 = vadd.f32 %v1874, %v1927
        %v1976 = vadd.f32 %v1875, %v1928
        %v1977 = vadd.f32 %v1876, %v1929
        %v1978 = vadd.f32 %v1877, %v1930
        %v1979 = vadd.f32 %v1878, %v1931
        %v1980 = vadd.f32 %v1879, %v1932
        %v1981 = vadd.f32 %v1880, %v1933
        %v1982 = vadd.f32 %v1881, %v1934
        %v1983 = vadd.f32 %v1882, %v1935
        %v1984 = vadd.f32 %v1883, %v1936
        %v1985 = vadd.f32 %v1884, %v1937
        %v1986 = vadd.f32 %v1885, %v1938
        %v1987 = vadd.f32 %v1886, %v1939
        %v1988 = vadd.f32 %v1887, %v1940
        %v1989 = vadd.f32 %v1888, %v1941
        %v1990 = vadd.f32 %v1889, %v1942
        %v1991 = vadd.f32 %v1890, %v1943
        %v1992 = vadd.f32 %v1891, %v1944
        %v1993 = vadd.f32 %v1892, %v1945
        %v1994 = vadd.f32 %v1893, %v1946
        %v1995 = vadd.f32 %v1894, %v1947
        %v1996 = vadd.f32 %v1895, %v1948
        %v1997 = vadd.f32 %v1896, %v1949
        %v1998 = vadd.f32 %v1897, %v1950
        %v1999 = vadd.f32 %v1898, %v1951
        %v2000 = vadd.f32 %v1899, %v1952
        %v2001 = vadd.f32 %v1900, %v1953
        %v2002 = vadd.f32 %v1901, %v1954
        %v2003 = vadd.f32 %v1902, %v1955
        %v2004 = vadd.f32 %v1903, %v1956
        %v2005 = vadd.f32 %v1904, %v1957
        %v2006 = vadd.f32 %v1905, %v1958
        %v2007 = vadd.f32 %v1906, %v1959
        %v2008 = vadd.f32 %v1907, %v1960
        %v2009 = vadd.f32 %v1908, %v1961
        %v2010 = vadd.f32 %v1909, %v1962
        %v2011 = vadd.f32 %v1910, %v1963
        %v2012 = vadd.f32 %v1911, %v1964
        %v2013 = vadd.f32 %v1912, %v1965
        %v2014 = vadd.f32 %v1913, %v1966
        %v2015 = vadd.f32 %v1914, %v1967
        %v2016 = vadd.f32 %v1915, %v1968
        %v2017 = vadd.f32 %v1916, %v1969
        %v2018 = vadd.f32 %v1917, %v1970
        %v2019 = vadd.f32 %v1918, %v1971
        %v2020 = vadd.f32 %v1919, %v1972
        %v2021 = vld [vmem:[%s1706 + $0x2] sm:$0x1]
        %v2022 = vlaneseq
        %v2023 = vshrl.u32 %v2022, 7
        %v2024 = vsub.s32 0, %v2023
        %v2025 = vrot.slane %v2021, %v2024
        %v2026 = vmul.f32 %v418, %v2025
        %v2027 = vmul.f32 %v419, %v2025
        %v2028 = vmul.f32 %v420, %v2025
        %v2029 = vmul.f32 %v421, %v2025
        %v2030 = vmul.f32 %v422, %v2025
        %v2031 = vmul.f32 %v423, %v2025
        %v2032 = vmul.f32 %v424, %v2025
        %v2033 = vmul.f32 %v425, %v2025
        %v2034 = vmul.f32 %v426, %v2025
        %v2035 = vmul.f32 %v427, %v2025
        %v2036 = vmul.f32 %v428, %v2025
        %v2037 = vmul.f32 %v429, %v2025
        %v2038 = vmul.f32 %v430, %v2025
        %v2039 = vmul.f32 %v431, %v2025
        %v2040 = vmul.f32 %v432, %v2025
        %v2041 = vmul.f32 %v433, %v2025
        %v2042 = vmul.f32 %v434, %v2025
        %v2043 = vmul.f32 %v435, %v2025
        %v2044 = vmul.f32 %v436, %v2025
        %v2045 = vmul.f32 %v437, %v2025
        %v2046 = vmul.f32 %v438, %v2025
        %v2047 = vmul.f32 %v439, %v2025
        %v2048 = vmul.f32 %v440, %v2025
        %v2049 = vmul.f32 %v441, %v2025
        %v2050 = vmul.f32 %v442, %v2025
        %v2051 = vmul.f32 %v443, %v2025
        %v2052 = vmul.f32 %v444, %v2025
        %v2053 = vmul.f32 %v445, %v2025
        %v2054 = vmul.f32 %v446, %v2025
        %v2055 = vmul.f32 %v447, %v2025
        %v2056 = vmul.f32 %v448, %v2025
        %v2057 = vmul.f32 %v449, %v2025
        %v2058 = vmul.f32 %v450, %v2025
        %v2059 = vmul.f32 %v451, %v2025
        %v2060 = vmul.f32 %v452, %v2025
        %v2061 = vmul.f32 %v453, %v2025
        %v2062 = vmul.f32 %v454, %v2025
        %v2063 = vmul.f32 %v455, %v2025
        %v2064 = vmul.f32 %v456, %v2025
        %v2065 = vmul.f32 %v457, %v2025
        %v2066 = vmul.f32 %v458, %v2025
        %v2067 = vmul.f32 %v459, %v2025
        %v2068 = vmul.f32 %v460, %v2025
        %v2069 = vmul.f32 %v461, %v2025
        %v2070 = vmul.f32 %v462, %v2025
        %v2071 = vmul.f32 %v463, %v2025
        %v2072 = vmul.f32 %v464, %v2025
        %v2073 = vmul.f32 %v465, %v2025
        %v2122 = vrot.slane %v2026, 1
        %v2123 = vrot.slane %v2027, 1
        %v2124 = vsel %vm937, %v2122, %v2123
        %v2125 = vrot.slane %v2028, 1
        %v2126 = vsel %vm937, %v2123, %v2125
        %v2127 = vrot.slane %v2029, 1
        %v2128 = vrot.slane %v2030, 1
        %v2129 = vsel %vm937, %v2127, %v2128
        %v2130 = vrot.slane %v2031, 1
        %v2131 = vsel %vm937, %v2128, %v2130
        %v2132 = vrot.slane %v2032, 1
        %v2133 = vrot.slane %v2033, 1
        %v2134 = vsel %vm937, %v2132, %v2133
        %v2135 = vrot.slane %v2034, 1
        %v2136 = vsel %vm937, %v2133, %v2135
        %v2137 = vrot.slane %v2035, 1
        %v2138 = vrot.slane %v2036, 1
        %v2139 = vsel %vm937, %v2137, %v2138
        %v2140 = vrot.slane %v2037, 1
        %v2141 = vsel %vm937, %v2138, %v2140
        %v2142 = vrot.slane %v2038, 1
        %v2143 = vrot.slane %v2039, 1
        %v2144 = vsel %vm937, %v2142, %v2143
        %v2145 = vrot.slane %v2040, 1
        %v2146 = vsel %vm937, %v2143, %v2145
        %v2147 = vrot.slane %v2041, 1
        %v2148 = vrot.slane %v2042, 1
        %v2149 = vsel %vm937, %v2147, %v2148
        %v2150 = vrot.slane %v2043, 1
        %v2151 = vsel %vm937, %v2148, %v2150
        %v2152 = vrot.slane %v2044, 1
        %v2153 = vrot.slane %v2045, 1
        %v2154 = vsel %vm937, %v2152, %v2153
        %v2155 = vrot.slane %v2046, 1
        %v2156 = vsel %vm937, %v2153, %v2155
        %v2157 = vrot.slane %v2047, 1
        %v2158 = vrot.slane %v2048, 1
        %v2159 = vsel %vm937, %v2157, %v2158
        %v2160 = vrot.slane %v2049, 1
        %v2161 = vsel %vm937, %v2158, %v2160
        %v2162 = vrot.slane %v2050, 1
        %v2163 = vrot.slane %v2051, 1
        %v2164 = vsel %vm937, %v2162, %v2163
        %v2165 = vrot.slane %v2052, 1
        %v2166 = vsel %vm937, %v2163, %v2165
        %v2167 = vrot.slane %v2053, 1
        %v2168 = vrot.slane %v2054, 1
        %v2169 = vsel %vm937, %v2167, %v2168
        %v2170 = vrot.slane %v2055, 1
        %v2171 = vsel %vm937, %v2168, %v2170
        %v2172 = vrot.slane %v2056, 1
        %v2173 = vrot.slane %v2057, 1
        %v2174 = vsel %vm937, %v2172, %v2173
        %v2175 = vrot.slane %v2058, 1
        %v2176 = vsel %vm937, %v2173, %v2175
        %v2177 = vrot.slane %v2059, 1
        %v2178 = vrot.slane %v2060, 1
        %v2179 = vsel %vm937, %v2177, %v2178
        %v2180 = vrot.slane %v2061, 1
        %v2181 = vsel %vm937, %v2178, %v2180
        %v2182 = vrot.slane %v2062, 1
        %v2183 = vrot.slane %v2063, 1
        %v2184 = vsel %vm937, %v2182, %v2183
        %v2185 = vrot.slane %v2064, 1
        %v2186 = vsel %vm937, %v2183, %v2185
        %v2187 = vrot.slane %v2065, 1
        %v2188 = vrot.slane %v2066, 1
        %v2189 = vsel %vm937, %v2187, %v2188
        %v2190 = vrot.slane %v2067, 1
        %v2191 = vsel %vm937, %v2188, %v2190
        %v2192 = vrot.slane %v2068, 1
        %v2193 = vrot.slane %v2069, 1
        %v2194 = vsel %vm937, %v2192, %v2193
        %v2195 = vrot.slane %v2070, 1
        %v2196 = vsel %vm937, %v2193, %v2195
        %v2197 = vrot.slane %v2071, 1
        %v2198 = vrot.slane %v2072, 1
        %v2199 = vsel %vm937, %v2197, %v2198
        %v2200 = vrot.slane %v2073, 1
        %v2201 = vsel %vm937, %v2198, %v2200
        %v2250 = vadd.f32 %v1973, %v2124
        %v2251 = vadd.f32 %v1974, %v2126
        %v2252 = vadd.f32 %v1975, %v2125
        %v2253 = vadd.f32 %v1976, %v2129
        %v2254 = vadd.f32 %v1977, %v2131
        %v2255 = vadd.f32 %v1978, %v2130
        %v2256 = vadd.f32 %v1979, %v2134
        %v2257 = vadd.f32 %v1980, %v2136
        %v2258 = vadd.f32 %v1981, %v2135
        %v2259 = vadd.f32 %v1982, %v2139
        %v2260 = vadd.f32 %v1983, %v2141
        %v2261 = vadd.f32 %v1984, %v2140
        %v2262 = vadd.f32 %v1985, %v2144
        %v2263 = vadd.f32 %v1986, %v2146
        %v2264 = vadd.f32 %v1987, %v2145
        %v2265 = vadd.f32 %v1988, %v2149
        %v2266 = vadd.f32 %v1989, %v2151
        %v2267 = vadd.f32 %v1990, %v2150
        %v2268 = vadd.f32 %v1991, %v2154
        %v2269 = vadd.f32 %v1992, %v2156
        %v2270 = vadd.f32 %v1993, %v2155
        %v2271 = vadd.f32 %v1994, %v2159
        %v2272 = vadd.f32 %v1995, %v2161
        %v2273 = vadd.f32 %v1996, %v2160
        %v2274 = vadd.f32 %v1997, %v2164
        %v2275 = vadd.f32 %v1998, %v2166
        %v2276 = vadd.f32 %v1999, %v2165
        %v2277 = vadd.f32 %v2000, %v2169
        %v2278 = vadd.f32 %v2001, %v2171
        %v2279 = vadd.f32 %v2002, %v2170
        %v2280 = vadd.f32 %v2003, %v2174
        %v2281 = vadd.f32 %v2004, %v2176
        %v2282 = vadd.f32 %v2005, %v2175
        %v2283 = vadd.f32 %v2006, %v2179
        %v2284 = vadd.f32 %v2007, %v2181
        %v2285 = vadd.f32 %v2008, %v2180
        %v2286 = vadd.f32 %v2009, %v2184
        %v2287 = vadd.f32 %v2010, %v2186
        %v2288 = vadd.f32 %v2011, %v2185
        %v2289 = vadd.f32 %v2012, %v2189
        %v2290 = vadd.f32 %v2013, %v2191
        %v2291 = vadd.f32 %v2014, %v2190
        %v2292 = vadd.f32 %v2015, %v2194
        %v2293 = vadd.f32 %v2016, %v2196
        %v2294 = vadd.f32 %v2017, %v2195
        %v2295 = vadd.f32 %v2018, %v2199
        %v2296 = vadd.f32 %v2019, %v2201
        %v2297 = vadd.f32 %v2020, %v2200
        %v2346 = vrot.slane %v2250, 1
        %v2347 = vrot.slane %v2251, 1
        %v2348 = vsel %vm937, %v2346, %v2347
        %v2349 = vrot.slane %v2252, 1
        %v2350 = vsel %vm937, %v2347, %v2349
        %v2351 = vrot.slane %v2253, 1
        %v2352 = vrot.slane %v2254, 1
        %v2353 = vsel %vm937, %v2351, %v2352
        %v2354 = vrot.slane %v2255, 1
        %v2355 = vsel %vm937, %v2352, %v2354
        %v2356 = vrot.slane %v2256, 1
        %v2357 = vrot.slane %v2257, 1
        %v2358 = vsel %vm937, %v2356, %v2357
        %v2359 = vrot.slane %v2258, 1
        %v2360 = vsel %vm937, %v2357, %v2359
        %v2361 = vrot.slane %v2259, 1
        %v2362 = vrot.slane %v2260, 1
        %v2363 = vsel %vm937, %v2361, %v2362
        %v2364 = vrot.slane %v2261, 1
        %v2365 = vsel %vm937, %v2362, %v2364
        %v2366 = vrot.slane %v2262, 1
        %v2367 = vrot.slane %v2263, 1
        %v2368 = vsel %vm937, %v2366, %v2367
        %v2369 = vrot.slane %v2264, 1
        %v2370 = vsel %vm937, %v2367, %v2369
        %v2371 = vrot.slane %v2265, 1
        %v2372 = vrot.slane %v2266, 1
        %v2373 = vsel %vm937, %v2371, %v2372
        %v2374 = vrot.slane %v2267, 1
        %v2375 = vsel %vm937, %v2372, %v2374
        %v2376 = vrot.slane %v2268, 1
        %v2377 = vrot.slane %v2269, 1
        %v2378 = vsel %vm937, %v2376, %v2377
        %v2379 = vrot.slane %v2270, 1
        %v2380 = vsel %vm937, %v2377, %v2379
        %v2381 = vrot.slane %v2271, 1
        %v2382 = vrot.slane %v2272, 1
        %v2383 = vsel %vm937, %v2381, %v2382
        %v2384 = vrot.slane %v2273, 1
        %v2385 = vsel %vm937, %v2382, %v2384
        %v2386 = vrot.slane %v2274, 1
        %v2387 = vrot.slane %v2275, 1
        %v2388 = vsel %vm937, %v2386, %v2387
        %v2389 = vrot.slane %v2276, 1
        %v2390 = vsel %vm937, %v2387, %v2389
        %v2391 = vrot.slane %v2277, 1
        %v2392 = vrot.slane %v2278, 1
        %v2393 = vsel %vm937, %v2391, %v2392
        %v2394 = vrot.slane %v2279, 1
        %v2395 = vsel %vm937, %v2392, %v2394
        %v2396 = vrot.slane %v2280, 1
        %v2397 = vrot.slane %v2281, 1
        %v2398 = vsel %vm937, %v2396, %v2397
        %v2399 = vrot.slane %v2282, 1
        %v2400 = vsel %vm937, %v2397, %v2399
        %v2401 = vrot.slane %v2283, 1
        %v2402 = vrot.slane %v2284, 1
        %v2403 = vsel %vm937, %v2401, %v2402
        %v2404 = vrot.slane %v2285, 1
        %v2405 = vsel %vm937, %v2402, %v2404
        %v2406 = vrot.slane %v2286, 1
        %v2407 = vrot.slane %v2287, 1
        %v2408 = vsel %vm937, %v2406, %v2407
        %v2409 = vrot.slane %v2288, 1
        %v2410 = vsel %vm937, %v2407, %v2409
        %v2411 = vrot.slane %v2289, 1
        %v2412 = vrot.slane %v2290, 1
        %v2413 = vsel %vm937, %v2411, %v2412
        %v2414 = vrot.slane %v2291, 1
        %v2415 = vsel %vm937, %v2412, %v2414
        %v2416 = vrot.slane %v2292, 1
        %v2417 = vrot.slane %v2293, 1
        %v2418 = vsel %vm937, %v2416, %v2417
        %v2419 = vrot.slane %v2294, 1
        %v2420 = vsel %vm937, %v2417, %v2419
        %v2421 = vrot.slane %v2295, 1
        %v2422 = vrot.slane %v2296, 1
        %v2423 = vsel %vm937, %v2421, %v2422
        %v2424 = vrot.slane %v2297, 1
        %v2425 = vsel %vm937, %v2422, %v2424
        %v2458 = vld [vmem:[%s4] sm:$0xff]
        %v2459 = vld [vmem:[%s4 + $0x8] sm:$0xff]
        %v2460 = vld [vmem:[%s4 + $0x10] sm:$0xff]
        %v2461 = vld [vmem:[%s4 + $0x18] sm:$0xff]
        %v2462 = vld [vmem:[%s5] sm:$0x1]
        %v2464 = vlaneseq
        %v2465 = vshrl.u32 %v2464, 7
        %v2466 = vsub.s32 0, %v2465
        %v2467 = vrot.slane %v2462, %v2466
        %vm2469 = vcmask 261120
        %v2470 = vsel %vm2469, %v2348, 0
        %v2472 = vsel %vm2469, %v2350, 0
        %v2474 = vsel %vm2469, %v2353, 0
        %v2476 = vsel %vm2469, %v2355, 0
        %v2478 = vsel %vm2469, %v2358, 0
        %v2480 = vsel %vm2469, %v2360, 0
        %v2482 = vsel %vm2469, %v2363, 0
        %v2484 = vsel %vm2469, %v2365, 0
        %v2486 = vsel %vm2469, %v2368, 0
        %v2488 = vsel %vm2469, %v2370, 0
        %v2490 = vsel %vm2469, %v2373, 0
        %v2492 = vsel %vm2469, %v2375, 0
        %v2494 = vsel %vm2469, %v2378, 0
        %v2496 = vsel %vm2469, %v2380, 0
        %v2498 = vsel %vm2469, %v2383, 0
        %v2500 = vsel %vm2469, %v2385, 0
        %v2502 = vsel %vm2469, %v2388, 0
        %v2504 = vsel %vm2469, %v2390, 0
        %v2506 = vsel %vm2469, %v2393, 0
        %v2508 = vsel %vm2469, %v2395, 0
        %v2510 = vsel %vm2469, %v2398, 0
        %v2512 = vsel %vm2469, %v2400, 0
        %v2514 = vsel %vm2469, %v2403, 0
        %v2516 = vsel %vm2469, %v2405, 0
        %v2518 = vsel %vm2469, %v2408, 0
        %v2520 = vsel %vm2469, %v2410, 0
        %v2522 = vsel %vm2469, %v2413, 0
        %v2524 = vsel %vm2469, %v2415, 0
        %v2526 = vsel %vm2469, %v2418, 0
        %v2528 = vsel %vm2469, %v2420, 0
        %v2530 = vsel %vm2469, %v2423, 0
        %v2532 = vsel %vm2469, %v2425, 0
        %2534 = vmatprep.subr.mxu0 0.0
        %2535 = vmatpush1.msra.mxu0 0.0
        %2536 = vmatprep.subr.mxu0 0.0
        %2537 = vmatpush1.msra.mxu0 0.0
        %2538 = vmatprep.subr.mxu0 0.0
        %2539 = vmatpush1.msra.mxu0 0.0
        %2540 = vmatprep.subr.mxu0 0.0
        %2541 = vmatpush1.msra.mxu0 0.0
        %2542 = vmatprep.subr.mxu0 0.0
        %2543 = vmatpush1.msra.mxu0 0.0
        %2544 = vmatprep.subr.mxu0 0.0
        %2545 = vmatpush1.msra.mxu0 0.0
        %2546 = vmatprep.subr.mxu0 0.0
        %2547 = vmatpush1.msra.mxu0 0.0
        %2548 = vmatprep.subr.mxu0 0.0
        %2549 = vmatpush1.msra.mxu0 0.0
        %2550 = vmatprep.subr.mxu0 0.0
        %2551 = vmatpush1.msra.mxu0 0.0
        %2552 = vmatprep.subr.mxu0 0.0
        %2553 = vmatpush1.msra.mxu0 0.0
        %2554 = vmatprep.subr.mxu0 0.0
        %2555 = vmatpush1.msra.mxu0 0.0
        %2556 = vmatprep.subr.mxu0 0.0
        %2557 = vmatpush1.msra.mxu0 0.0
        %2558 = vmatprep.subr.mxu0 0.0
        %2559 = vmatpush1.msra.mxu0 %v2461
        %2560 = vmatprep.subr.mxu0 0.0
        %2561 = vmatpush1.msra.mxu0 %v2460
        %2562 = vmatprep.subr.mxu0 0.0
        %2563 = vmatpush1.msra.mxu0 %v2459
        %2564 = vmatprep.subr.mxu0 0.0
        %2565 = vmatpush1.msra.mxu0 %v2458
        %2566 = vmatprep.subr.mxu0 0.0
        %2567 = vmatpush2.msra.mxu0 0.0
        %2568 = vmatprep.subr.mxu0 0.0
        %2569 = vmatpush2.msra.mxu0 0.0
        %2570 = vmatprep.subr.mxu0 0.0
        %2571 = vmatpush2.msra.mxu0 0.0
        %2572 = vmatprep.subr.mxu0 0.0
        %2573 = vmatpush2.msra.mxu0 0.0
        %2574 = vmatprep.subr.mxu0 0.0
        %2575 = vmatpush2.msra.mxu0 0.0
        %2576 = vmatprep.subr.mxu0 0.0
        %2577 = vmatpush2.msra.mxu0 0.0
        %2578 = vmatprep.subr.mxu0 0.0
        %2579 = vmatpush2.msra.mxu0 0.0
        %2580 = vmatprep.subr.mxu0 0.0
        %2581 = vmatpush2.msra.mxu0 0.0
        %2582 = vmatprep.subr.mxu0 0.0
        %2583 = vmatpush2.msra.mxu0 0.0
        %2584 = vmatprep.subr.mxu0 0.0
        %2585 = vmatpush2.msra.mxu0 0.0
        %2586 = vmatprep.subr.mxu0 0.0
        %2587 = vmatpush2.msra.mxu0 0.0
        %2588 = vmatprep.subr.mxu0 0.0
        %2589 = vmatpush2.msra.mxu0 0.0
        %2590 = vmatprep.subr.mxu0 0.0
        %2591 = vmatpush2.msra.mxu0 0.0
        %2592 = vmatprep.subr.mxu0 0.0
        %2593 = vmatpush2.msra.mxu0 0.0
        %2594 = vmatprep.subr.mxu0 0.0
        %2595 = vmatpush2.msra.mxu0 0.0
        %2596 = vmatprep.subr.mxu0 0.0
        %2597 = vmatpush2.msra.mxu0 0.0
        %2598 = vmatprep.mubr.f32.mxu0 0.0
        %2599 = vmatmul.mubr.f32.gmra.mxu0 %v2470
        %v2600 = vpop.f32.mrf.mxu0
        %v2601 = vadd.f32 %v2467, %v2600
        %v2602 = vpop.f32.mrf.mxu0
        %2603 = vmatprep.mubr.f32.mxu0 0.0
        %2604 = vmatmul.mubr.f32.gmra.mxu0 %v2472
        %v2605 = vpop.f32.mrf.mxu0
        %v2606 = vadd.f32 %v2467, %v2605
        %v2607 = vpop.f32.mrf.mxu0
        %2608 = vmatprep.mubr.f32.mxu0 0.0
        %2609 = vmatmul.mubr.f32.gmra.mxu0 %v2474
        %v2610 = vpop.f32.mrf.mxu0
        %v2611 = vadd.f32 %v2467, %v2610
        %v2612 = vpop.f32.mrf.mxu0
        %2613 = vmatprep.mubr.f32.mxu0 0.0
        %2614 = vmatmul.mubr.f32.gmra.mxu0 %v2476
        %v2615 = vpop.f32.mrf.mxu0
        %v2616 = vadd.f32 %v2467, %v2615
        %v2617 = vpop.f32.mrf.mxu0
        %2618 = vmatprep.mubr.f32.mxu0 0.0
        %2619 = vmatmul.mubr.f32.gmra.mxu0 %v2478
        %v2620 = vpop.f32.mrf.mxu0
        %v2621 = vadd.f32 %v2467, %v2620
        %v2622 = vpop.f32.mrf.mxu0
        %2623 = vmatprep.mubr.f32.mxu0 0.0
        %2624 = vmatmul.mubr.f32.gmra.mxu0 %v2480
        %v2625 = vpop.f32.mrf.mxu0
        %v2626 = vadd.f32 %v2467, %v2625
        %v2627 = vpop.f32.mrf.mxu0
        %2628 = vmatprep.mubr.f32.mxu0 0.0
        %2629 = vmatmul.mubr.f32.gmra.mxu0 %v2482
        %v2630 = vpop.f32.mrf.mxu0
        %v2631 = vadd.f32 %v2467, %v2630
        %v2632 = vpop.f32.mrf.mxu0
        %2633 = vmatprep.mubr.f32.mxu0 0.0
        %2634 = vmatmul.mubr.f32.gmra.mxu0 %v2484
        %v2635 = vpop.f32.mrf.mxu0
        %v2636 = vadd.f32 %v2467, %v2635
        %v2637 = vpop.f32.mrf.mxu0
        %2638 = vmatprep.mubr.f32.mxu0 0.0
        %2639 = vmatmul.mubr.f32.gmra.mxu0 %v2486
        %v2640 = vpop.f32.mrf.mxu0
        %v2641 = vadd.f32 %v2467, %v2640
        %v2642 = vpop.f32.mrf.mxu0
        %2643 = vmatprep.mubr.f32.mxu0 0.0
        %2644 = vmatmul.mubr.f32.gmra.mxu0 %v2488
        %v2645 = vpop.f32.mrf.mxu0
        %v2646 = vadd.f32 %v2467, %v2645
        %v2647 = vpop.f32.mrf.mxu0
        %2648 = vmatprep.mubr.f32.mxu0 0.0
        %2649 = vmatmul.mubr.f32.gmra.mxu0 %v2490
        %v2650 = vpop.f32.mrf.mxu0
        %v2651 = vadd.f32 %v2467, %v2650
        %v2652 = vpop.f32.mrf.mxu0
        %2653 = vmatprep.mubr.f32.mxu0 0.0
        %2654 = vmatmul.mubr.f32.gmra.mxu0 %v2492
        %v2655 = vpop.f32.mrf.mxu0
        %v2656 = vadd.f32 %v2467, %v2655
        %v2657 = vpop.f32.mrf.mxu0
        %2658 = vmatprep.mubr.f32.mxu0 0.0
        %2659 = vmatmul.mubr.f32.gmra.mxu0 %v2494
        %v2660 = vpop.f32.mrf.mxu0
        %v2661 = vadd.f32 %v2467, %v2660
        %v2662 = vpop.f32.mrf.mxu0
        %2663 = vmatprep.mubr.f32.mxu0 0.0
        %2664 = vmatmul.mubr.f32.gmra.mxu0 %v2496
        %v2665 = vpop.f32.mrf.mxu0
        %v2666 = vadd.f32 %v2467, %v2665
        %v2667 = vpop.f32.mrf.mxu0
        %2668 = vmatprep.mubr.f32.mxu0 0.0
        %2669 = vmatmul.mubr.f32.gmra.mxu0 %v2498
        %v2670 = vpop.f32.mrf.mxu0
        %v2671 = vadd.f32 %v2467, %v2670
        %v2672 = vpop.f32.mrf.mxu0
        %2673 = vmatprep.mubr.f32.mxu0 0.0
        %2674 = vmatmul.mubr.f32.gmra.mxu0 %v2500
        %v2675 = vpop.f32.mrf.mxu0
        %v2676 = vadd.f32 %v2467, %v2675
        %v2677 = vpop.f32.mrf.mxu0
        %2678 = vmatprep.mubr.f32.mxu0 0.0
        %2679 = vmatmul.mubr.f32.gmra.mxu0 %v2502
        %v2680 = vpop.f32.mrf.mxu0
        %v2681 = vadd.f32 %v2467, %v2680
        %v2682 = vpop.f32.mrf.mxu0
        %2683 = vmatprep.mubr.f32.mxu0 0.0
        %2684 = vmatmul.mubr.f32.gmra.mxu0 %v2504
        %v2685 = vpop.f32.mrf.mxu0
        %v2686 = vadd.f32 %v2467, %v2685
        %v2687 = vpop.f32.mrf.mxu0
        %2688 = vmatprep.mubr.f32.mxu0 0.0
        %2689 = vmatmul.mubr.f32.gmra.mxu0 %v2506
        %v2690 = vpop.f32.mrf.mxu0
        %v2691 = vadd.f32 %v2467, %v2690
        %v2692 = vpop.f32.mrf.mxu0
        %2693 = vmatprep.mubr.f32.mxu0 0.0
        %2694 = vmatmul.mubr.f32.gmra.mxu0 %v2508
        %v2695 = vpop.f32.mrf.mxu0
        %v2696 = vadd.f32 %v2467, %v2695
        %v2697 = vpop.f32.mrf.mxu0
        %2698 = vmatprep.mubr.f32.mxu0 0.0
        %2699 = vmatmul.mubr.f32.gmra.mxu0 %v2510
        %v2700 = vpop.f32.mrf.mxu0
        %v2701 = vadd.f32 %v2467, %v2700
        %v2702 = vpop.f32.mrf.mxu0
        %2703 = vmatprep.mubr.f32.mxu0 0.0
        %2704 = vmatmul.mubr.f32.gmra.mxu0 %v2512
        %v2705 = vpop.f32.mrf.mxu0
        %v2706 = vadd.f32 %v2467, %v2705
        %v2707 = vpop.f32.mrf.mxu0
        %2708 = vmatprep.mubr.f32.mxu0 0.0
        %2709 = vmatmul.mubr.f32.gmra.mxu0 %v2514
        %v2710 = vpop.f32.mrf.mxu0
        %v2711 = vadd.f32 %v2467, %v2710
        %v2712 = vpop.f32.mrf.mxu0
        %2713 = vmatprep.mubr.f32.mxu0 0.0
        %2714 = vmatmul.mubr.f32.gmra.mxu0 %v2516
        %v2715 = vpop.f32.mrf.mxu0
        %v2716 = vadd.f32 %v2467, %v2715
        %v2717 = vpop.f32.mrf.mxu0
        %2718 = vmatprep.mubr.f32.mxu0 0.0
        %2719 = vmatmul.mubr.f32.gmra.mxu0 %v2518
        %v2720 = vpop.f32.mrf.mxu0
        %v2721 = vadd.f32 %v2467, %v2720
        %v2722 = vpop.f32.mrf.mxu0
        %2723 = vmatprep.mubr.f32.mxu0 0.0
        %2724 = vmatmul.mubr.f32.gmra.mxu0 %v2520
        %v2725 = vpop.f32.mrf.mxu0
        %v2726 = vadd.f32 %v2467, %v2725
        %v2727 = vpop.f32.mrf.mxu0
        %2728 = vmatprep.mubr.f32.mxu0 0.0
        %2729 = vmatmul.mubr.f32.gmra.mxu0 %v2522
        %v2730 = vpop.f32.mrf.mxu0
        %v2731 = vadd.f32 %v2467, %v2730
        %v2732 = vpop.f32.mrf.mxu0
        %2733 = vmatprep.mubr.f32.mxu0 0.0
        %2734 = vmatmul.mubr.f32.gmra.mxu0 %v2524
        %v2735 = vpop.f32.mrf.mxu0
        %v2736 = vadd.f32 %v2467, %v2735
        %v2737 = vpop.f32.mrf.mxu0
        %2738 = vmatprep.mubr.f32.mxu0 0.0
        %2739 = vmatmul.mubr.f32.gmra.mxu0 %v2526
        %v2740 = vpop.f32.mrf.mxu0
        %v2741 = vadd.f32 %v2467, %v2740
        %v2742 = vpop.f32.mrf.mxu0
        %2743 = vmatprep.mubr.f32.mxu0 0.0
        %2744 = vmatmul.mubr.f32.gmra.mxu0 %v2528
        %v2745 = vpop.f32.mrf.mxu0
        %v2746 = vadd.f32 %v2467, %v2745
        %v2747 = vpop.f32.mrf.mxu0
        %2748 = vmatprep.mubr.f32.mxu0 0.0
        %2749 = vmatmul.mubr.f32.gmra.mxu0 %v2530
        %v2750 = vpop.f32.mrf.mxu0
        %v2751 = vadd.f32 %v2467, %v2750
        %v2752 = vpop.f32.mrf.mxu0
        %2753 = vmatprep.mubr.f32.mxu0 0.0
        %2754 = vmatmul.mubr.f32.gmra.mxu0 %v2532
        %v2755 = vpop.f32.mrf.mxu0
        %v2756 = vadd.f32 %v2467, %v2755
        %v2757 = vpop.f32.mrf.mxu0
        %2758 = vdwg.mxu0
        %v2759 = vld [vmem:[%s3] sm:$0xff]
        %v2760 = vld [vmem:[%s3 + $0x8] sm:$0xff]
        %v2761 = vld [vmem:[%s3 + $0x10] sm:$0xff]
        %v2762 = vld [vmem:[%s3 + $0x18] sm:$0xff]
        %v2763 = vld [vmem:[%s3 + $0x20] sm:$0xff]
        %v2764 = vld [vmem:[%s3 + $0x28] sm:$0xff]
        %v2765 = vld [vmem:[%s3 + $0x30] sm:$0xff]
        %v2766 = vld [vmem:[%s3 + $0x38] sm:$0xff]
        %v2767 = vld [vmem:[%s3 + $0x40] sm:$0xff]
        %v2768 = vld [vmem:[%s3 + $0x48] sm:$0xff]
        %v2769 = vld [vmem:[%s3 + $0x50] sm:$0xff]
        %v2770 = vld [vmem:[%s3 + $0x58] sm:$0xff]
        %v2771 = vld [vmem:[%s3 + $0x60] sm:$0xff]
        %v2772 = vld [vmem:[%s3 + $0x68] sm:$0xff]
        %v2773 = vld [vmem:[%s3 + $0x70] sm:$0xff]
        %v2774 = vld [vmem:[%s3 + $0x78] sm:$0xff]
        %v2775 = vld [vmem:[%s3 + $0x80] sm:$0xff]
        %v2776 = vld [vmem:[%s3 + $0x88] sm:$0xff]
        %v2777 = vld [vmem:[%s3 + $0x90] sm:$0xff]
        %v2778 = vld [vmem:[%s3 + $0x98] sm:$0xff]
        %v2779 = vld [vmem:[%s3 + $0xa0] sm:$0xff]
        %v2780 = vld [vmem:[%s3 + $0xa8] sm:$0xff]
        %v2781 = vld [vmem:[%s3 + $0xb0] sm:$0xff]
        %v2782 = vld [vmem:[%s3 + $0xb8] sm:$0xff]
        %v2783 = vld [vmem:[%s3 + $0xc0] sm:$0xff]
        %v2784 = vld [vmem:[%s3 + $0xc8] sm:$0xff]
        %v2785 = vld [vmem:[%s3 + $0xd0] sm:$0xff]
        %v2786 = vld [vmem:[%s3 + $0xd8] sm:$0xff]
        %v2787 = vld [vmem:[%s3 + $0xe0] sm:$0xff]
        %v2788 = vld [vmem:[%s3 + $0xe8] sm:$0xff]
        %v2789 = vld [vmem:[%s3 + $0xf0] sm:$0xff]
        %v2790 = vld [vmem:[%s3 + $0xf8] sm:$0xff]
        %v2791 = vld [vmem:[%s3 + $0x100] sm:$0xff]
        %v2792 = vld [vmem:[%s3 + $0x108] sm:$0xff]
        %v2793 = vld [vmem:[%s3 + $0x110] sm:$0xff]
        %v2794 = vld [vmem:[%s3 + $0x118] sm:$0xff]
        %v2795 = vld [vmem:[%s3 + $0x120] sm:$0xff]
        %v2796 = vld [vmem:[%s3 + $0x128] sm:$0xff]
        %v2797 = vld [vmem:[%s3 + $0x130] sm:$0xff]
        %v2798 = vld [vmem:[%s3 + $0x138] sm:$0xff]
        %v2799 = vld [vmem:[%s3 + $0x140] sm:$0xff]
        %v2800 = vld [vmem:[%s3 + $0x148] sm:$0xff]
        %v2801 = vld [vmem:[%s3 + $0x150] sm:$0xff]
        %v2802 = vld [vmem:[%s3 + $0x158] sm:$0xff]
        %v2803 = vld [vmem:[%s3 + $0x160] sm:$0xff]
        %v2804 = vld [vmem:[%s3 + $0x168] sm:$0xff]
        %v2805 = vld [vmem:[%s3 + $0x170] sm:$0xff]
        %v2806 = vld [vmem:[%s3 + $0x178] sm:$0xff]
        %v2807 = vld [vmem:[%s3 + $0x180] sm:$0xff]
        %v2808 = vld [vmem:[%s3 + $0x188] sm:$0xff]
        %v2809 = vld [vmem:[%s3 + $0x190] sm:$0xff]
        %v2810 = vld [vmem:[%s3 + $0x198] sm:$0xff]
        %v2811 = vld [vmem:[%s3 + $0x1a0] sm:$0xff]
        %v2812 = vld [vmem:[%s3 + $0x1a8] sm:$0xff]
        %v2813 = vld [vmem:[%s3 + $0x1b0] sm:$0xff]
        %v2814 = vld [vmem:[%s3 + $0x1b8] sm:$0xff]
        %v2815 = vld [vmem:[%s3 + $0x1c0] sm:$0xff]
        %v2816 = vld [vmem:[%s3 + $0x1c8] sm:$0xff]
        %v2817 = vld [vmem:[%s3 + $0x1d0] sm:$0xff]
        %v2818 = vld [vmem:[%s3 + $0x1d8] sm:$0xff]
        %v2819 = vld [vmem:[%s3 + $0x1e0] sm:$0xff]
        %v2820 = vld [vmem:[%s3 + $0x1e8] sm:$0xff]
        %v2821 = vld [vmem:[%s3 + $0x1f0] sm:$0xff]
        %v2822 = vld [vmem:[%s3 + $0x1f8] sm:$0xff]
        %v2823 = vld [vmem:[%s6] sm:$0xff]
        %v2824 = vld [vmem:[%s6 + $0x8] sm:$0xff]
        %v2825 = vld [vmem:[%s6 + $0x10] sm:$0xff]
        %v2826 = vld [vmem:[%s6 + $0x18] sm:$0xff]
        %2859 = vrot.lane.b32.xlu0 %v2601, 96
        %v2860 = vpop.permute.xlu0 %2859
        %2861 = vrot.lane.b32.xlu0 %v2606, 96
        %v2862 = vpop.permute.xlu0 %2861
        %2863 = vrot.lane.b32.xlu0 %v2611, 96
        %v2864 = vpop.permute.xlu0 %2863
        %2865 = vrot.lane.b32.xlu0 %v2616, 96
        %v2866 = vpop.permute.xlu0 %2865
        %2867 = vrot.lane.b32.xlu0 %v2621, 96
        %v2868 = vpop.permute.xlu0 %2867
        %2869 = vrot.lane.b32.xlu0 %v2626, 96
        %v2870 = vpop.permute.xlu0 %2869
        %2871 = vrot.lane.b32.xlu0 %v2631, 96
        %v2872 = vpop.permute.xlu0 %2871
        %2873 = vrot.lane.b32.xlu0 %v2636, 96
        %v2874 = vpop.permute.xlu0 %2873
        %2875 = vrot.lane.b32.xlu0 %v2641, 96
        %v2876 = vpop.permute.xlu0 %2875
        %2877 = vrot.lane.b32.xlu0 %v2646, 96
        %v2878 = vpop.permute.xlu0 %2877
        %2879 = vrot.lane.b32.xlu0 %v2651, 96
        %v2880 = vpop.permute.xlu0 %2879
        %2881 = vrot.lane.b32.xlu0 %v2656, 96
        %v2882 = vpop.permute.xlu0 %2881
        %2883 = vrot.lane.b32.xlu0 %v2661, 96
        %v2884 = vpop.permute.xlu0 %2883
        %2885 = vrot.lane.b32.xlu0 %v2666, 96
        %v2886 = vpop.permute.xlu0 %2885
        %2887 = vrot.lane.b32.xlu0 %v2671, 96
        %v2888 = vpop.permute.xlu0 %2887
        %2889 = vrot.lane.b32.xlu0 %v2676, 96
        %v2890 = vpop.permute.xlu0 %2889
        %2891 = vrot.lane.b32.xlu0 %v2681, 96
        %v2892 = vpop.permute.xlu0 %2891
        %2893 = vrot.lane.b32.xlu0 %v2686, 96
        %v2894 = vpop.permute.xlu0 %2893
        %2895 = vrot.lane.b32.xlu0 %v2691, 96
        %v2896 = vpop.permute.xlu0 %2895
        %2897 = vrot.lane.b32.xlu0 %v2696, 96
        %v2898 = vpop.permute.xlu0 %2897
        %2899 = vrot.lane.b32.xlu0 %v2701, 96
        %v2900 = vpop.permute.xlu0 %2899
        %2901 = vrot.lane.b32.xlu0 %v2706, 96
        %v2902 = vpop.permute.xlu0 %2901
        %2903 = vrot.lane.b32.xlu0 %v2711, 96
        %v2904 = vpop.permute.xlu0 %2903
        %2905 = vrot.lane.b32.xlu0 %v2716, 96
        %v2906 = vpop.permute.xlu0 %2905
        %2907 = vrot.lane.b32.xlu0 %v2721, 96
        %v2908 = vpop.permute.xlu0 %2907
        %2909 = vrot.lane.b32.xlu0 %v2726, 96
        %v2910 = vpop.permute.xlu0 %2909
        %2911 = vrot.lane.b32.xlu0 %v2731, 96
        %v2912 = vpop.permute.xlu0 %2911
        %2913 = vrot.lane.b32.xlu0 %v2736, 96
        %v2914 = vpop.permute.xlu0 %2913
        %2915 = vrot.lane.b32.xlu0 %v2741, 96
        %v2916 = vpop.permute.xlu0 %2915
        %2917 = vrot.lane.b32.xlu0 %v2746, 96
        %v2918 = vpop.permute.xlu0 %2917
        %2919 = vrot.lane.b32.xlu0 %v2751, 96
        %v2920 = vpop.permute.xlu0 %2919
        %2921 = vrot.lane.b32.xlu0 %v2756, 96
        %v2922 = vpop.permute.xlu0 %2921
        %vm2923 = vcmask 130048
        %v2924 = vsel %vm2923, %v2601, 0
        %v2926 = vsel %vm2923, %v2606, 0
        %v2928 = vsel %vm2923, %v2611, 0
        %v2930 = vsel %vm2923, %v2616, 0
        %v2932 = vsel %vm2923, %v2621, 0
        %v2934 = vsel %vm2923, %v2626, 0
        %v2936 = vsel %vm2923, %v2631, 0
        %v2938 = vsel %vm2923, %v2636, 0
        %v2940 = vsel %vm2923, %v2641, 0
        %v2942 = vsel %vm2923, %v2646, 0
        %v2944 = vsel %vm2923, %v2651, 0
        %v2946 = vsel %vm2923, %v2656, 0
        %v2948 = vsel %vm2923, %v2661, 0
        %v2950 = vsel %vm2923, %v2666, 0
        %v2952 = vsel %vm2923, %v2671, 0
        %v2954 = vsel %vm2923, %v2676, 0
        %v2956 = vsel %vm2923, %v2681, 0
        %v2958 = vsel %vm2923, %v2686, 0
        %v2960 = vsel %vm2923, %v2691, 0
        %v2962 = vsel %vm2923, %v2696, 0
        %v2964 = vsel %vm2923, %v2701, 0
        %v2966 = vsel %vm2923, %v2706, 0
        %v2968 = vsel %vm2923, %v2711, 0
        %v2970 = vsel %vm2923, %v2716, 0
        %v2972 = vsel %vm2923, %v2721, 0
        %v2974 = vsel %vm2923, %v2726, 0
        %v2976 = vsel %vm2923, %v2731, 0
        %v2978 = vsel %vm2923, %v2736, 0
        %v2980 = vsel %vm2923, %v2741, 0
        %v2982 = vsel %vm2923, %v2746, 0
        %v2984 = vsel %vm2923, %v2751, 0
        %v2986 = vsel %vm2923, %v2756, 0
        %v2988 = vsel %vm2923, %v2860, 0
        %v2990 = vsel %vm2923, %v2862, 0
        %v2992 = vsel %vm2923, %v2864, 0
        %v2994 = vsel %vm2923, %v2866, 0
        %v2996 = vsel %vm2923, %v2868, 0
        %v2998 = vsel %vm2923, %v2870, 0
        %v3000 = vsel %vm2923, %v2872, 0
        %v3002 = vsel %vm2923, %v2874, 0
        %v3004 = vsel %vm2923, %v2876, 0
        %v3006 = vsel %vm2923, %v2878, 0
        %v3008 = vsel %vm2923, %v2880, 0
        %v3010 = vsel %vm2923, %v2882, 0
        %v3012 = vsel %vm2923, %v2884, 0
        %v3014 = vsel %vm2923, %v2886, 0
        %v3016 = vsel %vm2923, %v2888, 0
        %v3018 = vsel %vm2923, %v2890, 0
        %v3020 = vsel %vm2923, %v2892, 0
        %v3022 = vsel %vm2923, %v2894, 0
        %v3024 = vsel %vm2923, %v2896, 0
        %v3026 = vsel %vm2923, %v2898, 0
        %v3028 = vsel %vm2923, %v2900, 0
        %v3030 = vsel %vm2923, %v2902, 0
        %v3032 = vsel %vm2923, %v2904, 0
        %v3034 = vsel %vm2923, %v2906, 0
        %v3036 = vsel %vm2923, %v2908, 0
        %v3038 = vsel %vm2923, %v2910, 0
        %v3040 = vsel %vm2923, %v2912, 0
        %v3042 = vsel %vm2923, %v2914, 0
        %v3044 = vsel %vm2923, %v2916, 0
        %v3046 = vsel %vm2923, %v2918, 0
        %v3048 = vsel %vm2923, %v2920, 0
        %v3050 = vsel %vm2923, %v2922, 0
        %3052 = vmatprep.subr.mxu0 0.0
        %3053 = vmatpush1.xpose.msra.mxu0 %v3018
        %3054 = vmatprep.subr.mxu0 0.0
        %3055 = vmatpush1.xpose.msra.mxu0 %v3016
        %3056 = vmatprep.subr.mxu0 0.0
        %3057 = vmatpush1.xpose.msra.mxu0 %v3014
        %3058 = vmatprep.subr.mxu0 0.0
        %3059 = vmatpush1.xpose.msra.mxu0 %v3012
        %3060 = vmatprep.subr.mxu0 0.0
        %3061 = vmatpush1.xpose.msra.mxu0 %v3010
        %3062 = vmatprep.subr.mxu0 0.0
        %3063 = vmatpush1.xpose.msra.mxu0 %v3008
        %3064 = vmatprep.subr.mxu0 0.0
        %3065 = vmatpush1.xpose.msra.mxu0 %v3006
        %3066 = vmatprep.subr.mxu0 0.0
        %3067 = vmatpush1.xpose.msra.mxu0 %v3004
        %3068 = vmatprep.subr.mxu0 0.0
        %3069 = vmatpush1.xpose.msra.mxu0 %v3002
        %3070 = vmatprep.subr.mxu0 0.0
        %3071 = vmatpush1.xpose.msra.mxu0 %v3000
        %3072 = vmatprep.subr.mxu0 0.0
        %3073 = vmatpush1.xpose.msra.mxu0 %v2998
        %3074 = vmatprep.subr.mxu0 0.0
        %3075 = vmatpush1.xpose.msra.mxu0 %v2996
        %3076 = vmatprep.subr.mxu0 0.0
        %3077 = vmatpush1.xpose.msra.mxu0 %v2994
        %3078 = vmatprep.subr.mxu0 0.0
        %3079 = vmatpush1.xpose.msra.mxu0 %v2992
        %3080 = vmatprep.subr.mxu0 0.0
        %3081 = vmatpush1.xpose.msra.mxu0 %v2990
        %3082 = vmatprep.subr.mxu0 0.0
        %3083 = vmatpush1.xpose.msra.mxu0 %v2988
        %3084 = vmatprep.subr.mxu0 0.0
        %3085 = vmatpush2.xpose.msra.mxu0 %v3050
        %3086 = vmatprep.subr.mxu0 0.0
        %3087 = vmatpush2.xpose.msra.mxu0 %v3048
        %3088 = vmatprep.subr.mxu0 0.0
        %3089 = vmatpush2.xpose.msra.mxu0 %v3046
        %3090 = vmatprep.subr.mxu0 0.0
        %3091 = vmatpush2.xpose.msra.mxu0 %v3044
        %3092 = vmatprep.subr.mxu0 0.0
        %3093 = vmatpush2.xpose.msra.mxu0 %v3042
        %3094 = vmatprep.subr.mxu0 0.0
        %3095 = vmatpush2.xpose.msra.mxu0 %v3040
        %3096 = vmatprep.subr.mxu0 0.0
        %3097 = vmatpush2.xpose.msra.mxu0 %v3038
        %3098 = vmatprep.subr.mxu0 0.0
        %3099 = vmatpush2.xpose.msra.mxu0 %v3036
        %3100 = vmatprep.subr.mxu0 0.0
        %3101 = vmatpush2.xpose.msra.mxu0 %v3034
        %3102 = vmatprep.subr.mxu0 0.0
        %3103 = vmatpush2.xpose.msra.mxu0 %v3032
        %3104 = vmatprep.subr.mxu0 0.0
        %3105 = vmatpush2.xpose.msra.mxu0 %v3030
        %3106 = vmatprep.subr.mxu0 0.0
        %3107 = vmatpush2.xpose.msra.mxu0 %v3028
        %3108 = vmatprep.subr.mxu0 0.0
        %3109 = vmatpush2.xpose.msra.mxu0 %v3026
        %3110 = vmatprep.subr.mxu0 0.0
        %3111 = vmatpush2.xpose.msra.mxu0 %v3024
        %3112 = vmatprep.subr.mxu0 0.0
        %3113 = vmatpush2.xpose.msra.mxu0 %v3022
        %3114 = vmatprep.subr.mxu0 0.0
        %3115 = vmatpush2.xpose.msra.mxu0 %v3020
        %3116 = vmatprep.mubr.f32.mxu0 0.0
        %3117 = vmatmul.mubr.f32.gmra.mxu0 %v2924
        %v3118 = vpop.f32.mrf.mxu0
        %v3119 = vadd.f32 %v2759, %v3118
        %v3120 = vpop.f32.mrf.mxu0
        %v3121 = vadd.f32 %v2760, %v3120
        %3122 = vmatprep.mubr.f32.mxu0 0.0
        %3123 = vmatmul.mubr.f32.gmra.mxu0 %v2926
        %v3124 = vpop.f32.mrf.mxu0
        %v3125 = vadd.f32 %v2761, %v3124
        %v3126 = vpop.f32.mrf.mxu0
        %v3127 = vadd.f32 %v2762, %v3126
        %3128 = vmatprep.mubr.f32.mxu0 0.0
        %3129 = vmatmul.mubr.f32.gmra.mxu0 %v2928
        %v3130 = vpop.f32.mrf.mxu0
        %v3131 = vadd.f32 %v2763, %v3130
        %v3132 = vpop.f32.mrf.mxu0
        %v3133 = vadd.f32 %v2764, %v3132
        %3134 = vmatprep.mubr.f32.mxu0 0.0
        %3135 = vmatmul.mubr.f32.gmra.mxu0 %v2930
        %v3136 = vpop.f32.mrf.mxu0
        %v3137 = vadd.f32 %v2765, %v3136
        %v3138 = vpop.f32.mrf.mxu0
        %v3139 = vadd.f32 %v2766, %v3138
        %3140 = vmatprep.mubr.f32.mxu0 0.0
        %3141 = vmatmul.mubr.f32.gmra.mxu0 %v2932
        %v3142 = vpop.f32.mrf.mxu0
        %v3143 = vadd.f32 %v2767, %v3142
        %v3144 = vpop.f32.mrf.mxu0
        %v3145 = vadd.f32 %v2768, %v3144
        %3146 = vmatprep.mubr.f32.mxu0 0.0
        %3147 = vmatmul.mubr.f32.gmra.mxu0 %v2934
        %v3148 = vpop.f32.mrf.mxu0
        %v3149 = vadd.f32 %v2769, %v3148
        %v3150 = vpop.f32.mrf.mxu0
        %v3151 = vadd.f32 %v2770, %v3150
        %3152 = vmatprep.mubr.f32.mxu0 0.0
        %3153 = vmatmul.mubr.f32.gmra.mxu0 %v2936
        %v3154 = vpop.f32.mrf.mxu0
        %v3155 = vadd.f32 %v2771, %v3154
        %v3156 = vpop.f32.mrf.mxu0
        %v3157 = vadd.f32 %v2772, %v3156
        %3158 = vmatprep.mubr.f32.mxu0 0.0
        %3159 = vmatmul.mubr.f32.gmra.mxu0 %v2938
        %v3160 = vpop.f32.mrf.mxu0
        %v3161 = vadd.f32 %v2773, %v3160
        %v3162 = vpop.f32.mrf.mxu0
        %v3163 = vadd.f32 %v2774, %v3162
        %3164 = vmatprep.mubr.f32.mxu0 0.0
        %3165 = vmatmul.mubr.f32.gmra.mxu0 %v2940
        %v3166 = vpop.f32.mrf.mxu0
        %v3167 = vadd.f32 %v2775, %v3166
        %v3168 = vpop.f32.mrf.mxu0
        %v3169 = vadd.f32 %v2776, %v3168
        %3170 = vmatprep.mubr.f32.mxu0 0.0
        %3171 = vmatmul.mubr.f32.gmra.mxu0 %v2942
        %v3172 = vpop.f32.mrf.mxu0
        %v3173 = vadd.f32 %v2777, %v3172
        %v3174 = vpop.f32.mrf.mxu0
        %v3175 = vadd.f32 %v2778, %v3174
        %3176 = vmatprep.mubr.f32.mxu0 0.0
        %3177 = vmatmul.mubr.f32.gmra.mxu0 %v2944
        %v3178 = vpop.f32.mrf.mxu0
        %v3179 = vadd.f32 %v2779, %v3178
        %v3180 = vpop.f32.mrf.mxu0
        %v3181 = vadd.f32 %v2780, %v3180
        %3182 = vmatprep.mubr.f32.mxu0 0.0
        %3183 = vmatmul.mubr.f32.gmra.mxu0 %v2946
        %v3184 = vpop.f32.mrf.mxu0
        %v3185 = vadd.f32 %v2781, %v3184
        %v3186 = vpop.f32.mrf.mxu0
        %v3187 = vadd.f32 %v2782, %v3186
        %3188 = vmatprep.mubr.f32.mxu0 0.0
        %3189 = vmatmul.mubr.f32.gmra.mxu0 %v2948
        %v3190 = vpop.f32.mrf.mxu0
        %v3191 = vadd.f32 %v2783, %v3190
        %v3192 = vpop.f32.mrf.mxu0
        %v3193 = vadd.f32 %v2784, %v3192
        %3194 = vmatprep.mubr.f32.mxu0 0.0
        %3195 = vmatmul.mubr.f32.gmra.mxu0 %v2950
        %v3196 = vpop.f32.mrf.mxu0
        %v3197 = vadd.f32 %v2785, %v3196
        %v3198 = vpop.f32.mrf.mxu0
        %v3199 = vadd.f32 %v2786, %v3198
        %3200 = vmatprep.mubr.f32.mxu0 0.0
        %3201 = vmatmul.mubr.f32.gmra.mxu0 %v2952
        %v3202 = vpop.f32.mrf.mxu0
        %v3203 = vadd.f32 %v2787, %v3202
        %v3204 = vpop.f32.mrf.mxu0
        %v3205 = vadd.f32 %v2788, %v3204
        %3206 = vmatprep.mubr.f32.mxu0 0.0
        %3207 = vmatmul.mubr.f32.gmra.mxu0 %v2954
        %v3208 = vpop.f32.mrf.mxu0
        %v3209 = vadd.f32 %v2789, %v3208
        %v3210 = vpop.f32.mrf.mxu0
        %v3211 = vadd.f32 %v2790, %v3210
        %3212 = vmatprep.mubr.f32.mxu0 0.0
        %3213 = vmatmul.mubr.f32.gmra.mxu0 %v2956
        %v3214 = vpop.f32.mrf.mxu0
        %v3215 = vadd.f32 %v2791, %v3214
        %v3216 = vpop.f32.mrf.mxu0
        %v3217 = vadd.f32 %v2792, %v3216
        %3218 = vmatprep.mubr.f32.mxu0 0.0
        %3219 = vmatmul.mubr.f32.gmra.mxu0 %v2958
        %v3220 = vpop.f32.mrf.mxu0
        %v3221 = vadd.f32 %v2793, %v3220
        %v3222 = vpop.f32.mrf.mxu0
        %v3223 = vadd.f32 %v2794, %v3222
        %3224 = vmatprep.mubr.f32.mxu0 0.0
        %3225 = vmatmul.mubr.f32.gmra.mxu0 %v2960
        %v3226 = vpop.f32.mrf.mxu0
        %v3227 = vadd.f32 %v2795, %v3226
        %v3228 = vpop.f32.mrf.mxu0
        %v3229 = vadd.f32 %v2796, %v3228
        %3230 = vmatprep.mubr.f32.mxu0 0.0
        %3231 = vmatmul.mubr.f32.gmra.mxu0 %v2962
        %v3232 = vpop.f32.mrf.mxu0
        %v3233 = vadd.f32 %v2797, %v3232
        %v3234 = vpop.f32.mrf.mxu0
        %v3235 = vadd.f32 %v2798, %v3234
        %3236 = vmatprep.mubr.f32.mxu0 0.0
        %3237 = vmatmul.mubr.f32.gmra.mxu0 %v2964
        %v3238 = vpop.f32.mrf.mxu0
        %v3239 = vadd.f32 %v2799, %v3238
        %v3240 = vpop.f32.mrf.mxu0
        %v3241 = vadd.f32 %v2800, %v3240
        %3242 = vmatprep.mubr.f32.mxu0 0.0
        %3243 = vmatmul.mubr.f32.gmra.mxu0 %v2966
        %v3244 = vpop.f32.mrf.mxu0
        %v3245 = vadd.f32 %v2801, %v3244
        %v3246 = vpop.f32.mrf.mxu0
        %v3247 = vadd.f32 %v2802, %v3246
        %3248 = vmatprep.mubr.f32.mxu0 0.0
        %3249 = vmatmul.mubr.f32.gmra.mxu0 %v2968
        %v3250 = vpop.f32.mrf.mxu0
        %v3251 = vadd.f32 %v2803, %v3250
        %v3252 = vpop.f32.mrf.mxu0
        %v3253 = vadd.f32 %v2804, %v3252
        %3254 = vmatprep.mubr.f32.mxu0 0.0
        %3255 = vmatmul.mubr.f32.gmra.mxu0 %v2970
        %v3256 = vpop.f32.mrf.mxu0
        %v3257 = vadd.f32 %v2805, %v3256
        %v3258 = vpop.f32.mrf.mxu0
        %v3259 = vadd.f32 %v2806, %v3258
        %3260 = vmatprep.mubr.f32.mxu0 0.0
        %3261 = vmatmul.mubr.f32.gmra.mxu0 %v2972
        %v3262 = vpop.f32.mrf.mxu0
        %v3263 = vadd.f32 %v2807, %v3262
        %v3264 = vpop.f32.mrf.mxu0
        %v3265 = vadd.f32 %v2808, %v3264
        %3266 = vmatprep.mubr.f32.mxu0 0.0
        %3267 = vmatmul.mubr.f32.gmra.mxu0 %v2974
        %v3268 = vpop.f32.mrf.mxu0
        %v3269 = vadd.f32 %v2809, %v3268
        %v3270 = vpop.f32.mrf.mxu0
        %v3271 = vadd.f32 %v2810, %v3270
        %3272 = vmatprep.mubr.f32.mxu0 0.0
        %3273 = vmatmul.mubr.f32.gmra.mxu0 %v2976
        %v3274 = vpop.f32.mrf.mxu0
        %v3275 = vadd.f32 %v2811, %v3274
        %v3276 = vpop.f32.mrf.mxu0
        %v3277 = vadd.f32 %v2812, %v3276
        %3278 = vmatprep.mubr.f32.mxu0 0.0
        %3279 = vmatmul.mubr.f32.gmra.mxu0 %v2978
        %v3280 = vpop.f32.mrf.mxu0
        %v3281 = vadd.f32 %v2813, %v3280
        %v3282 = vpop.f32.mrf.mxu0
        %v3283 = vadd.f32 %v2814, %v3282
        %3284 = vmatprep.mubr.f32.mxu0 0.0
        %3285 = vmatmul.mubr.f32.gmra.mxu0 %v2980
        %v3286 = vpop.f32.mrf.mxu0
        %v3287 = vadd.f32 %v2815, %v3286
        %v3288 = vpop.f32.mrf.mxu0
        %v3289 = vadd.f32 %v2816, %v3288
        %3290 = vmatprep.mubr.f32.mxu0 0.0
        %3291 = vmatmul.mubr.f32.gmra.mxu0 %v2982
        %v3292 = vpop.f32.mrf.mxu0
        %v3293 = vadd.f32 %v2817, %v3292
        %v3294 = vpop.f32.mrf.mxu0
        %v3295 = vadd.f32 %v2818, %v3294
        %3296 = vmatprep.mubr.f32.mxu0 0.0
        %3297 = vmatmul.mubr.f32.gmra.mxu0 %v2984
        %v3298 = vpop.f32.mrf.mxu0
        %v3299 = vadd.f32 %v2819, %v3298
        %v3300 = vpop.f32.mrf.mxu0
        %v3301 = vadd.f32 %v2820, %v3300
        %3302 = vmatprep.mubr.f32.mxu0 0.0
        %3303 = vmatmul.mubr.f32.gmra.mxu0 %v2986
        %v3304 = vpop.f32.mrf.mxu0
        %v3305 = vadd.f32 %v2821, %v3304
        %v3306 = vpop.f32.mrf.mxu0
        %v3307 = vadd.f32 %v2822, %v3306
        %3308 = vdwg.mxu0
        %v3309 = vmax.f32 %v3119, %v3121
        %3310 = vmax.xlane.f32.xlu0 %v3309
        %v3311 = vpop.xlane.xlu0 %3310
        %v3312 = vmax.f32 %v3125, %v3127
        %3313 = vmax.xlane.f32.xlu0 %v3312
        %v3314 = vpop.xlane.xlu0 %3313
        %v3315 = vmax.f32 %v3131, %v3133
        %3316 = vmax.xlane.f32.xlu0 %v3315
        %v3317 = vpop.xlane.xlu0 %3316
        %v3318 = vmax.f32 %v3137, %v3139
        %3319 = vmax.xlane.f32.xlu0 %v3318
        %v3320 = vpop.xlane.xlu0 %3319
        %v3321 = vmax.f32 %v3143, %v3145
        %3322 = vmax.xlane.f32.xlu0 %v3321
        %v3323 = vpop.xlane.xlu0 %3322
        %v3324 = vmax.f32 %v3149, %v3151
        %3325 = vmax.xlane.f32.xlu0 %v3324
        %v3326 = vpop.xlane.xlu0 %3325
        %v3327 = vmax.f32 %v3155, %v3157
        %3328 = vmax.xlane.f32.xlu0 %v3327
        %v3329 = vpop.xlane.xlu0 %3328
        %v3330 = vmax.f32 %v3161, %v3163
        %3331 = vmax.xlane.f32.xlu0 %v3330
        %v3332 = vpop.xlane.xlu0 %3331
        %v3333 = vmax.f32 %v3167, %v3169
        %3334 = vmax.xlane.f32.xlu0 %v3333
        %v3335 = vpop.xlane.xlu0 %3334
        %v3336 = vmax.f32 %v3173, %v3175
        %3337 = vmax.xlane.f32.xlu0 %v3336
        %v3338 = vpop.xlane.xlu0 %3337
        %v3339 = vmax.f32 %v3179, %v3181
        %3340 = vmax.xlane.f32.xlu0 %v3339
        %v3341 = vpop.xlane.xlu0 %3340
        %v3342 = vmax.f32 %v3185, %v3187
        %3343 = vmax.xlane.f32.xlu0 %v3342
        %v3344 = vpop.xlane.xlu0 %3343
        %v3345 = vmax.f32 %v3191, %v3193
        %3346 = vmax.xlane.f32.xlu0 %v3345
        %v3347 = vpop.xlane.xlu0 %3346
        %v3348 = vmax.f32 %v3197, %v3199
        %3349 = vmax.xlane.f32.xlu0 %v3348
        %v3350 = vpop.xlane.xlu0 %3349
        %v3351 = vmax.f32 %v3203, %v3205
        %3352 = vmax.xlane.f32.xlu0 %v3351
        %v3353 = vpop.xlane.xlu0 %3352
        %v3354 = vmax.f32 %v3209, %v3211
        %3355 = vmax.xlane.f32.xlu0 %v3354
        %v3356 = vpop.xlane.xlu0 %3355
        %v3357 = vmax.f32 %v3215, %v3217
        %3358 = vmax.xlane.f32.xlu0 %v3357
        %v3359 = vpop.xlane.xlu0 %3358
        %v3360 = vmax.f32 %v3221, %v3223
        %3361 = vmax.xlane.f32.xlu0 %v3360
        %v3362 = vpop.xlane.xlu0 %3361
        %v3363 = vmax.f32 %v3227, %v3229
        %3364 = vmax.xlane.f32.xlu0 %v3363
        %v3365 = vpop.xlane.xlu0 %3364
        %v3366 = vmax.f32 %v3233, %v3235
        %3367 = vmax.xlane.f32.xlu0 %v3366
        %v3368 = vpop.xlane.xlu0 %3367
        %v3369 = vmax.f32 %v3239, %v3241
        %3370 = vmax.xlane.f32.xlu0 %v3369
        %v3371 = vpop.xlane.xlu0 %3370
        %v3372 = vmax.f32 %v3245, %v3247
        %3373 = vmax.xlane.f32.xlu0 %v3372
        %v3374 = vpop.xlane.xlu0 %3373
        %v3375 = vmax.f32 %v3251, %v3253
        %3376 = vmax.xlane.f32.xlu0 %v3375
        %v3377 = vpop.xlane.xlu0 %3376
        %v3378 = vmax.f32 %v3257, %v3259
        %3379 = vmax.xlane.f32.xlu0 %v3378
        %v3380 = vpop.xlane.xlu0 %3379
        %v3381 = vmax.f32 %v3263, %v3265
        %3382 = vmax.xlane.f32.xlu0 %v3381
        %v3383 = vpop.xlane.xlu0 %3382
        %v3384 = vmax.f32 %v3269, %v3271
        %3385 = vmax.xlane.f32.xlu0 %v3384
        %v3386 = vpop.xlane.xlu0 %3385
        %v3387 = vmax.f32 %v3275, %v3277
        %3388 = vmax.xlane.f32.xlu0 %v3387
        %v3389 = vpop.xlane.xlu0 %3388
        %v3390 = vmax.f32 %v3281, %v3283
        %3391 = vmax.xlane.f32.xlu0 %v3390
        %v3392 = vpop.xlane.xlu0 %3391
        %v3393 = vmax.f32 %v3287, %v3289
        %3394 = vmax.xlane.f32.xlu0 %v3393
        %v3395 = vpop.xlane.xlu0 %3394
        %v3396 = vmax.f32 %v3293, %v3295
        %3397 = vmax.xlane.f32.xlu0 %v3396
        %v3398 = vpop.xlane.xlu0 %3397
        %v3399 = vmax.f32 %v3299, %v3301
        %3400 = vmax.xlane.f32.xlu0 %v3399
        %v3401 = vpop.xlane.xlu0 %3400
        %v3402 = vmax.f32 %v3305, %v3307
        %3403 = vmax.xlane.f32.xlu0 %v3402
        %v3404 = vpop.xlane.xlu0 %3403
        %v3405 = vsub.f32 %v3119, %v3311
        %v3406 = vsub.f32 %v3121, %v3311
        %v3407 = vsub.f32 %v3125, %v3314
        %v3408 = vsub.f32 %v3127, %v3314
        %v3409 = vsub.f32 %v3131, %v3317
        %v3410 = vsub.f32 %v3133, %v3317
        %v3411 = vsub.f32 %v3137, %v3320
        %v3412 = vsub.f32 %v3139, %v3320
        %v3413 = vsub.f32 %v3143, %v3323
        %v3414 = vsub.f32 %v3145, %v3323
        %v3415 = vsub.f32 %v3149, %v3326
        %v3416 = vsub.f32 %v3151, %v3326
        %v3417 = vsub.f32 %v3155, %v3329
        %v3418 = vsub.f32 %v3157, %v3329
        %v3419 = vsub.f32 %v3161, %v3332
        %v3420 = vsub.f32 %v3163, %v3332
        %v3421 = vsub.f32 %v3167, %v3335
        %v3422 = vsub.f32 %v3169, %v3335
        %v3423 = vsub.f32 %v3173, %v3338
        %v3424 = vsub.f32 %v3175, %v3338
        %v3425 = vsub.f32 %v3179, %v3341
        %v3426 = vsub.f32 %v3181, %v3341
        %v3427 = vsub.f32 %v3185, %v3344
        %v3428 = vsub.f32 %v3187, %v3344
        %v3429 = vsub.f32 %v3191, %v3347
        %v3430 = vsub.f32 %v3193, %v3347
        %v3431 = vsub.f32 %v3197, %v3350
        %v3432 = vsub.f32 %v3199, %v3350
        %v3433 = vsub.f32 %v3203, %v3353
        %v3434 = vsub.f32 %v3205, %v3353
        %v3435 = vsub.f32 %v3209, %v3356
        %v3436 = vsub.f32 %v3211, %v3356
        %v3437 = vsub.f32 %v3215, %v3359
        %v3438 = vsub.f32 %v3217, %v3359
        %v3439 = vsub.f32 %v3221, %v3362
        %v3440 = vsub.f32 %v3223, %v3362
        %v3441 = vsub.f32 %v3227, %v3365
        %v3442 = vsub.f32 %v3229, %v3365
        %v3443 = vsub.f32 %v3233, %v3368
        %v3444 = vsub.f32 %v3235, %v3368
        %v3445 = vsub.f32 %v3239, %v3371
        %v3446 = vsub.f32 %v3241, %v3371
        %v3447 = vsub.f32 %v3245, %v3374
        %v3448 = vsub.f32 %v3247, %v3374
        %v3449 = vsub.f32 %v3251, %v3377
        %v3450 = vsub.f32 %v3253, %v3377
        %v3451 = vsub.f32 %v3257, %v3380
        %v3452 = vsub.f32 %v3259, %v3380
        %v3453 = vsub.f32 %v3263, %v3383
        %v3454 = vsub.f32 %v3265, %v3383
        %v3455 = vsub.f32 %v3269, %v3386
        %v3456 = vsub.f32 %v3271, %v3386
        %v3457 = vsub.f32 %v3275, %v3389
        %v3458 = vsub.f32 %v3277, %v3389
        %v3459 = vsub.f32 %v3281, %v3392
        %v3460 = vsub.f32 %v3283, %v3392
        %v3461 = vsub.f32 %v3287, %v3395
        %v3462 = vsub.f32 %v3289, %v3395
        %v3463 = vsub.f32 %v3293, %v3398
        %v3464 = vsub.f32 %v3295, %v3398
        %v3465 = vsub.f32 %v3299, %v3401
        %v3466 = vsub.f32 %v3301, %v3401
        %v3467 = vsub.f32 %v3305, %v3404
        %v3468 = vsub.f32 %v3307, %v3404
        %v3469 = vmul.f32 %v3405, 1.442695
        %v3470 = vpow.pop %v3469
        %v3471 = vmul.f32 %v3406, 1.442695
        %v3472 = vpow.pop %v3471
        %v3473 = vmul.f32 %v3407, 1.442695
        %v3474 = vpow.pop %v3473
        %v3475 = vmul.f32 %v3408, 1.442695
        %v3476 = vpow.pop %v3475
        %v3477 = vmul.f32 %v3409, 1.442695
        %v3478 = vpow.pop %v3477
        %v3479 = vmul.f32 %v3410, 1.442695
        %v3480 = vpow.pop %v3479
        %v3481 = vmul.f32 %v3411, 1.442695
        %v3482 = vpow.pop %v3481
        %v3483 = vmul.f32 %v3412, 1.442695
        %v3484 = vpow.pop %v3483
        %v3485 = vmul.f32 %v3413, 1.442695
        %v3486 = vpow.pop %v3485
        %v3487 = vmul.f32 %v3414, 1.442695
        %v3488 = vpow.pop %v3487
        %v3489 = vmul.f32 %v3415, 1.442695
        %v3490 = vpow.pop %v3489
        %v3491 = vmul.f32 %v3416, 1.442695
        %v3492 = vpow.pop %v3491
        %v3493 = vmul.f32 %v3417, 1.442695
        %v3494 = vpow.pop %v3493
        %v3495 = vmul.f32 %v3418, 1.442695
        %v3496 = vpow.pop %v3495
        %v3497 = vmul.f32 %v3419, 1.442695
        %v3498 = vpow.pop %v3497
        %v3499 = vmul.f32 %v3420, 1.442695
        %v3500 = vpow.pop %v3499
        %v3501 = vmul.f32 %v3421, 1.442695
        %v3502 = vpow.pop %v3501
        %v3503 = vmul.f32 %v3422, 1.442695
        %v3504 = vpow.pop %v3503
        %v3505 = vmul.f32 %v3423, 1.442695
        %v3506 = vpow.pop %v3505
        %v3507 = vmul.f32 %v3424, 1.442695
        %v3508 = vpow.pop %v3507
        %v3509 = vmul.f32 %v3425, 1.442695
        %v3510 = vpow.pop %v3509
        %v3511 = vmul.f32 %v3426, 1.442695
        %v3512 = vpow.pop %v3511
        %v3513 = vmul.f32 %v3427, 1.442695
        %v3514 = vpow.pop %v3513
        %v3515 = vmul.f32 %v3428, 1.442695
        %v3516 = vpow.pop %v3515
        %v3517 = vmul.f32 %v3429, 1.442695
        %v3518 = vpow.pop %v3517
        %v3519 = vmul.f32 %v3430, 1.442695
        %v3520 = vpow.pop %v3519
        %v3521 = vmul.f32 %v3431, 1.442695
        %v3522 = vpow.pop %v3521
        %v3523 = vmul.f32 %v3432, 1.442695
        %v3524 = vpow.pop %v3523
        %v3525 = vmul.f32 %v3433, 1.442695
        %v3526 = vpow.pop %v3525
        %v3527 = vmul.f32 %v3434, 1.442695
        %v3528 = vpow.pop %v3527
        %v3529 = vmul.f32 %v3435, 1.442695
        %v3530 = vpow.pop %v3529
        %v3531 = vmul.f32 %v3436, 1.442695
        %v3532 = vpow.pop %v3531
        %v3533 = vmul.f32 %v3437, 1.442695
        %v3534 = vpow.pop %v3533
        %v3535 = vmul.f32 %v3438, 1.442695
        %v3536 = vpow.pop %v3535
        %v3537 = vmul.f32 %v3439, 1.442695
        %v3538 = vpow.pop %v3537
        %v3539 = vmul.f32 %v3440, 1.442695
        %v3540 = vpow.pop %v3539
        %v3541 = vmul.f32 %v3441, 1.442695
        %v3542 = vpow.pop %v3541
        %v3543 = vmul.f32 %v3442, 1.442695
        %v3544 = vpow.pop %v3543
        %v3545 = vmul.f32 %v3443, 1.442695
        %v3546 = vpow.pop %v3545
        %v3547 = vmul.f32 %v3444, 1.442695
        %v3548 = vpow.pop %v3547
        %v3549 = vmul.f32 %v3445, 1.442695
        %v3550 = vpow.pop %v3549
        %v3551 = vmul.f32 %v3446, 1.442695
        %v3552 = vpow.pop %v3551
        %v3553 = vmul.f32 %v3447, 1.442695
        %v3554 = vpow.pop %v3553
        %v3555 = vmul.f32 %v3448, 1.442695
        %v3556 = vpow.pop %v3555
        %v3557 = vmul.f32 %v3449, 1.442695
        %v3558 = vpow.pop %v3557
        %v3559 = vmul.f32 %v3450, 1.442695
        %v3560 = vpow.pop %v3559
        %v3561 = vmul.f32 %v3451, 1.442695
        %v3562 = vpow.pop %v3561
        %v3563 = vmul.f32 %v3452, 1.442695
        %v3564 = vpow.pop %v3563
        %v3565 = vmul.f32 %v3453, 1.442695
        %v3566 = vpow.pop %v3565
        %v3567 = vmul.f32 %v3454, 1.442695
        %v3568 = vpow.pop %v3567
        %v3569 = vmul.f32 %v3455, 1.442695
        %v3570 = vpow.pop %v3569
        %v3571 = vmul.f32 %v3456, 1.442695
        %v3572 = vpow.pop %v3571
        %v3573 = vmul.f32 %v3457, 1.442695
        %v3574 = vpow.pop %v3573
        %v3575 = vmul.f32 %v3458, 1.442695
        %v3576 = vpow.pop %v3575
        %v3577 = vmul.f32 %v3459, 1.442695
        %v3578 = vpow.pop %v3577
        %v3579 = vmul.f32 %v3460, 1.442695
        %v3580 = vpow.pop %v3579
        %v3581 = vmul.f32 %v3461, 1.442695
        %v3582 = vpow.pop %v3581
        %v3583 = vmul.f32 %v3462, 1.442695
        %v3584 = vpow.pop %v3583
        %v3585 = vmul.f32 %v3463, 1.442695
        %v3586 = vpow.pop %v3585
        %v3587 = vmul.f32 %v3464, 1.442695
        %v3588 = vpow.pop %v3587
        %v3589 = vmul.f32 %v3465, 1.442695
        %v3590 = vpow.pop %v3589
        %v3591 = vmul.f32 %v3466, 1.442695
        %v3592 = vpow.pop %v3591
        %v3593 = vmul.f32 %v3467, 1.442695
        %v3594 = vpow.pop %v3593
        %v3595 = vmul.f32 %v3468, 1.442695
        %v3596 = vpow.pop %v3595
        %v3597 = vadd.f32 %v3470, %v3472
        %3598 = vadd.xlane.f32.xlu0 %v3597
        %v3599 = vpop.xlane.xlu0 %3598
        %v3600 = vadd.f32 %v3474, %v3476
        %3601 = vadd.xlane.f32.xlu0 %v3600
        %v3602 = vpop.xlane.xlu0 %3601
        %v3603 = vadd.f32 %v3478, %v3480
        %3604 = vadd.xlane.f32.xlu0 %v3603
        %v3605 = vpop.xlane.xlu0 %3604
        %v3606 = vadd.f32 %v3482, %v3484
        %3607 = vadd.xlane.f32.xlu0 %v3606
        %v3608 = vpop.xlane.xlu0 %3607
        %v3609 = vadd.f32 %v3486, %v3488
        %3610 = vadd.xlane.f32.xlu0 %v3609
        %v3611 = vpop.xlane.xlu0 %3610
        %v3612 = vadd.f32 %v3490, %v3492
        %3613 = vadd.xlane.f32.xlu0 %v3612
        %v3614 = vpop.xlane.xlu0 %3613
        %v3615 = vadd.f32 %v3494, %v3496
        %3616 = vadd.xlane.f32.xlu0 %v3615
        %v3617 = vpop.xlane.xlu0 %3616
        %v3618 = vadd.f32 %v3498, %v3500
        %3619 = vadd.xlane.f32.xlu0 %v3618
        %v3620 = vpop.xlane.xlu0 %3619
        %v3621 = vadd.f32 %v3502, %v3504
        %3622 = vadd.xlane.f32.xlu0 %v3621
        %v3623 = vpop.xlane.xlu0 %3622
        %v3624 = vadd.f32 %v3506, %v3508
        %3625 = vadd.xlane.f32.xlu0 %v3624
        %v3626 = vpop.xlane.xlu0 %3625
        %v3627 = vadd.f32 %v3510, %v3512
        %3628 = vadd.xlane.f32.xlu0 %v3627
        %v3629 = vpop.xlane.xlu0 %3628
        %v3630 = vadd.f32 %v3514, %v3516
        %3631 = vadd.xlane.f32.xlu0 %v3630
        %v3632 = vpop.xlane.xlu0 %3631
        %v3633 = vadd.f32 %v3518, %v3520
        %3634 = vadd.xlane.f32.xlu0 %v3633
        %v3635 = vpop.xlane.xlu0 %3634
        %v3636 = vadd.f32 %v3522, %v3524
        %3637 = vadd.xlane.f32.xlu0 %v3636
        %v3638 = vpop.xlane.xlu0 %3637
        %v3639 = vadd.f32 %v3526, %v3528
        %3640 = vadd.xlane.f32.xlu0 %v3639
        %v3641 = vpop.xlane.xlu0 %3640
        %v3642 = vadd.f32 %v3530, %v3532
        %3643 = vadd.xlane.f32.xlu0 %v3642
        %v3644 = vpop.xlane.xlu0 %3643
        %v3645 = vadd.f32 %v3534, %v3536
        %3646 = vadd.xlane.f32.xlu0 %v3645
        %v3647 = vpop.xlane.xlu0 %3646
        %v3648 = vadd.f32 %v3538, %v3540
        %3649 = vadd.xlane.f32.xlu0 %v3648
        %v3650 = vpop.xlane.xlu0 %3649
        %v3651 = vadd.f32 %v3542, %v3544
        %3652 = vadd.xlane.f32.xlu0 %v3651
        %v3653 = vpop.xlane.xlu0 %3652
        %v3654 = vadd.f32 %v3546, %v3548
        %3655 = vadd.xlane.f32.xlu0 %v3654
        %v3656 = vpop.xlane.xlu0 %3655
        %v3657 = vadd.f32 %v3550, %v3552
        %3658 = vadd.xlane.f32.xlu0 %v3657
        %v3659 = vpop.xlane.xlu0 %3658
        %v3660 = vadd.f32 %v3554, %v3556
        %3661 = vadd.xlane.f32.xlu0 %v3660
        %v3662 = vpop.xlane.xlu0 %3661
        %v3663 = vadd.f32 %v3558, %v3560
        %3664 = vadd.xlane.f32.xlu0 %v3663
        %v3665 = vpop.xlane.xlu0 %3664
        %v3666 = vadd.f32 %v3562, %v3564
        %3667 = vadd.xlane.f32.xlu0 %v3666
        %v3668 = vpop.xlane.xlu0 %3667
        %v3669 = vadd.f32 %v3566, %v3568
        %3670 = vadd.xlane.f32.xlu0 %v3669
        %v3671 = vpop.xlane.xlu0 %3670
        %v3672 = vadd.f32 %v3570, %v3572
        %3673 = vadd.xlane.f32.xlu0 %v3672
        %v3674 = vpop.xlane.xlu0 %3673
        %v3675 = vadd.f32 %v3574, %v3576
        %3676 = vadd.xlane.f32.xlu0 %v3675
        %v3677 = vpop.xlane.xlu0 %3676
        %v3678 = vadd.f32 %v3578, %v3580
        %3679 = vadd.xlane.f32.xlu0 %v3678
        %v3680 = vpop.xlane.xlu0 %3679
        %v3681 = vadd.f32 %v3582, %v3584
        %3682 = vadd.xlane.f32.xlu0 %v3681
        %v3683 = vpop.xlane.xlu0 %3682
        %v3684 = vadd.f32 %v3586, %v3588
        %3685 = vadd.xlane.f32.xlu0 %v3684
        %v3686 = vpop.xlane.xlu0 %3685
        %v3687 = vadd.f32 %v3590, %v3592
        %3688 = vadd.xlane.f32.xlu0 %v3687
        %v3689 = vpop.xlane.xlu0 %3688
        %v3690 = vadd.f32 %v3594, %v3596
        %3691 = vadd.xlane.f32.xlu0 %v3690
        %v3692 = vpop.xlane.xlu0 %3691
        %v3693 = vrcp.pop %v3599
        %v3694 = vrcp.pop %v3602
        %v3695 = vrcp.pop %v3605
        %v3696 = vrcp.pop %v3608
        %v3697 = vrcp.pop %v3611
        %v3698 = vrcp.pop %v3614
        %v3699 = vrcp.pop %v3617
        %v3700 = vrcp.pop %v3620
        %v3701 = vrcp.pop %v3623
        %v3702 = vrcp.pop %v3626
        %v3703 = vrcp.pop %v3629
        %v3704 = vrcp.pop %v3632
        %v3705 = vrcp.pop %v3635
        %v3706 = vrcp.pop %v3638
        %v3707 = vrcp.pop %v3641
        %v3708 = vrcp.pop %v3644
        %v3709 = vrcp.pop %v3647
        %v3710 = vrcp.pop %v3650
        %v3711 = vrcp.pop %v3653
        %v3712 = vrcp.pop %v3656
        %v3713 = vrcp.pop %v3659
        %v3714 = vrcp.pop %v3662
        %v3715 = vrcp.pop %v3665
        %v3716 = vrcp.pop %v3668
        %v3717 = vrcp.pop %v3671
        %v3718 = vrcp.pop %v3674
        %v3719 = vrcp.pop %v3677
        %v3720 = vrcp.pop %v3680
        %v3721 = vrcp.pop %v3683
        %v3722 = vrcp.pop %v3686
        %v3723 = vrcp.pop %v3689
        %v3724 = vrcp.pop %v3692
        %v3725 = vmul.f32 %v3470, %v3693
        %v3726 = vmul.f32 %v3472, %v3693
        %v3727 = vmul.f32 %v3474, %v3694
        %v3728 = vmul.f32 %v3476, %v3694
        %v3729 = vmul.f32 %v3478, %v3695
        %v3730 = vmul.f32 %v3480, %v3695
        %v3731 = vmul.f32 %v3482, %v3696
        %v3732 = vmul.f32 %v3484, %v3696
        %v3733 = vmul.f32 %v3486, %v3697
        %v3734 = vmul.f32 %v3488, %v3697
        %v3735 = vmul.f32 %v3490, %v3698
        %v3736 = vmul.f32 %v3492, %v3698
        %v3737 = vmul.f32 %v3494, %v3699
        %v3738 = vmul.f32 %v3496, %v3699
        %v3739 = vmul.f32 %v3498, %v3700
        %v3740 = vmul.f32 %v3500, %v3700
        %v3741 = vmul.f32 %v3502, %v3701
        %v3742 = vmul.f32 %v3504, %v3701
        %v3743 = vmul.f32 %v3506, %v3702
        %v3744 = vmul.f32 %v3508, %v3702
        %v3745 = vmul.f32 %v3510, %v3703
        %v3746 = vmul.f32 %v3512, %v3703
        %v3747 = vmul.f32 %v3514, %v3704
        %v3748 = vmul.f32 %v3516, %v3704
        %v3749 = vmul.f32 %v3518, %v3705
        %v3750 = vmul.f32 %v3520, %v3705
        %v3751 = vmul.f32 %v3522, %v3706
        %v3752 = vmul.f32 %v3524, %v3706
        %v3753 = vmul.f32 %v3526, %v3707
        %v3754 = vmul.f32 %v3528, %v3707
        %v3755 = vmul.f32 %v3530, %v3708
        %v3756 = vmul.f32 %v3532, %v3708
        %v3757 = vmul.f32 %v3534, %v3709
        %v3758 = vmul.f32 %v3536, %v3709
        %v3759 = vmul.f32 %v3538, %v3710
        %v3760 = vmul.f32 %v3540, %v3710
        %v3761 = vmul.f32 %v3542, %v3711
        %v3762 = vmul.f32 %v3544, %v3711
        %v3763 = vmul.f32 %v3546, %v3712
        %v3764 = vmul.f32 %v3548, %v3712
        %v3765 = vmul.f32 %v3550, %v3713
        %v3766 = vmul.f32 %v3552, %v3713
        %v3767 = vmul.f32 %v3554, %v3714
        %v3768 = vmul.f32 %v3556, %v3714
        %v3769 = vmul.f32 %v3558, %v3715
        %v3770 = vmul.f32 %v3560, %v3715
        %v3771 = vmul.f32 %v3562, %v3716
        %v3772 = vmul.f32 %v3564, %v3716
        %v3773 = vmul.f32 %v3566, %v3717
        %v3774 = vmul.f32 %v3568, %v3717
        %v3775 = vmul.f32 %v3570, %v3718
        %v3776 = vmul.f32 %v3572, %v3718
        %v3777 = vmul.f32 %v3574, %v3719
        %v3778 = vmul.f32 %v3576, %v3719
        %v3779 = vmul.f32 %v3578, %v3720
        %v3780 = vmul.f32 %v3580, %v3720
        %v3781 = vmul.f32 %v3582, %v3721
        %v3782 = vmul.f32 %v3584, %v3721
        %v3783 = vmul.f32 %v3586, %v3722
        %v3784 = vmul.f32 %v3588, %v3722
        %v3785 = vmul.f32 %v3590, %v3723
        %v3786 = vmul.f32 %v3592, %v3723
        %v3787 = vmul.f32 %v3594, %v3724
        %v3788 = vmul.f32 %v3596, %v3724
        %3789 = vrot.lane.b32.xlu0 %v2601, 64
        %v3790 = vpop.permute.xlu0 %3789
        %3791 = vrot.lane.b32.xlu0 %v2606, 64
        %v3792 = vpop.permute.xlu0 %3791
        %3793 = vrot.lane.b32.xlu0 %v2611, 64
        %v3794 = vpop.permute.xlu0 %3793
        %3795 = vrot.lane.b32.xlu0 %v2616, 64
        %v3796 = vpop.permute.xlu0 %3795
        %3797 = vrot.lane.b32.xlu0 %v2621, 64
        %v3798 = vpop.permute.xlu0 %3797
        %3799 = vrot.lane.b32.xlu0 %v2626, 64
        %v3800 = vpop.permute.xlu0 %3799
        %3801 = vrot.lane.b32.xlu0 %v2631, 64
        %v3802 = vpop.permute.xlu0 %3801
        %3803 = vrot.lane.b32.xlu0 %v2636, 64
        %v3804 = vpop.permute.xlu0 %3803
        %3805 = vrot.lane.b32.xlu0 %v2641, 64
        %v3806 = vpop.permute.xlu0 %3805
        %3807 = vrot.lane.b32.xlu0 %v2646, 64
        %v3808 = vpop.permute.xlu0 %3807
        %3809 = vrot.lane.b32.xlu0 %v2651, 64
        %v3810 = vpop.permute.xlu0 %3809
        %3811 = vrot.lane.b32.xlu0 %v2656, 64
        %v3812 = vpop.permute.xlu0 %3811
        %3813 = vrot.lane.b32.xlu0 %v2661, 64
        %v3814 = vpop.permute.xlu0 %3813
        %3815 = vrot.lane.b32.xlu0 %v2666, 64
        %v3816 = vpop.permute.xlu0 %3815
        %3817 = vrot.lane.b32.xlu0 %v2671, 64
        %v3818 = vpop.permute.xlu0 %3817
        %3819 = vrot.lane.b32.xlu0 %v2676, 64
        %v3820 = vpop.permute.xlu0 %3819
        %3821 = vrot.lane.b32.xlu0 %v2681, 64
        %v3822 = vpop.permute.xlu0 %3821
        %3823 = vrot.lane.b32.xlu0 %v2686, 64
        %v3824 = vpop.permute.xlu0 %3823
        %3825 = vrot.lane.b32.xlu0 %v2691, 64
        %v3826 = vpop.permute.xlu0 %3825
        %3827 = vrot.lane.b32.xlu0 %v2696, 64
        %v3828 = vpop.permute.xlu0 %3827
        %3829 = vrot.lane.b32.xlu0 %v2701, 64
        %v3830 = vpop.permute.xlu0 %3829
        %3831 = vrot.lane.b32.xlu0 %v2706, 64
        %v3832 = vpop.permute.xlu0 %3831
        %3833 = vrot.lane.b32.xlu0 %v2711, 64
        %v3834 = vpop.permute.xlu0 %3833
        %3835 = vrot.lane.b32.xlu0 %v2716, 64
        %v3836 = vpop.permute.xlu0 %3835
        %3837 = vrot.lane.b32.xlu0 %v2721, 64
        %v3838 = vpop.permute.xlu0 %3837
        %3839 = vrot.lane.b32.xlu0 %v2726, 64
        %v3840 = vpop.permute.xlu0 %3839
        %3841 = vrot.lane.b32.xlu0 %v2731, 64
        %v3842 = vpop.permute.xlu0 %3841
        %3843 = vrot.lane.b32.xlu0 %v2736, 64
        %v3844 = vpop.permute.xlu0 %3843
        %3845 = vrot.lane.b32.xlu0 %v2741, 64
        %v3846 = vpop.permute.xlu0 %3845
        %3847 = vrot.lane.b32.xlu0 %v2746, 64
        %v3848 = vpop.permute.xlu0 %3847
        %3849 = vrot.lane.b32.xlu0 %v2751, 64
        %v3850 = vpop.permute.xlu0 %3849
        %3851 = vrot.lane.b32.xlu0 %v2756, 64
        %v3852 = vpop.permute.xlu0 %3851
        %3885 = vmatprep.subr.mxu0 0.0
        %3886 = vmatpush1.msra.mxu0 %v3820
        %3887 = vmatprep.subr.mxu0 0.0
        %3888 = vmatpush1.msra.mxu0 %v3818
        %3889 = vmatprep.subr.mxu0 0.0
        %3890 = vmatpush1.msra.mxu0 %v3816
        %3891 = vmatprep.subr.mxu0 0.0
        %3892 = vmatpush1.msra.mxu0 %v3814
        %3893 = vmatprep.subr.mxu0 0.0
        %3894 = vmatpush1.msra.mxu0 %v3812
        %3895 = vmatprep.subr.mxu0 0.0
        %3896 = vmatpush1.msra.mxu0 %v3810
        %3897 = vmatprep.subr.mxu0 0.0
        %3898 = vmatpush1.msra.mxu0 %v3808
        %3899 = vmatprep.subr.mxu0 0.0
        %3900 = vmatpush1.msra.mxu0 %v3806
        %3901 = vmatprep.subr.mxu0 0.0
        %3902 = vmatpush1.msra.mxu0 %v3804
        %3903 = vmatprep.subr.mxu0 0.0
        %3904 = vmatpush1.msra.mxu0 %v3802
        %3905 = vmatprep.subr.mxu0 0.0
        %3906 = vmatpush1.msra.mxu0 %v3800
        %3907 = vmatprep.subr.mxu0 0.0
        %3908 = vmatpush1.msra.mxu0 %v3798
        %3909 = vmatprep.subr.mxu0 0.0
        %3910 = vmatpush1.msra.mxu0 %v3796
        %3911 = vmatprep.subr.mxu0 0.0
        %3912 = vmatpush1.msra.mxu0 %v3794
        %3913 = vmatprep.subr.mxu0 0.0
        %3914 = vmatpush1.msra.mxu0 %v3792
        %3915 = vmatprep.subr.mxu0 0.0
        %3916 = vmatpush1.msra.mxu0 %v3790
        %3917 = vmatprep.subr.mxu0 0.0
        %3918 = vmatpush2.msra.mxu0 %v3852
        %3919 = vmatprep.subr.mxu0 0.0
        %3920 = vmatpush2.msra.mxu0 %v3850
        %3921 = vmatprep.subr.mxu0 0.0
        %3922 = vmatpush2.msra.mxu0 %v3848
        %3923 = vmatprep.subr.mxu0 0.0
        %3924 = vmatpush2.msra.mxu0 %v3846
        %3925 = vmatprep.subr.mxu0 0.0
        %3926 = vmatpush2.msra.mxu0 %v3844
        %3927 = vmatprep.subr.mxu0 0.0
        %3928 = vmatpush2.msra.mxu0 %v3842
        %3929 = vmatprep.subr.mxu0 0.0
        %3930 = vmatpush2.msra.mxu0 %v3840
        %3931 = vmatprep.subr.mxu0 0.0
        %3932 = vmatpush2.msra.mxu0 %v3838
        %3933 = vmatprep.subr.mxu0 0.0
        %3934 = vmatpush2.msra.mxu0 %v3836
        %3935 = vmatprep.subr.mxu0 0.0
        %3936 = vmatpush2.msra.mxu0 %v3834
        %3937 = vmatprep.subr.mxu0 0.0
        %3938 = vmatpush2.msra.mxu0 %v3832
        %3939 = vmatprep.subr.mxu0 0.0
        %3940 = vmatpush2.msra.mxu0 %v3830
        %3941 = vmatprep.subr.mxu0 0.0
        %3942 = vmatpush2.msra.mxu0 %v3828
        %3943 = vmatprep.subr.mxu0 0.0
        %3944 = vmatpush2.msra.mxu0 %v3826
        %3945 = vmatprep.subr.mxu0 0.0
        %3946 = vmatpush2.msra.mxu0 %v3824
        %3947 = vmatprep.subr.mxu0 0.0
        %3948 = vmatpush2.msra.mxu0 %v3822
        %3949 = vmatprep.mubr.f32.mxu0 %v3726
        %3950 = vmatmul.mubr.f32.gmra.mxu0 %v3725
        %v3951 = vpop.f32.mrf.mxu0
        %v3952 = vadd.f32 0.0, %v3951
        %v3953 = vpop.f32.mrf.mxu0
        %3954 = vmatprep.mubr.f32.mxu0 %v3728
        %3955 = vmatmul.mubr.f32.gmra.mxu0 %v3727
        %v3956 = vpop.f32.mrf.mxu0
        %v3957 = vadd.f32 0.0, %v3956
        %v3958 = vpop.f32.mrf.mxu0
        %3959 = vmatprep.mubr.f32.mxu0 %v3730
        %3960 = vmatmul.mubr.f32.gmra.mxu0 %v3729
        %v3961 = vpop.f32.mrf.mxu0
        %v3962 = vadd.f32 0.0, %v3961
        %v3963 = vpop.f32.mrf.mxu0
        %3964 = vmatprep.mubr.f32.mxu0 %v3732
        %3965 = vmatmul.mubr.f32.gmra.mxu0 %v3731
        %v3966 = vpop.f32.mrf.mxu0
        %v3967 = vadd.f32 0.0, %v3966
        %v3968 = vpop.f32.mrf.mxu0
        %3969 = vmatprep.mubr.f32.mxu0 %v3734
        %3970 = vmatmul.mubr.f32.gmra.mxu0 %v3733
        %v3971 = vpop.f32.mrf.mxu0
        %v3972 = vadd.f32 0.0, %v3971
        %v3973 = vpop.f32.mrf.mxu0
        %3974 = vmatprep.mubr.f32.mxu0 %v3736
        %3975 = vmatmul.mubr.f32.gmra.mxu0 %v3735
        %v3976 = vpop.f32.mrf.mxu0
        %v3977 = vadd.f32 0.0, %v3976
        %v3978 = vpop.f32.mrf.mxu0
        %3979 = vmatprep.mubr.f32.mxu0 %v3738
        %3980 = vmatmul.mubr.f32.gmra.mxu0 %v3737
        %v3981 = vpop.f32.mrf.mxu0
        %v3982 = vadd.f32 0.0, %v3981
        %v3983 = vpop.f32.mrf.mxu0
        %3984 = vmatprep.mubr.f32.mxu0 %v3740
        %3985 = vmatmul.mubr.f32.gmra.mxu0 %v3739
        %v3986 = vpop.f32.mrf.mxu0
        %v3987 = vadd.f32 0.0, %v3986
        %v3988 = vpop.f32.mrf.mxu0
        %3989 = vmatprep.mubr.f32.mxu0 %v3742
        %3990 = vmatmul.mubr.f32.gmra.mxu0 %v3741
        %v3991 = vpop.f32.mrf.mxu0
        %v3992 = vadd.f32 0.0, %v3991
        %v3993 = vpop.f32.mrf.mxu0
        %3994 = vmatprep.mubr.f32.mxu0 %v3744
        %3995 = vmatmul.mubr.f32.gmra.mxu0 %v3743
        %v3996 = vpop.f32.mrf.mxu0
        %v3997 = vadd.f32 0.0, %v3996
        %v3998 = vpop.f32.mrf.mxu0
        %3999 = vmatprep.mubr.f32.mxu0 %v3746
        %4000 = vmatmul.mubr.f32.gmra.mxu0 %v3745
        %v4001 = vpop.f32.mrf.mxu0
        %v4002 = vadd.f32 0.0, %v4001
        %v4003 = vpop.f32.mrf.mxu0
        %4004 = vmatprep.mubr.f32.mxu0 %v3748
        %4005 = vmatmul.mubr.f32.gmra.mxu0 %v3747
        %v4006 = vpop.f32.mrf.mxu0
        %v4007 = vadd.f32 0.0, %v4006
        %v4008 = vpop.f32.mrf.mxu0
        %4009 = vmatprep.mubr.f32.mxu0 %v3750
        %4010 = vmatmul.mubr.f32.gmra.mxu0 %v3749
        %v4011 = vpop.f32.mrf.mxu0
        %v4012 = vadd.f32 0.0, %v4011
        %v4013 = vpop.f32.mrf.mxu0
        %4014 = vmatprep.mubr.f32.mxu0 %v3752
        %4015 = vmatmul.mubr.f32.gmra.mxu0 %v3751
        %v4016 = vpop.f32.mrf.mxu0
        %v4017 = vadd.f32 0.0, %v4016
        %v4018 = vpop.f32.mrf.mxu0
        %4019 = vmatprep.mubr.f32.mxu0 %v3754
        %4020 = vmatmul.mubr.f32.gmra.mxu0 %v3753
        %v4021 = vpop.f32.mrf.mxu0
        %v4022 = vadd.f32 0.0, %v4021
        %v4023 = vpop.f32.mrf.mxu0
        %4024 = vmatprep.mubr.f32.mxu0 %v3756
        %4025 = vmatmul.mubr.f32.gmra.mxu0 %v3755
        %v4026 = vpop.f32.mrf.mxu0
        %v4027 = vadd.f32 0.0, %v4026
        %v4028 = vpop.f32.mrf.mxu0
        %4029 = vmatprep.mubr.f32.mxu0 %v3758
        %4030 = vmatmul.mubr.f32.gmra.mxu0 %v3757
        %v4031 = vpop.f32.mrf.mxu0
        %v4032 = vadd.f32 0.0, %v4031
        %v4033 = vpop.f32.mrf.mxu0
        %4034 = vmatprep.mubr.f32.mxu0 %v3760
        %4035 = vmatmul.mubr.f32.gmra.mxu0 %v3759
        %v4036 = vpop.f32.mrf.mxu0
        %v4037 = vadd.f32 0.0, %v4036
        %v4038 = vpop.f32.mrf.mxu0
        %4039 = vmatprep.mubr.f32.mxu0 %v3762
        %4040 = vmatmul.mubr.f32.gmra.mxu0 %v3761
        %v4041 = vpop.f32.mrf.mxu0
        %v4042 = vadd.f32 0.0, %v4041
        %v4043 = vpop.f32.mrf.mxu0
        %4044 = vmatprep.mubr.f32.mxu0 %v3764
        %4045 = vmatmul.mubr.f32.gmra.mxu0 %v3763
        %v4046 = vpop.f32.mrf.mxu0
        %v4047 = vadd.f32 0.0, %v4046
        %v4048 = vpop.f32.mrf.mxu0
        %4049 = vmatprep.mubr.f32.mxu0 %v3766
        %4050 = vmatmul.mubr.f32.gmra.mxu0 %v3765
        %v4051 = vpop.f32.mrf.mxu0
        %v4052 = vadd.f32 0.0, %v4051
        %v4053 = vpop.f32.mrf.mxu0
        %4054 = vmatprep.mubr.f32.mxu0 %v3768
        %4055 = vmatmul.mubr.f32.gmra.mxu0 %v3767
        %v4056 = vpop.f32.mrf.mxu0
        %v4057 = vadd.f32 0.0, %v4056
        %v4058 = vpop.f32.mrf.mxu0
        %4059 = vmatprep.mubr.f32.mxu0 %v3770
        %4060 = vmatmul.mubr.f32.gmra.mxu0 %v3769
        %v4061 = vpop.f32.mrf.mxu0
        %v4062 = vadd.f32 0.0, %v4061
        %v4063 = vpop.f32.mrf.mxu0
        %4064 = vmatprep.mubr.f32.mxu0 %v3772
        %4065 = vmatmul.mubr.f32.gmra.mxu0 %v3771
        %v4066 = vpop.f32.mrf.mxu0
        %v4067 = vadd.f32 0.0, %v4066
        %v4068 = vpop.f32.mrf.mxu0
        %4069 = vmatprep.mubr.f32.mxu0 %v3774
        %4070 = vmatmul.mubr.f32.gmra.mxu0 %v3773
        %v4071 = vpop.f32.mrf.mxu0
        %v4072 = vadd.f32 0.0, %v4071
        %v4073 = vpop.f32.mrf.mxu0
        %4074 = vmatprep.mubr.f32.mxu0 %v3776
        %4075 = vmatmul.mubr.f32.gmra.mxu0 %v3775
        %v4076 = vpop.f32.mrf.mxu0
        %v4077 = vadd.f32 0.0, %v4076
        %v4078 = vpop.f32.mrf.mxu0
        %4079 = vmatprep.mubr.f32.mxu0 %v3778
        %4080 = vmatmul.mubr.f32.gmra.mxu0 %v3777
        %v4081 = vpop.f32.mrf.mxu0
        %v4082 = vadd.f32 0.0, %v4081
        %v4083 = vpop.f32.mrf.mxu0
        %4084 = vmatprep.mubr.f32.mxu0 %v3780
        %4085 = vmatmul.mubr.f32.gmra.mxu0 %v3779
        %v4086 = vpop.f32.mrf.mxu0
        %v4087 = vadd.f32 0.0, %v4086
        %v4088 = vpop.f32.mrf.mxu0
        %4089 = vmatprep.mubr.f32.mxu0 %v3782
        %4090 = vmatmul.mubr.f32.gmra.mxu0 %v3781
        %v4091 = vpop.f32.mrf.mxu0
        %v4092 = vadd.f32 0.0, %v4091
        %v4093 = vpop.f32.mrf.mxu0
        %4094 = vmatprep.mubr.f32.mxu0 %v3784
        %4095 = vmatmul.mubr.f32.gmra.mxu0 %v3783
        %v4096 = vpop.f32.mrf.mxu0
        %v4097 = vadd.f32 0.0, %v4096
        %v4098 = vpop.f32.mrf.mxu0
        %4099 = vmatprep.mubr.f32.mxu0 %v3786
        %4100 = vmatmul.mubr.f32.gmra.mxu0 %v3785
        %v4101 = vpop.f32.mrf.mxu0
        %v4102 = vadd.f32 0.0, %v4101
        %v4103 = vpop.f32.mrf.mxu0
        %4104 = vmatprep.mubr.f32.mxu0 %v3788
        %4105 = vmatmul.mubr.f32.gmra.mxu0 %v3787
        %v4106 = vpop.f32.mrf.mxu0
        %v4107 = vadd.f32 0.0, %v4106
        %v4108 = vpop.f32.mrf.mxu0
        %4109 = vdwg.mxu0
        %4110 = vrot.lane.b32.xlu0 %v2601, 112
        %v4111 = vpop.permute.xlu0 %4110
        %4112 = vrot.lane.b32.xlu0 %v2606, 112
        %v4113 = vpop.permute.xlu0 %4112
        %4114 = vrot.lane.b32.xlu0 %v2611, 112
        %v4115 = vpop.permute.xlu0 %4114
        %4116 = vrot.lane.b32.xlu0 %v2616, 112
        %v4117 = vpop.permute.xlu0 %4116
        %4118 = vrot.lane.b32.xlu0 %v2621, 112
        %v4119 = vpop.permute.xlu0 %4118
        %4120 = vrot.lane.b32.xlu0 %v2626, 112
        %v4121 = vpop.permute.xlu0 %4120
        %4122 = vrot.lane.b32.xlu0 %v2631, 112
        %v4123 = vpop.permute.xlu0 %4122
        %4124 = vrot.lane.b32.xlu0 %v2636, 112
        %v4125 = vpop.permute.xlu0 %4124
        %4126 = vrot.lane.b32.xlu0 %v2641, 112
        %v4127 = vpop.permute.xlu0 %4126
        %4128 = vrot.lane.b32.xlu0 %v2646, 112
        %v4129 = vpop.permute.xlu0 %4128
        %4130 = vrot.lane.b32.xlu0 %v2651, 112
        %v4131 = vpop.permute.xlu0 %4130
        %4132 = vrot.lane.b32.xlu0 %v2656, 112
        %v4133 = vpop.permute.xlu0 %4132
        %4134 = vrot.lane.b32.xlu0 %v2661, 112
        %v4135 = vpop.permute.xlu0 %4134
        %4136 = vrot.lane.b32.xlu0 %v2666, 112
        %v4137 = vpop.permute.xlu0 %4136
        %4138 = vrot.lane.b32.xlu0 %v2671, 112
        %v4139 = vpop.permute.xlu0 %4138
        %4140 = vrot.lane.b32.xlu0 %v2676, 112
        %v4141 = vpop.permute.xlu0 %4140
        %4142 = vrot.lane.b32.xlu0 %v2681, 112
        %v4143 = vpop.permute.xlu0 %4142
        %4144 = vrot.lane.b32.xlu0 %v2686, 112
        %v4145 = vpop.permute.xlu0 %4144
        %4146 = vrot.lane.b32.xlu0 %v2691, 112
        %v4147 = vpop.permute.xlu0 %4146
        %4148 = vrot.lane.b32.xlu0 %v2696, 112
        %v4149 = vpop.permute.xlu0 %4148
        %4150 = vrot.lane.b32.xlu0 %v2701, 112
        %v4151 = vpop.permute.xlu0 %4150
        %4152 = vrot.lane.b32.xlu0 %v2706, 112
        %v4153 = vpop.permute.xlu0 %4152
        %4154 = vrot.lane.b32.xlu0 %v2711, 112
        %v4155 = vpop.permute.xlu0 %4154
        %4156 = vrot.lane.b32.xlu0 %v2716, 112
        %v4157 = vpop.permute.xlu0 %4156
        %4158 = vrot.lane.b32.xlu0 %v2721, 112
        %v4159 = vpop.permute.xlu0 %4158
        %4160 = vrot.lane.b32.xlu0 %v2726, 112
        %v4161 = vpop.permute.xlu0 %4160
        %4162 = vrot.lane.b32.xlu0 %v2731, 112
        %v4163 = vpop.permute.xlu0 %4162
        %4164 = vrot.lane.b32.xlu0 %v2736, 112
        %v4165 = vpop.permute.xlu0 %4164
        %4166 = vrot.lane.b32.xlu0 %v2741, 112
        %v4167 = vpop.permute.xlu0 %4166
        %4168 = vrot.lane.b32.xlu0 %v2746, 112
        %v4169 = vpop.permute.xlu0 %4168
        %4170 = vrot.lane.b32.xlu0 %v2751, 112
        %v4171 = vpop.permute.xlu0 %4170
        %4172 = vrot.lane.b32.xlu0 %v2756, 112
        %v4173 = vpop.permute.xlu0 %4172
        %4174 = vrot.lane.b32.xlu0 %v2601, 80
        %v4175 = vpop.permute.xlu0 %4174
        %4176 = vrot.lane.b32.xlu0 %v2606, 80
        %v4177 = vpop.permute.xlu0 %4176
        %4178 = vrot.lane.b32.xlu0 %v2611, 80
        %v4179 = vpop.permute.xlu0 %4178
        %4180 = vrot.lane.b32.xlu0 %v2616, 80
        %v4181 = vpop.permute.xlu0 %4180
        %4182 = vrot.lane.b32.xlu0 %v2621, 80
        %v4183 = vpop.permute.xlu0 %4182
        %4184 = vrot.lane.b32.xlu0 %v2626, 80
        %v4185 = vpop.permute.xlu0 %4184
        %4186 = vrot.lane.b32.xlu0 %v2631, 80
        %v4187 = vpop.permute.xlu0 %4186
        %4188 = vrot.lane.b32.xlu0 %v2636, 80
        %v4189 = vpop.permute.xlu0 %4188
        %4190 = vrot.lane.b32.xlu0 %v2641, 80
        %v4191 = vpop.permute.xlu0 %4190
        %4192 = vrot.lane.b32.xlu0 %v2646, 80
        %v4193 = vpop.permute.xlu0 %4192
        %4194 = vrot.lane.b32.xlu0 %v2651, 80
        %v4195 = vpop.permute.xlu0 %4194
        %4196 = vrot.lane.b32.xlu0 %v2656, 80
        %v4197 = vpop.permute.xlu0 %4196
        %4198 = vrot.lane.b32.xlu0 %v2661, 80
        %v4199 = vpop.permute.xlu0 %4198
        %4200 = vrot.lane.b32.xlu0 %v2666, 80
        %v4201 = vpop.permute.xlu0 %4200
        %4202 = vrot.lane.b32.xlu0 %v2671, 80
        %v4203 = vpop.permute.xlu0 %4202
        %4204 = vrot.lane.b32.xlu0 %v2676, 80
        %v4205 = vpop.permute.xlu0 %4204
        %4206 = vrot.lane.b32.xlu0 %v2681, 80
        %v4207 = vpop.permute.xlu0 %4206
        %4208 = vrot.lane.b32.xlu0 %v2686, 80
        %v4209 = vpop.permute.xlu0 %4208
        %4210 = vrot.lane.b32.xlu0 %v2691, 80
        %v4211 = vpop.permute.xlu0 %4210
        %4212 = vrot.lane.b32.xlu0 %v2696, 80
        %v4213 = vpop.permute.xlu0 %4212
        %4214 = vrot.lane.b32.xlu0 %v2701, 80
        %v4215 = vpop.permute.xlu0 %4214
        %4216 = vrot.lane.b32.xlu0 %v2706, 80
        %v4217 = vpop.permute.xlu0 %4216
        %4218 = vrot.lane.b32.xlu0 %v2711, 80
        %v4219 = vpop.permute.xlu0 %4218
        %4220 = vrot.lane.b32.xlu0 %v2716, 80
        %v4221 = vpop.permute.xlu0 %4220
        %4222 = vrot.lane.b32.xlu0 %v2721, 80
        %v4223 = vpop.permute.xlu0 %4222
        %4224 = vrot.lane.b32.xlu0 %v2726, 80
        %v4225 = vpop.permute.xlu0 %4224
        %4226 = vrot.lane.b32.xlu0 %v2731, 80
        %v4227 = vpop.permute.xlu0 %4226
        %4228 = vrot.lane.b32.xlu0 %v2736, 80
        %v4229 = vpop.permute.xlu0 %4228
        %4230 = vrot.lane.b32.xlu0 %v2741, 80
        %v4231 = vpop.permute.xlu0 %4230
        %4232 = vrot.lane.b32.xlu0 %v2746, 80
        %v4233 = vpop.permute.xlu0 %4232
        %4234 = vrot.lane.b32.xlu0 %v2751, 80
        %v4235 = vpop.permute.xlu0 %4234
        %4236 = vrot.lane.b32.xlu0 %v2756, 80
        %v4237 = vpop.permute.xlu0 %4236
        %v4238 = vsel %vm2923, %v4111, 0
        %v4240 = vsel %vm2923, %v4113, 0
        %v4242 = vsel %vm2923, %v4115, 0
        %v4244 = vsel %vm2923, %v4117, 0
        %v4246 = vsel %vm2923, %v4119, 0
        %v4248 = vsel %vm2923, %v4121, 0
        %v4250 = vsel %vm2923, %v4123, 0
        %v4252 = vsel %vm2923, %v4125, 0
        %v4254 = vsel %vm2923, %v4127, 0
        %v4256 = vsel %vm2923, %v4129, 0
        %v4258 = vsel %vm2923, %v4131, 0
        %v4260 = vsel %vm2923, %v4133, 0
        %v4262 = vsel %vm2923, %v4135, 0
        %v4264 = vsel %vm2923, %v4137, 0
        %v4266 = vsel %vm2923, %v4139, 0
        %v4268 = vsel %vm2923, %v4141, 0
        %v4270 = vsel %vm2923, %v4143, 0
        %v4272 = vsel %vm2923, %v4145, 0
        %v4274 = vsel %vm2923, %v4147, 0
        %v4276 = vsel %vm2923, %v4149, 0
        %v4278 = vsel %vm2923, %v4151, 0
        %v4280 = vsel %vm2923, %v4153, 0
        %v4282 = vsel %vm2923, %v4155, 0
        %v4284 = vsel %vm2923, %v4157, 0
        %v4286 = vsel %vm2923, %v4159, 0
        %v4288 = vsel %vm2923, %v4161, 0
        %v4290 = vsel %vm2923, %v4163, 0
        %v4292 = vsel %vm2923, %v4165, 0
        %v4294 = vsel %vm2923, %v4167, 0
        %v4296 = vsel %vm2923, %v4169, 0
        %v4298 = vsel %vm2923, %v4171, 0
        %v4300 = vsel %vm2923, %v4173, 0
        %v4302 = vsel %vm2923, %v4175, 0
        %v4304 = vsel %vm2923, %v4177, 0
        %v4306 = vsel %vm2923, %v4179, 0
        %v4308 = vsel %vm2923, %v4181, 0
        %v4310 = vsel %vm2923, %v4183, 0
        %v4312 = vsel %vm2923, %v4185, 0
        %v4314 = vsel %vm2923, %v4187, 0
        %v4316 = vsel %vm2923, %v4189, 0
        %v4318 = vsel %vm2923, %v4191, 0
        %v4320 = vsel %vm2923, %v4193, 0
        %v4322 = vsel %vm2923, %v4195, 0
        %v4324 = vsel %vm2923, %v4197, 0
        %v4326 = vsel %vm2923, %v4199, 0
        %v4328 = vsel %vm2923, %v4201, 0
        %v4330 = vsel %vm2923, %v4203, 0
        %v4332 = vsel %vm2923, %v4205, 0
        %v4334 = vsel %vm2923, %v4207, 0
        %v4336 = vsel %vm2923, %v4209, 0
        %v4338 = vsel %vm2923, %v4211, 0
        %v4340 = vsel %vm2923, %v4213, 0
        %v4342 = vsel %vm2923, %v4215, 0
        %v4344 = vsel %vm2923, %v4217, 0
        %v4346 = vsel %vm2923, %v4219, 0
        %v4348 = vsel %vm2923, %v4221, 0
        %v4350 = vsel %vm2923, %v4223, 0
        %v4352 = vsel %vm2923, %v4225, 0
        %v4354 = vsel %vm2923, %v4227, 0
        %v4356 = vsel %vm2923, %v4229, 0
        %v4358 = vsel %vm2923, %v4231, 0
        %v4360 = vsel %vm2923, %v4233, 0
        %v4362 = vsel %vm2923, %v4235, 0
        %v4364 = vsel %vm2923, %v4237, 0
        %4366 = vmatprep.subr.mxu0 0.0
        %4367 = vmatpush1.xpose.msra.mxu0 %v4332
        %4368 = vmatprep.subr.mxu0 0.0
        %4369 = vmatpush1.xpose.msra.mxu0 %v4330
        %4370 = vmatprep.subr.mxu0 0.0
        %4371 = vmatpush1.xpose.msra.mxu0 %v4328
        %4372 = vmatprep.subr.mxu0 0.0
        %4373 = vmatpush1.xpose.msra.mxu0 %v4326
        %4374 = vmatprep.subr.mxu0 0.0
        %4375 = vmatpush1.xpose.msra.mxu0 %v4324
        %4376 = vmatprep.subr.mxu0 0.0
        %4377 = vmatpush1.xpose.msra.mxu0 %v4322
        %4378 = vmatprep.subr.mxu0 0.0
        %4379 = vmatpush1.xpose.msra.mxu0 %v4320
        %4380 = vmatprep.subr.mxu0 0.0
        %4381 = vmatpush1.xpose.msra.mxu0 %v4318
        %4382 = vmatprep.subr.mxu0 0.0
        %4383 = vmatpush1.xpose.msra.mxu0 %v4316
        %4384 = vmatprep.subr.mxu0 0.0
        %4385 = vmatpush1.xpose.msra.mxu0 %v4314
        %4386 = vmatprep.subr.mxu0 0.0
        %4387 = vmatpush1.xpose.msra.mxu0 %v4312
        %4388 = vmatprep.subr.mxu0 0.0
        %4389 = vmatpush1.xpose.msra.mxu0 %v4310
        %4390 = vmatprep.subr.mxu0 0.0
        %4391 = vmatpush1.xpose.msra.mxu0 %v4308
        %4392 = vmatprep.subr.mxu0 0.0
        %4393 = vmatpush1.xpose.msra.mxu0 %v4306
        %4394 = vmatprep.subr.mxu0 0.0
        %4395 = vmatpush1.xpose.msra.mxu0 %v4304
        %4396 = vmatprep.subr.mxu0 0.0
        %4397 = vmatpush1.xpose.msra.mxu0 %v4302
        %4398 = vmatprep.subr.mxu0 0.0
        %4399 = vmatpush2.xpose.msra.mxu0 %v4364
        %4400 = vmatprep.subr.mxu0 0.0
        %4401 = vmatpush2.xpose.msra.mxu0 %v4362
        %4402 = vmatprep.subr.mxu0 0.0
        %4403 = vmatpush2.xpose.msra.mxu0 %v4360
        %4404 = vmatprep.subr.mxu0 0.0
        %4405 = vmatpush2.xpose.msra.mxu0 %v4358
        %4406 = vmatprep.subr.mxu0 0.0
        %4407 = vmatpush2.xpose.msra.mxu0 %v4356
        %4408 = vmatprep.subr.mxu0 0.0
        %4409 = vmatpush2.xpose.msra.mxu0 %v4354
        %4410 = vmatprep.subr.mxu0 0.0
        %4411 = vmatpush2.xpose.msra.mxu0 %v4352
        %4412 = vmatprep.subr.mxu0 0.0
        %4413 = vmatpush2.xpose.msra.mxu0 %v4350
        %4414 = vmatprep.subr.mxu0 0.0
        %4415 = vmatpush2.xpose.msra.mxu0 %v4348
        %4416 = vmatprep.subr.mxu0 0.0
        %4417 = vmatpush2.xpose.msra.mxu0 %v4346
        %4418 = vmatprep.subr.mxu0 0.0
        %4419 = vmatpush2.xpose.msra.mxu0 %v4344
        %4420 = vmatprep.subr.mxu0 0.0
        %4421 = vmatpush2.xpose.msra.mxu0 %v4342
        %4422 = vmatprep.subr.mxu0 0.0
        %4423 = vmatpush2.xpose.msra.mxu0 %v4340
        %4424 = vmatprep.subr.mxu0 0.0
        %4425 = vmatpush2.xpose.msra.mxu0 %v4338
        %4426 = vmatprep.subr.mxu0 0.0
        %4427 = vmatpush2.xpose.msra.mxu0 %v4336
        %4428 = vmatprep.subr.mxu0 0.0
        %4429 = vmatpush2.xpose.msra.mxu0 %v4334
        %4430 = vmatprep.mubr.f32.mxu0 0.0
        %4431 = vmatmul.mubr.f32.gmra.mxu0 %v4238
        %v4432 = vpop.f32.mrf.mxu0
        %v4433 = vadd.f32 %v2759, %v4432
        %v4434 = vpop.f32.mrf.mxu0
        %v4435 = vadd.f32 %v2760, %v4434
        %4436 = vmatprep.mubr.f32.mxu0 0.0
        %4437 = vmatmul.mubr.f32.gmra.mxu0 %v4240
        %v4438 = vpop.f32.mrf.mxu0
        %v4439 = vadd.f32 %v2761, %v4438
        %v4440 = vpop.f32.mrf.mxu0
        %v4441 = vadd.f32 %v2762, %v4440
        %4442 = vmatprep.mubr.f32.mxu0 0.0
        %4443 = vmatmul.mubr.f32.gmra.mxu0 %v4242
        %v4444 = vpop.f32.mrf.mxu0
        %v4445 = vadd.f32 %v2763, %v4444
        %v4446 = vpop.f32.mrf.mxu0
        %v4447 = vadd.f32 %v2764, %v4446
        %4448 = vmatprep.mubr.f32.mxu0 0.0
        %4449 = vmatmul.mubr.f32.gmra.mxu0 %v4244
        %v4450 = vpop.f32.mrf.mxu0
        %v4451 = vadd.f32 %v2765, %v4450
        %v4452 = vpop.f32.mrf.mxu0
        %v4453 = vadd.f32 %v2766, %v4452
        %4454 = vmatprep.mubr.f32.mxu0 0.0
        %4455 = vmatmul.mubr.f32.gmra.mxu0 %v4246
        %v4456 = vpop.f32.mrf.mxu0
        %v4457 = vadd.f32 %v2767, %v4456
        %v4458 = vpop.f32.mrf.mxu0
        %v4459 = vadd.f32 %v2768, %v4458
        %4460 = vmatprep.mubr.f32.mxu0 0.0
        %4461 = vmatmul.mubr.f32.gmra.mxu0 %v4248
        %v4462 = vpop.f32.mrf.mxu0
        %v4463 = vadd.f32 %v2769, %v4462
        %v4464 = vpop.f32.mrf.mxu0
        %v4465 = vadd.f32 %v2770, %v4464
        %4466 = vmatprep.mubr.f32.mxu0 0.0
        %4467 = vmatmul.mubr.f32.gmra.mxu0 %v4250
        %v4468 = vpop.f32.mrf.mxu0
        %v4469 = vadd.f32 %v2771, %v4468
        %v4470 = vpop.f32.mrf.mxu0
        %v4471 = vadd.f32 %v2772, %v4470
        %4472 = vmatprep.mubr.f32.mxu0 0.0
        %4473 = vmatmul.mubr.f32.gmra.mxu0 %v4252
        %v4474 = vpop.f32.mrf.mxu0
        %v4475 = vadd.f32 %v2773, %v4474
        %v4476 = vpop.f32.mrf.mxu0
        %v4477 = vadd.f32 %v2774, %v4476
        %4478 = vmatprep.mubr.f32.mxu0 0.0
        %4479 = vmatmul.mubr.f32.gmra.mxu0 %v4254
        %v4480 = vpop.f32.mrf.mxu0
        %v4481 = vadd.f32 %v2775, %v4480
        %v4482 = vpop.f32.mrf.mxu0
        %v4483 = vadd.f32 %v2776, %v4482
        %4484 = vmatprep.mubr.f32.mxu0 0.0
        %4485 = vmatmul.mubr.f32.gmra.mxu0 %v4256
        %v4486 = vpop.f32.mrf.mxu0
        %v4487 = vadd.f32 %v2777, %v4486
        %v4488 = vpop.f32.mrf.mxu0
        %v4489 = vadd.f32 %v2778, %v4488
        %4490 = vmatprep.mubr.f32.mxu0 0.0
        %4491 = vmatmul.mubr.f32.gmra.mxu0 %v4258
        %v4492 = vpop.f32.mrf.mxu0
        %v4493 = vadd.f32 %v2779, %v4492
        %v4494 = vpop.f32.mrf.mxu0
        %v4495 = vadd.f32 %v2780, %v4494
        %4496 = vmatprep.mubr.f32.mxu0 0.0
        %4497 = vmatmul.mubr.f32.gmra.mxu0 %v4260
        %v4498 = vpop.f32.mrf.mxu0
        %v4499 = vadd.f32 %v2781, %v4498
        %v4500 = vpop.f32.mrf.mxu0
        %v4501 = vadd.f32 %v2782, %v4500
        %4502 = vmatprep.mubr.f32.mxu0 0.0
        %4503 = vmatmul.mubr.f32.gmra.mxu0 %v4262
        %v4504 = vpop.f32.mrf.mxu0
        %v4505 = vadd.f32 %v2783, %v4504
        %v4506 = vpop.f32.mrf.mxu0
        %v4507 = vadd.f32 %v2784, %v4506
        %4508 = vmatprep.mubr.f32.mxu0 0.0
        %4509 = vmatmul.mubr.f32.gmra.mxu0 %v4264
        %v4510 = vpop.f32.mrf.mxu0
        %v4511 = vadd.f32 %v2785, %v4510
        %v4512 = vpop.f32.mrf.mxu0
        %v4513 = vadd.f32 %v2786, %v4512
        %4514 = vmatprep.mubr.f32.mxu0 0.0
        %4515 = vmatmul.mubr.f32.gmra.mxu0 %v4266
        %v4516 = vpop.f32.mrf.mxu0
        %v4517 = vadd.f32 %v2787, %v4516
        %v4518 = vpop.f32.mrf.mxu0
        %v4519 = vadd.f32 %v2788, %v4518
        %4520 = vmatprep.mubr.f32.mxu0 0.0
        %4521 = vmatmul.mubr.f32.gmra.mxu0 %v4268
        %v4522 = vpop.f32.mrf.mxu0
        %v4523 = vadd.f32 %v2789, %v4522
        %v4524 = vpop.f32.mrf.mxu0
        %v4525 = vadd.f32 %v2790, %v4524
        %4526 = vmatprep.mubr.f32.mxu0 0.0
        %4527 = vmatmul.mubr.f32.gmra.mxu0 %v4270
        %v4528 = vpop.f32.mrf.mxu0
        %v4529 = vadd.f32 %v2791, %v4528
        %v4530 = vpop.f32.mrf.mxu0
        %v4531 = vadd.f32 %v2792, %v4530
        %4532 = vmatprep.mubr.f32.mxu0 0.0
        %4533 = vmatmul.mubr.f32.gmra.mxu0 %v4272
        %v4534 = vpop.f32.mrf.mxu0
        %v4535 = vadd.f32 %v2793, %v4534
        %v4536 = vpop.f32.mrf.mxu0
        %v4537 = vadd.f32 %v2794, %v4536
        %4538 = vmatprep.mubr.f32.mxu0 0.0
        %4539 = vmatmul.mubr.f32.gmra.mxu0 %v4274
        %v4540 = vpop.f32.mrf.mxu0
        %v4541 = vadd.f32 %v2795, %v4540
        %v4542 = vpop.f32.mrf.mxu0
        %v4543 = vadd.f32 %v2796, %v4542
        %4544 = vmatprep.mubr.f32.mxu0 0.0
        %4545 = vmatmul.mubr.f32.gmra.mxu0 %v4276
        %v4546 = vpop.f32.mrf.mxu0
        %v4547 = vadd.f32 %v2797, %v4546
        %v4548 = vpop.f32.mrf.mxu0
        %v4549 = vadd.f32 %v2798, %v4548
        %4550 = vmatprep.mubr.f32.mxu0 0.0
        %4551 = vmatmul.mubr.f32.gmra.mxu0 %v4278
        %v4552 = vpop.f32.mrf.mxu0
        %v4553 = vadd.f32 %v2799, %v4552
        %v4554 = vpop.f32.mrf.mxu0
        %v4555 = vadd.f32 %v2800, %v4554
        %4556 = vmatprep.mubr.f32.mxu0 0.0
        %4557 = vmatmul.mubr.f32.gmra.mxu0 %v4280
        %v4558 = vpop.f32.mrf.mxu0
        %v4559 = vadd.f32 %v2801, %v4558
        %v4560 = vpop.f32.mrf.mxu0
        %v4561 = vadd.f32 %v2802, %v4560
        %4562 = vmatprep.mubr.f32.mxu0 0.0
        %4563 = vmatmul.mubr.f32.gmra.mxu0 %v4282
        %v4564 = vpop.f32.mrf.mxu0
        %v4565 = vadd.f32 %v2803, %v4564
        %v4566 = vpop.f32.mrf.mxu0
        %v4567 = vadd.f32 %v2804, %v4566
        %4568 = vmatprep.mubr.f32.mxu0 0.0
        %4569 = vmatmul.mubr.f32.gmra.mxu0 %v4284
        %v4570 = vpop.f32.mrf.mxu0
        %v4571 = vadd.f32 %v2805, %v4570
        %v4572 = vpop.f32.mrf.mxu0
        %v4573 = vadd.f32 %v2806, %v4572
        %4574 = vmatprep.mubr.f32.mxu0 0.0
        %4575 = vmatmul.mubr.f32.gmra.mxu0 %v4286
        %v4576 = vpop.f32.mrf.mxu0
        %v4577 = vadd.f32 %v2807, %v4576
        %v4578 = vpop.f32.mrf.mxu0
        %v4579 = vadd.f32 %v2808, %v4578
        %4580 = vmatprep.mubr.f32.mxu0 0.0
        %4581 = vmatmul.mubr.f32.gmra.mxu0 %v4288
        %v4582 = vpop.f32.mrf.mxu0
        %v4583 = vadd.f32 %v2809, %v4582
        %v4584 = vpop.f32.mrf.mxu0
        %v4585 = vadd.f32 %v2810, %v4584
        %4586 = vmatprep.mubr.f32.mxu0 0.0
        %4587 = vmatmul.mubr.f32.gmra.mxu0 %v4290
        %v4588 = vpop.f32.mrf.mxu0
        %v4589 = vadd.f32 %v2811, %v4588
        %v4590 = vpop.f32.mrf.mxu0
        %v4591 = vadd.f32 %v2812, %v4590
        %4592 = vmatprep.mubr.f32.mxu0 0.0
        %4593 = vmatmul.mubr.f32.gmra.mxu0 %v4292
        %v4594 = vpop.f32.mrf.mxu0
        %v4595 = vadd.f32 %v2813, %v4594
        %v4596 = vpop.f32.mrf.mxu0
        %v4597 = vadd.f32 %v2814, %v4596
        %4598 = vmatprep.mubr.f32.mxu0 0.0
        %4599 = vmatmul.mubr.f32.gmra.mxu0 %v4294
        %v4600 = vpop.f32.mrf.mxu0
        %v4601 = vadd.f32 %v2815, %v4600
        %v4602 = vpop.f32.mrf.mxu0
        %v4603 = vadd.f32 %v2816, %v4602
        %4604 = vmatprep.mubr.f32.mxu0 0.0
        %4605 = vmatmul.mubr.f32.gmra.mxu0 %v4296
        %v4606 = vpop.f32.mrf.mxu0
        %v4607 = vadd.f32 %v2817, %v4606
        %v4608 = vpop.f32.mrf.mxu0
        %v4609 = vadd.f32 %v2818, %v4608
        %4610 = vmatprep.mubr.f32.mxu0 0.0
        %4611 = vmatmul.mubr.f32.gmra.mxu0 %v4298
        %v4612 = vpop.f32.mrf.mxu0
        %v4613 = vadd.f32 %v2819, %v4612
        %v4614 = vpop.f32.mrf.mxu0
        %v4615 = vadd.f32 %v2820, %v4614
        %4616 = vmatprep.mubr.f32.mxu0 0.0
        %4617 = vmatmul.mubr.f32.gmra.mxu0 %v4300
        %v4618 = vpop.f32.mrf.mxu0
        %v4619 = vadd.f32 %v2821, %v4618
        %v4620 = vpop.f32.mrf.mxu0
        %v4621 = vadd.f32 %v2822, %v4620
        %4622 = vdwg.mxu0
        %v4623 = vmax.f32 %v4433, %v4435
        %4624 = vmax.xlane.f32.xlu0 %v4623
        %v4625 = vpop.xlane.xlu0 %4624
        %v4626 = vmax.f32 %v4439, %v4441
        %4627 = vmax.xlane.f32.xlu0 %v4626
        %v4628 = vpop.xlane.xlu0 %4627
        %v4629 = vmax.f32 %v4445, %v4447
        %4630 = vmax.xlane.f32.xlu0 %v4629
        %v4631 = vpop.xlane.xlu0 %4630
        %v4632 = vmax.f32 %v4451, %v4453
        %4633 = vmax.xlane.f32.xlu0 %v4632
        %v4634 = vpop.xlane.xlu0 %4633
        %v4635 = vmax.f32 %v4457, %v4459
        %4636 = vmax.xlane.f32.xlu0 %v4635
        %v4637 = vpop.xlane.xlu0 %4636
        %v4638 = vmax.f32 %v4463, %v4465
        %4639 = vmax.xlane.f32.xlu0 %v4638
        %v4640 = vpop.xlane.xlu0 %4639
        %v4641 = vmax.f32 %v4469, %v4471
        %4642 = vmax.xlane.f32.xlu0 %v4641
        %v4643 = vpop.xlane.xlu0 %4642
        %v4644 = vmax.f32 %v4475, %v4477
        %4645 = vmax.xlane.f32.xlu0 %v4644
        %v4646 = vpop.xlane.xlu0 %4645
        %v4647 = vmax.f32 %v4481, %v4483
        %4648 = vmax.xlane.f32.xlu0 %v4647
        %v4649 = vpop.xlane.xlu0 %4648
        %v4650 = vmax.f32 %v4487, %v4489
        %4651 = vmax.xlane.f32.xlu0 %v4650
        %v4652 = vpop.xlane.xlu0 %4651
        %v4653 = vmax.f32 %v4493, %v4495
        %4654 = vmax.xlane.f32.xlu0 %v4653
        %v4655 = vpop.xlane.xlu0 %4654
        %v4656 = vmax.f32 %v4499, %v4501
        %4657 = vmax.xlane.f32.xlu0 %v4656
        %v4658 = vpop.xlane.xlu0 %4657
        %v4659 = vmax.f32 %v4505, %v4507
        %4660 = vmax.xlane.f32.xlu0 %v4659
        %v4661 = vpop.xlane.xlu0 %4660
        %v4662 = vmax.f32 %v4511, %v4513
        %4663 = vmax.xlane.f32.xlu0 %v4662
        %v4664 = vpop.xlane.xlu0 %4663
        %v4665 = vmax.f32 %v4517, %v4519
        %4666 = vmax.xlane.f32.xlu0 %v4665
        %v4667 = vpop.xlane.xlu0 %4666
        %v4668 = vmax.f32 %v4523, %v4525
        %4669 = vmax.xlane.f32.xlu0 %v4668
        %v4670 = vpop.xlane.xlu0 %4669
        %v4671 = vmax.f32 %v4529, %v4531
        %4672 = vmax.xlane.f32.xlu0 %v4671
        %v4673 = vpop.xlane.xlu0 %4672
        %v4674 = vmax.f32 %v4535, %v4537
        %4675 = vmax.xlane.f32.xlu0 %v4674
        %v4676 = vpop.xlane.xlu0 %4675
        %v4677 = vmax.f32 %v4541, %v4543
        %4678 = vmax.xlane.f32.xlu0 %v4677
        %v4679 = vpop.xlane.xlu0 %4678
        %v4680 = vmax.f32 %v4547, %v4549
        %4681 = vmax.xlane.f32.xlu0 %v4680
        %v4682 = vpop.xlane.xlu0 %4681
        %v4683 = vmax.f32 %v4553, %v4555
        %4684 = vmax.xlane.f32.xlu0 %v4683
        %v4685 = vpop.xlane.xlu0 %4684
        %v4686 = vmax.f32 %v4559, %v4561
        %4687 = vmax.xlane.f32.xlu0 %v4686
        %v4688 = vpop.xlane.xlu0 %4687
        %v4689 = vmax.f32 %v4565, %v4567
        %4690 = vmax.xlane.f32.xlu0 %v4689
        %v4691 = vpop.xlane.xlu0 %4690
        %v4692 = vmax.f32 %v4571, %v4573
        %4693 = vmax.xlane.f32.xlu0 %v4692
        %v4694 = vpop.xlane.xlu0 %4693
        %v4695 = vmax.f32 %v4577, %v4579
        %4696 = vmax.xlane.f32.xlu0 %v4695
        %v4697 = vpop.xlane.xlu0 %4696
        %v4698 = vmax.f32 %v4583, %v4585
        %4699 = vmax.xlane.f32.xlu0 %v4698
        %v4700 = vpop.xlane.xlu0 %4699
        %v4701 = vmax.f32 %v4589, %v4591
        %4702 = vmax.xlane.f32.xlu0 %v4701
        %v4703 = vpop.xlane.xlu0 %4702
        %v4704 = vmax.f32 %v4595, %v4597
        %4705 = vmax.xlane.f32.xlu0 %v4704
        %v4706 = vpop.xlane.xlu0 %4705
        %v4707 = vmax.f32 %v4601, %v4603
        %4708 = vmax.xlane.f32.xlu0 %v4707
        %v4709 = vpop.xlane.xlu0 %4708
        %v4710 = vmax.f32 %v4607, %v4609
        %4711 = vmax.xlane.f32.xlu0 %v4710
        %v4712 = vpop.xlane.xlu0 %4711
        %v4713 = vmax.f32 %v4613, %v4615
        %4714 = vmax.xlane.f32.xlu0 %v4713
        %v4715 = vpop.xlane.xlu0 %4714
        %v4716 = vmax.f32 %v4619, %v4621
        %4717 = vmax.xlane.f32.xlu0 %v4716
        %v4718 = vpop.xlane.xlu0 %4717
        %v4719 = vsub.f32 %v4433, %v4625
        %v4720 = vsub.f32 %v4435, %v4625
        %v4721 = vsub.f32 %v4439, %v4628
        %v4722 = vsub.f32 %v4441, %v4628
        %v4723 = vsub.f32 %v4445, %v4631
        %v4724 = vsub.f32 %v4447, %v4631
        %v4725 = vsub.f32 %v4451, %v4634
        %v4726 = vsub.f32 %v4453, %v4634
        %v4727 = vsub.f32 %v4457, %v4637
        %v4728 = vsub.f32 %v4459, %v4637
        %v4729 = vsub.f32 %v4463, %v4640
        %v4730 = vsub.f32 %v4465, %v4640
        %v4731 = vsub.f32 %v4469, %v4643
        %v4732 = vsub.f32 %v4471, %v4643
        %v4733 = vsub.f32 %v4475, %v4646
        %v4734 = vsub.f32 %v4477, %v4646
        %v4735 = vsub.f32 %v4481, %v4649
        %v4736 = vsub.f32 %v4483, %v4649
        %v4737 = vsub.f32 %v4487, %v4652
        %v4738 = vsub.f32 %v4489, %v4652
        %v4739 = vsub.f32 %v4493, %v4655
        %v4740 = vsub.f32 %v4495, %v4655
        %v4741 = vsub.f32 %v4499, %v4658
        %v4742 = vsub.f32 %v4501, %v4658
        %v4743 = vsub.f32 %v4505, %v4661
        %v4744 = vsub.f32 %v4507, %v4661
        %v4745 = vsub.f32 %v4511, %v4664
        %v4746 = vsub.f32 %v4513, %v4664
        %v4747 = vsub.f32 %v4517, %v4667
        %v4748 = vsub.f32 %v4519, %v4667
        %v4749 = vsub.f32 %v4523, %v4670
        %v4750 = vsub.f32 %v4525, %v4670
        %v4751 = vsub.f32 %v4529, %v4673
        %v4752 = vsub.f32 %v4531, %v4673
        %v4753 = vsub.f32 %v4535, %v4676
        %v4754 = vsub.f32 %v4537, %v4676
        %v4755 = vsub.f32 %v4541, %v4679
        %v4756 = vsub.f32 %v4543, %v4679
        %v4757 = vsub.f32 %v4547, %v4682
        %v4758 = vsub.f32 %v4549, %v4682
        %v4759 = vsub.f32 %v4553, %v4685
        %v4760 = vsub.f32 %v4555, %v4685
        %v4761 = vsub.f32 %v4559, %v4688
        %v4762 = vsub.f32 %v4561, %v4688
        %v4763 = vsub.f32 %v4565, %v4691
        %v4764 = vsub.f32 %v4567, %v4691
        %v4765 = vsub.f32 %v4571, %v4694
        %v4766 = vsub.f32 %v4573, %v4694
        %v4767 = vsub.f32 %v4577, %v4697
        %v4768 = vsub.f32 %v4579, %v4697
        %v4769 = vsub.f32 %v4583, %v4700
        %v4770 = vsub.f32 %v4585, %v4700
        %v4771 = vsub.f32 %v4589, %v4703
        %v4772 = vsub.f32 %v4591, %v4703
        %v4773 = vsub.f32 %v4595, %v4706
        %v4774 = vsub.f32 %v4597, %v4706
        %v4775 = vsub.f32 %v4601, %v4709
        %v4776 = vsub.f32 %v4603, %v4709
        %v4777 = vsub.f32 %v4607, %v4712
        %v4778 = vsub.f32 %v4609, %v4712
        %v4779 = vsub.f32 %v4613, %v4715
        %v4780 = vsub.f32 %v4615, %v4715
        %v4781 = vsub.f32 %v4619, %v4718
        %v4782 = vsub.f32 %v4621, %v4718
        %v4783 = vmul.f32 %v4719, 1.442695
        %v4784 = vpow.pop %v4783
        %v4785 = vmul.f32 %v4720, 1.442695
        %v4786 = vpow.pop %v4785
        %v4787 = vmul.f32 %v4721, 1.442695
        %v4788 = vpow.pop %v4787
        %v4789 = vmul.f32 %v4722, 1.442695
        %v4790 = vpow.pop %v4789
        %v4791 = vmul.f32 %v4723, 1.442695
        %v4792 = vpow.pop %v4791
        %v4793 = vmul.f32 %v4724, 1.442695
        %v4794 = vpow.pop %v4793
        %v4795 = vmul.f32 %v4725, 1.442695
        %v4796 = vpow.pop %v4795
        %v4797 = vmul.f32 %v4726, 1.442695
        %v4798 = vpow.pop %v4797
        %v4799 = vmul.f32 %v4727, 1.442695
        %v4800 = vpow.pop %v4799
        %v4801 = vmul.f32 %v4728, 1.442695
        %v4802 = vpow.pop %v4801
        %v4803 = vmul.f32 %v4729, 1.442695
        %v4804 = vpow.pop %v4803
        %v4805 = vmul.f32 %v4730, 1.442695
        %v4806 = vpow.pop %v4805
        %v4807 = vmul.f32 %v4731, 1.442695
        %v4808 = vpow.pop %v4807
        %v4809 = vmul.f32 %v4732, 1.442695
        %v4810 = vpow.pop %v4809
        %v4811 = vmul.f32 %v4733, 1.442695
        %v4812 = vpow.pop %v4811
        %v4813 = vmul.f32 %v4734, 1.442695
        %v4814 = vpow.pop %v4813
        %v4815 = vmul.f32 %v4735, 1.442695
        %v4816 = vpow.pop %v4815
        %v4817 = vmul.f32 %v4736, 1.442695
        %v4818 = vpow.pop %v4817
        %v4819 = vmul.f32 %v4737, 1.442695
        %v4820 = vpow.pop %v4819
        %v4821 = vmul.f32 %v4738, 1.442695
        %v4822 = vpow.pop %v4821
        %v4823 = vmul.f32 %v4739, 1.442695
        %v4824 = vpow.pop %v4823
        %v4825 = vmul.f32 %v4740, 1.442695
        %v4826 = vpow.pop %v4825
        %v4827 = vmul.f32 %v4741, 1.442695
        %v4828 = vpow.pop %v4827
        %v4829 = vmul.f32 %v4742, 1.442695
        %v4830 = vpow.pop %v4829
        %v4831 = vmul.f32 %v4743, 1.442695
        %v4832 = vpow.pop %v4831
        %v4833 = vmul.f32 %v4744, 1.442695
        %v4834 = vpow.pop %v4833
        %v4835 = vmul.f32 %v4745, 1.442695
        %v4836 = vpow.pop %v4835
        %v4837 = vmul.f32 %v4746, 1.442695
        %v4838 = vpow.pop %v4837
        %v4839 = vmul.f32 %v4747, 1.442695
        %v4840 = vpow.pop %v4839
        %v4841 = vmul.f32 %v4748, 1.442695
        %v4842 = vpow.pop %v4841
        %v4843 = vmul.f32 %v4749, 1.442695
        %v4844 = vpow.pop %v4843
        %v4845 = vmul.f32 %v4750, 1.442695
        %v4846 = vpow.pop %v4845
        %v4847 = vmul.f32 %v4751, 1.442695
        %v4848 = vpow.pop %v4847
        %v4849 = vmul.f32 %v4752, 1.442695
        %v4850 = vpow.pop %v4849
        %v4851 = vmul.f32 %v4753, 1.442695
        %v4852 = vpow.pop %v4851
        %v4853 = vmul.f32 %v4754, 1.442695
        %v4854 = vpow.pop %v4853
        %v4855 = vmul.f32 %v4755, 1.442695
        %v4856 = vpow.pop %v4855
        %v4857 = vmul.f32 %v4756, 1.442695
        %v4858 = vpow.pop %v4857
        %v4859 = vmul.f32 %v4757, 1.442695
        %v4860 = vpow.pop %v4859
        %v4861 = vmul.f32 %v4758, 1.442695
        %v4862 = vpow.pop %v4861
        %v4863 = vmul.f32 %v4759, 1.442695
        %v4864 = vpow.pop %v4863
        %v4865 = vmul.f32 %v4760, 1.442695
        %v4866 = vpow.pop %v4865
        %v4867 = vmul.f32 %v4761, 1.442695
        %v4868 = vpow.pop %v4867
        %v4869 = vmul.f32 %v4762, 1.442695
        %v4870 = vpow.pop %v4869
        %v4871 = vmul.f32 %v4763, 1.442695
        %v4872 = vpow.pop %v4871
        %v4873 = vmul.f32 %v4764, 1.442695
        %v4874 = vpow.pop %v4873
        %v4875 = vmul.f32 %v4765, 1.442695
        %v4876 = vpow.pop %v4875
        %v4877 = vmul.f32 %v4766, 1.442695
        %v4878 = vpow.pop %v4877
        %v4879 = vmul.f32 %v4767, 1.442695
        %v4880 = vpow.pop %v4879
        %v4881 = vmul.f32 %v4768, 1.442695
        %v4882 = vpow.pop %v4881
        %v4883 = vmul.f32 %v4769, 1.442695
        %v4884 = vpow.pop %v4883
        %v4885 = vmul.f32 %v4770, 1.442695
        %v4886 = vpow.pop %v4885
        %v4887 = vmul.f32 %v4771, 1.442695
        %v4888 = vpow.pop %v4887
        %v4889 = vmul.f32 %v4772, 1.442695
        %v4890 = vpow.pop %v4889
        %v4891 = vmul.f32 %v4773, 1.442695
        %v4892 = vpow.pop %v4891
        %v4893 = vmul.f32 %v4774, 1.442695
        %v4894 = vpow.pop %v4893
        %v4895 = vmul.f32 %v4775, 1.442695
        %v4896 = vpow.pop %v4895
        %v4897 = vmul.f32 %v4776, 1.442695
        %v4898 = vpow.pop %v4897
        %v4899 = vmul.f32 %v4777, 1.442695
        %v4900 = vpow.pop %v4899
        %v4901 = vmul.f32 %v4778, 1.442695
        %v4902 = vpow.pop %v4901
        %v4903 = vmul.f32 %v4779, 1.442695
        %v4904 = vpow.pop %v4903
        %v4905 = vmul.f32 %v4780, 1.442695
        %v4906 = vpow.pop %v4905
        %v4907 = vmul.f32 %v4781, 1.442695
        %v4908 = vpow.pop %v4907
        %v4909 = vmul.f32 %v4782, 1.442695
        %v4910 = vpow.pop %v4909
        %v4911 = vadd.f32 %v4784, %v4786
        %4912 = vadd.xlane.f32.xlu0 %v4911
        %v4913 = vpop.xlane.xlu0 %4912
        %v4914 = vadd.f32 %v4788, %v4790
        %4915 = vadd.xlane.f32.xlu0 %v4914
        %v4916 = vpop.xlane.xlu0 %4915
        %v4917 = vadd.f32 %v4792, %v4794
        %4918 = vadd.xlane.f32.xlu0 %v4917
        %v4919 = vpop.xlane.xlu0 %4918
        %v4920 = vadd.f32 %v4796, %v4798
        %4921 = vadd.xlane.f32.xlu0 %v4920
        %v4922 = vpop.xlane.xlu0 %4921
        %v4923 = vadd.f32 %v4800, %v4802
        %4924 = vadd.xlane.f32.xlu0 %v4923
        %v4925 = vpop.xlane.xlu0 %4924
        %v4926 = vadd.f32 %v4804, %v4806
        %4927 = vadd.xlane.f32.xlu0 %v4926
        %v4928 = vpop.xlane.xlu0 %4927
        %v4929 = vadd.f32 %v4808, %v4810
        %4930 = vadd.xlane.f32.xlu0 %v4929
        %v4931 = vpop.xlane.xlu0 %4930
        %v4932 = vadd.f32 %v4812, %v4814
        %4933 = vadd.xlane.f32.xlu0 %v4932
        %v4934 = vpop.xlane.xlu0 %4933
        %v4935 = vadd.f32 %v4816, %v4818
        %4936 = vadd.xlane.f32.xlu0 %v4935
        %v4937 = vpop.xlane.xlu0 %4936
        %v4938 = vadd.f32 %v4820, %v4822
        %4939 = vadd.xlane.f32.xlu0 %v4938
        %v4940 = vpop.xlane.xlu0 %4939
        %v4941 = vadd.f32 %v4824, %v4826
        %4942 = vadd.xlane.f32.xlu0 %v4941
        %v4943 = vpop.xlane.xlu0 %4942
        %v4944 = vadd.f32 %v4828, %v4830
        %4945 = vadd.xlane.f32.xlu0 %v4944
        %v4946 = vpop.xlane.xlu0 %4945
        %v4947 = vadd.f32 %v4832, %v4834
        %4948 = vadd.xlane.f32.xlu0 %v4947
        %v4949 = vpop.xlane.xlu0 %4948
        %v4950 = vadd.f32 %v4836, %v4838
        %4951 = vadd.xlane.f32.xlu0 %v4950
        %v4952 = vpop.xlane.xlu0 %4951
        %v4953 = vadd.f32 %v4840, %v4842
        %4954 = vadd.xlane.f32.xlu0 %v4953
        %v4955 = vpop.xlane.xlu0 %4954
        %v4956 = vadd.f32 %v4844, %v4846
        %4957 = vadd.xlane.f32.xlu0 %v4956
        %v4958 = vpop.xlane.xlu0 %4957
        %v4959 = vadd.f32 %v4848, %v4850
        %4960 = vadd.xlane.f32.xlu0 %v4959
        %v4961 = vpop.xlane.xlu0 %4960
        %v4962 = vadd.f32 %v4852, %v4854
        %4963 = vadd.xlane.f32.xlu0 %v4962
        %v4964 = vpop.xlane.xlu0 %4963
        %v4965 = vadd.f32 %v4856, %v4858
        %4966 = vadd.xlane.f32.xlu0 %v4965
        %v4967 = vpop.xlane.xlu0 %4966
        %v4968 = vadd.f32 %v4860, %v4862
        %4969 = vadd.xlane.f32.xlu0 %v4968
        %v4970 = vpop.xlane.xlu0 %4969
        %v4971 = vadd.f32 %v4864, %v4866
        %4972 = vadd.xlane.f32.xlu0 %v4971
        %v4973 = vpop.xlane.xlu0 %4972
        %v4974 = vadd.f32 %v4868, %v4870
        %4975 = vadd.xlane.f32.xlu0 %v4974
        %v4976 = vpop.xlane.xlu0 %4975
        %v4977 = vadd.f32 %v4872, %v4874
        %4978 = vadd.xlane.f32.xlu0 %v4977
        %v4979 = vpop.xlane.xlu0 %4978
        %v4980 = vadd.f32 %v4876, %v4878
        %4981 = vadd.xlane.f32.xlu0 %v4980
        %v4982 = vpop.xlane.xlu0 %4981
        %v4983 = vadd.f32 %v4880, %v4882
        %4984 = vadd.xlane.f32.xlu0 %v4983
        %v4985 = vpop.xlane.xlu0 %4984
        %v4986 = vadd.f32 %v4884, %v4886
        %4987 = vadd.xlane.f32.xlu0 %v4986
        %v4988 = vpop.xlane.xlu0 %4987
        %v4989 = vadd.f32 %v4888, %v4890
        %4990 = vadd.xlane.f32.xlu0 %v4989
        %v4991 = vpop.xlane.xlu0 %4990
        %v4992 = vadd.f32 %v4892, %v4894
        %4993 = vadd.xlane.f32.xlu0 %v4992
        %v4994 = vpop.xlane.xlu0 %4993
        %v4995 = vadd.f32 %v4896, %v4898
        %4996 = vadd.xlane.f32.xlu0 %v4995
        %v4997 = vpop.xlane.xlu0 %4996
        %v4998 = vadd.f32 %v4900, %v4902
        %4999 = vadd.xlane.f32.xlu0 %v4998
        %v5000 = vpop.xlane.xlu0 %4999
        %v5001 = vadd.f32 %v4904, %v4906
        %5002 = vadd.xlane.f32.xlu0 %v5001
        %v5003 = vpop.xlane.xlu0 %5002
        %v5004 = vadd.f32 %v4908, %v4910
        %5005 = vadd.xlane.f32.xlu0 %v5004
        %v5006 = vpop.xlane.xlu0 %5005
        %v5007 = vrcp.pop %v4913
        %v5008 = vrcp.pop %v4916
        %v5009 = vrcp.pop %v4919
        %v5010 = vrcp.pop %v4922
        %v5011 = vrcp.pop %v4925
        %v5012 = vrcp.pop %v4928
        %v5013 = vrcp.pop %v4931
        %v5014 = vrcp.pop %v4934
        %v5015 = vrcp.pop %v4937
        %v5016 = vrcp.pop %v4940
        %v5017 = vrcp.pop %v4943
        %v5018 = vrcp.pop %v4946
        %v5019 = vrcp.pop %v4949
        %v5020 = vrcp.pop %v4952
        %v5021 = vrcp.pop %v4955
        %v5022 = vrcp.pop %v4958
        %v5023 = vrcp.pop %v4961
        %v5024 = vrcp.pop %v4964
        %v5025 = vrcp.pop %v4967
        %v5026 = vrcp.pop %v4970
        %v5027 = vrcp.pop %v4973
        %v5028 = vrcp.pop %v4976
        %v5029 = vrcp.pop %v4979
        %v5030 = vrcp.pop %v4982
        %v5031 = vrcp.pop %v4985
        %v5032 = vrcp.pop %v4988
        %v5033 = vrcp.pop %v4991
        %v5034 = vrcp.pop %v4994
        %v5035 = vrcp.pop %v4997
        %v5036 = vrcp.pop %v5000
        %v5037 = vrcp.pop %v5003
        %v5038 = vrcp.pop %v5006
        %v5039 = vmul.f32 %v4784, %v5007
        %v5040 = vmul.f32 %v4786, %v5007
        %v5041 = vmul.f32 %v4788, %v5008
        %v5042 = vmul.f32 %v4790, %v5008
        %v5043 = vmul.f32 %v4792, %v5009
        %v5044 = vmul.f32 %v4794, %v5009
        %v5045 = vmul.f32 %v4796, %v5010
        %v5046 = vmul.f32 %v4798, %v5010
        %v5047 = vmul.f32 %v4800, %v5011
        %v5048 = vmul.f32 %v4802, %v5011
        %v5049 = vmul.f32 %v4804, %v5012
        %v5050 = vmul.f32 %v4806, %v5012
        %v5051 = vmul.f32 %v4808, %v5013
        %v5052 = vmul.f32 %v4810, %v5013
        %v5053 = vmul.f32 %v4812, %v5014
        %v5054 = vmul.f32 %v4814, %v5014
        %v5055 = vmul.f32 %v4816, %v5015
        %v5056 = vmul.f32 %v4818, %v5015
        %v5057 = vmul.f32 %v4820, %v5016
        %v5058 = vmul.f32 %v4822, %v5016
        %v5059 = vmul.f32 %v4824, %v5017
        %v5060 = vmul.f32 %v4826, %v5017
        %v5061 = vmul.f32 %v4828, %v5018
        %v5062 = vmul.f32 %v4830, %v5018
        %v5063 = vmul.f32 %v4832, %v5019
        %v5064 = vmul.f32 %v4834, %v5019
        %v5065 = vmul.f32 %v4836, %v5020
        %v5066 = vmul.f32 %v4838, %v5020
        %v5067 = vmul.f32 %v4840, %v5021
        %v5068 = vmul.f32 %v4842, %v5021
        %v5069 = vmul.f32 %v4844, %v5022
        %v5070 = vmul.f32 %v4846, %v5022
        %v5071 = vmul.f32 %v4848, %v5023
        %v5072 = vmul.f32 %v4850, %v5023
        %v5073 = vmul.f32 %v4852, %v5024
        %v5074 = vmul.f32 %v4854, %v5024
        %v5075 = vmul.f32 %v4856, %v5025
        %v5076 = vmul.f32 %v4858, %v5025
        %v5077 = vmul.f32 %v4860, %v5026
        %v5078 = vmul.f32 %v4862, %v5026
        %v5079 = vmul.f32 %v4864, %v5027
        %v5080 = vmul.f32 %v4866, %v5027
        %v5081 = vmul.f32 %v4868, %v5028
        %v5082 = vmul.f32 %v4870, %v5028
        %v5083 = vmul.f32 %v4872, %v5029
        %v5084 = vmul.f32 %v4874, %v5029
        %v5085 = vmul.f32 %v4876, %v5030
        %v5086 = vmul.f32 %v4878, %v5030
        %v5087 = vmul.f32 %v4880, %v5031
        %v5088 = vmul.f32 %v4882, %v5031
        %v5089 = vmul.f32 %v4884, %v5032
        %v5090 = vmul.f32 %v4886, %v5032
        %v5091 = vmul.f32 %v4888, %v5033
        %v5092 = vmul.f32 %v4890, %v5033
        %v5093 = vmul.f32 %v4892, %v5034
        %v5094 = vmul.f32 %v4894, %v5034
        %v5095 = vmul.f32 %v4896, %v5035
        %v5096 = vmul.f32 %v4898, %v5035
        %v5097 = vmul.f32 %v4900, %v5036
        %v5098 = vmul.f32 %v4902, %v5036
        %v5099 = vmul.f32 %v4904, %v5037
        %v5100 = vmul.f32 %v4906, %v5037
        %v5101 = vmul.f32 %v4908, %v5038
        %v5102 = vmul.f32 %v4910, %v5038
        %5103 = vrot.lane.b32.xlu0 %v2601, 48
        %v5104 = vpop.permute.xlu0 %5103
        %5105 = vrot.lane.b32.xlu0 %v2606, 48
        %v5106 = vpop.permute.xlu0 %5105
        %5107 = vrot.lane.b32.xlu0 %v2611, 48
        %v5108 = vpop.permute.xlu0 %5107
        %5109 = vrot.lane.b32.xlu0 %v2616, 48
        %v5110 = vpop.permute.xlu0 %5109
        %5111 = vrot.lane.b32.xlu0 %v2621, 48
        %v5112 = vpop.permute.xlu0 %5111
        %5113 = vrot.lane.b32.xlu0 %v2626, 48
        %v5114 = vpop.permute.xlu0 %5113
        %5115 = vrot.lane.b32.xlu0 %v2631, 48
        %v5116 = vpop.permute.xlu0 %5115
        %5117 = vrot.lane.b32.xlu0 %v2636, 48
        %v5118 = vpop.permute.xlu0 %5117
        %5119 = vrot.lane.b32.xlu0 %v2641, 48
        %v5120 = vpop.permute.xlu0 %5119
        %5121 = vrot.lane.b32.xlu0 %v2646, 48
        %v5122 = vpop.permute.xlu0 %5121
        %5123 = vrot.lane.b32.xlu0 %v2651, 48
        %v5124 = vpop.permute.xlu0 %5123
        %5125 = vrot.lane.b32.xlu0 %v2656, 48
        %v5126 = vpop.permute.xlu0 %5125
        %5127 = vrot.lane.b32.xlu0 %v2661, 48
        %v5128 = vpop.permute.xlu0 %5127
        %5129 = vrot.lane.b32.xlu0 %v2666, 48
        %v5130 = vpop.permute.xlu0 %5129
        %5131 = vrot.lane.b32.xlu0 %v2671, 48
        %v5132 = vpop.permute.xlu0 %5131
        %5133 = vrot.lane.b32.xlu0 %v2676, 48
        %v5134 = vpop.permute.xlu0 %5133
        %5135 = vrot.lane.b32.xlu0 %v2681, 48
        %v5136 = vpop.permute.xlu0 %5135
        %5137 = vrot.lane.b32.xlu0 %v2686, 48
        %v5138 = vpop.permute.xlu0 %5137
        %5139 = vrot.lane.b32.xlu0 %v2691, 48
        %v5140 = vpop.permute.xlu0 %5139
        %5141 = vrot.lane.b32.xlu0 %v2696, 48
        %v5142 = vpop.permute.xlu0 %5141
        %5143 = vrot.lane.b32.xlu0 %v2701, 48
        %v5144 = vpop.permute.xlu0 %5143
        %5145 = vrot.lane.b32.xlu0 %v2706, 48
        %v5146 = vpop.permute.xlu0 %5145
        %5147 = vrot.lane.b32.xlu0 %v2711, 48
        %v5148 = vpop.permute.xlu0 %5147
        %5149 = vrot.lane.b32.xlu0 %v2716, 48
        %v5150 = vpop.permute.xlu0 %5149
        %5151 = vrot.lane.b32.xlu0 %v2721, 48
        %v5152 = vpop.permute.xlu0 %5151
        %5153 = vrot.lane.b32.xlu0 %v2726, 48
        %v5154 = vpop.permute.xlu0 %5153
        %5155 = vrot.lane.b32.xlu0 %v2731, 48
        %v5156 = vpop.permute.xlu0 %5155
        %5157 = vrot.lane.b32.xlu0 %v2736, 48
        %v5158 = vpop.permute.xlu0 %5157
        %5159 = vrot.lane.b32.xlu0 %v2741, 48
        %v5160 = vpop.permute.xlu0 %5159
        %5161 = vrot.lane.b32.xlu0 %v2746, 48
        %v5162 = vpop.permute.xlu0 %5161
        %5163 = vrot.lane.b32.xlu0 %v2751, 48
        %v5164 = vpop.permute.xlu0 %5163
        %5165 = vrot.lane.b32.xlu0 %v2756, 48
        %v5166 = vpop.permute.xlu0 %5165
        %5199 = vmatprep.subr.mxu0 0.0
        %5200 = vmatpush1.msra.mxu0 %v5134
        %5201 = vmatprep.subr.mxu0 0.0
        %5202 = vmatpush1.msra.mxu0 %v5132
        %5203 = vmatprep.subr.mxu0 0.0
        %5204 = vmatpush1.msra.mxu0 %v5130
        %5205 = vmatprep.subr.mxu0 0.0
        %5206 = vmatpush1.msra.mxu0 %v5128
        %5207 = vmatprep.subr.mxu0 0.0
        %5208 = vmatpush1.msra.mxu0 %v5126
        %5209 = vmatprep.subr.mxu0 0.0
        %5210 = vmatpush1.msra.mxu0 %v5124
        %5211 = vmatprep.subr.mxu0 0.0
        %5212 = vmatpush1.msra.mxu0 %v5122
        %5213 = vmatprep.subr.mxu0 0.0
        %5214 = vmatpush1.msra.mxu0 %v5120
        %5215 = vmatprep.subr.mxu0 0.0
        %5216 = vmatpush1.msra.mxu0 %v5118
        %5217 = vmatprep.subr.mxu0 0.0
        %5218 = vmatpush1.msra.mxu0 %v5116
        %5219 = vmatprep.subr.mxu0 0.0
        %5220 = vmatpush1.msra.mxu0 %v5114
        %5221 = vmatprep.subr.mxu0 0.0
        %5222 = vmatpush1.msra.mxu0 %v5112
        %5223 = vmatprep.subr.mxu0 0.0
        %5224 = vmatpush1.msra.mxu0 %v5110
        %5225 = vmatprep.subr.mxu0 0.0
        %5226 = vmatpush1.msra.mxu0 %v5108
        %5227 = vmatprep.subr.mxu0 0.0
        %5228 = vmatpush1.msra.mxu0 %v5106
        %5229 = vmatprep.subr.mxu0 0.0
        %5230 = vmatpush1.msra.mxu0 %v5104
        %5231 = vmatprep.subr.mxu0 0.0
        %5232 = vmatpush2.msra.mxu0 %v5166
        %5233 = vmatprep.subr.mxu0 0.0
        %5234 = vmatpush2.msra.mxu0 %v5164
        %5235 = vmatprep.subr.mxu0 0.0
        %5236 = vmatpush2.msra.mxu0 %v5162
        %5237 = vmatprep.subr.mxu0 0.0
        %5238 = vmatpush2.msra.mxu0 %v5160
        %5239 = vmatprep.subr.mxu0 0.0
        %5240 = vmatpush2.msra.mxu0 %v5158
        %5241 = vmatprep.subr.mxu0 0.0
        %5242 = vmatpush2.msra.mxu0 %v5156
        %5243 = vmatprep.subr.mxu0 0.0
        %5244 = vmatpush2.msra.mxu0 %v5154
        %5245 = vmatprep.subr.mxu0 0.0
        %5246 = vmatpush2.msra.mxu0 %v5152
        %5247 = vmatprep.subr.mxu0 0.0
        %5248 = vmatpush2.msra.mxu0 %v5150
        %5249 = vmatprep.subr.mxu0 0.0
        %5250 = vmatpush2.msra.mxu0 %v5148
        %5251 = vmatprep.subr.mxu0 0.0
        %5252 = vmatpush2.msra.mxu0 %v5146
        %5253 = vmatprep.subr.mxu0 0.0
        %5254 = vmatpush2.msra.mxu0 %v5144
        %5255 = vmatprep.subr.mxu0 0.0
        %5256 = vmatpush2.msra.mxu0 %v5142
        %5257 = vmatprep.subr.mxu0 0.0
        %5258 = vmatpush2.msra.mxu0 %v5140
        %5259 = vmatprep.subr.mxu0 0.0
        %5260 = vmatpush2.msra.mxu0 %v5138
        %5261 = vmatprep.subr.mxu0 0.0
        %5262 = vmatpush2.msra.mxu0 %v5136
        %5263 = vmatprep.mubr.f32.mxu0 %v5040
        %5264 = vmatmul.mubr.f32.gmra.mxu0 %v5039
        %v5265 = vpop.f32.mrf.mxu0
        %v5266 = vadd.f32 0.0, %v5265
        %v5267 = vpop.f32.mrf.mxu0
        %5268 = vmatprep.mubr.f32.mxu0 %v5042
        %5269 = vmatmul.mubr.f32.gmra.mxu0 %v5041
        %v5270 = vpop.f32.mrf.mxu0
        %v5271 = vadd.f32 0.0, %v5270
        %v5272 = vpop.f32.mrf.mxu0
        %5273 = vmatprep.mubr.f32.mxu0 %v5044
        %5274 = vmatmul.mubr.f32.gmra.mxu0 %v5043
        %v5275 = vpop.f32.mrf.mxu0
        %v5276 = vadd.f32 0.0, %v5275
        %v5277 = vpop.f32.mrf.mxu0
        %5278 = vmatprep.mubr.f32.mxu0 %v5046
        %5279 = vmatmul.mubr.f32.gmra.mxu0 %v5045
        %v5280 = vpop.f32.mrf.mxu0
        %v5281 = vadd.f32 0.0, %v5280
        %v5282 = vpop.f32.mrf.mxu0
        %5283 = vmatprep.mubr.f32.mxu0 %v5048
        %5284 = vmatmul.mubr.f32.gmra.mxu0 %v5047
        %v5285 = vpop.f32.mrf.mxu0
        %v5286 = vadd.f32 0.0, %v5285
        %v5287 = vpop.f32.mrf.mxu0
        %5288 = vmatprep.mubr.f32.mxu0 %v5050
        %5289 = vmatmul.mubr.f32.gmra.mxu0 %v5049
        %v5290 = vpop.f32.mrf.mxu0
        %v5291 = vadd.f32 0.0, %v5290
        %v5292 = vpop.f32.mrf.mxu0
        %5293 = vmatprep.mubr.f32.mxu0 %v5052
        %5294 = vmatmul.mubr.f32.gmra.mxu0 %v5051
        %v5295 = vpop.f32.mrf.mxu0
        %v5296 = vadd.f32 0.0, %v5295
        %v5297 = vpop.f32.mrf.mxu0
        %5298 = vmatprep.mubr.f32.mxu0 %v5054
        %5299 = vmatmul.mubr.f32.gmra.mxu0 %v5053
        %v5300 = vpop.f32.mrf.mxu0
        %v5301 = vadd.f32 0.0, %v5300
        %v5302 = vpop.f32.mrf.mxu0
        %5303 = vmatprep.mubr.f32.mxu0 %v5056
        %5304 = vmatmul.mubr.f32.gmra.mxu0 %v5055
        %v5305 = vpop.f32.mrf.mxu0
        %v5306 = vadd.f32 0.0, %v5305
        %v5307 = vpop.f32.mrf.mxu0
        %5308 = vmatprep.mubr.f32.mxu0 %v5058
        %5309 = vmatmul.mubr.f32.gmra.mxu0 %v5057
        %v5310 = vpop.f32.mrf.mxu0
        %v5311 = vadd.f32 0.0, %v5310
        %v5312 = vpop.f32.mrf.mxu0
        %5313 = vmatprep.mubr.f32.mxu0 %v5060
        %5314 = vmatmul.mubr.f32.gmra.mxu0 %v5059
        %v5315 = vpop.f32.mrf.mxu0
        %v5316 = vadd.f32 0.0, %v5315
        %v5317 = vpop.f32.mrf.mxu0
        %5318 = vmatprep.mubr.f32.mxu0 %v5062
        %5319 = vmatmul.mubr.f32.gmra.mxu0 %v5061
        %v5320 = vpop.f32.mrf.mxu0
        %v5321 = vadd.f32 0.0, %v5320
        %v5322 = vpop.f32.mrf.mxu0
        %5323 = vmatprep.mubr.f32.mxu0 %v5064
        %5324 = vmatmul.mubr.f32.gmra.mxu0 %v5063
        %v5325 = vpop.f32.mrf.mxu0
        %v5326 = vadd.f32 0.0, %v5325
        %v5327 = vpop.f32.mrf.mxu0
        %5328 = vmatprep.mubr.f32.mxu0 %v5066
        %5329 = vmatmul.mubr.f32.gmra.mxu0 %v5065
        %v5330 = vpop.f32.mrf.mxu0
        %v5331 = vadd.f32 0.0, %v5330
        %v5332 = vpop.f32.mrf.mxu0
        %5333 = vmatprep.mubr.f32.mxu0 %v5068
        %5334 = vmatmul.mubr.f32.gmra.mxu0 %v5067
        %v5335 = vpop.f32.mrf.mxu0
        %v5336 = vadd.f32 0.0, %v5335
        %v5337 = vpop.f32.mrf.mxu0
        %5338 = vmatprep.mubr.f32.mxu0 %v5070
        %5339 = vmatmul.mubr.f32.gmra.mxu0 %v5069
        %v5340 = vpop.f32.mrf.mxu0
        %v5341 = vadd.f32 0.0, %v5340
        %v5342 = vpop.f32.mrf.mxu0
        %5343 = vmatprep.mubr.f32.mxu0 %v5072
        %5344 = vmatmul.mubr.f32.gmra.mxu0 %v5071
        %v5345 = vpop.f32.mrf.mxu0
        %v5346 = vadd.f32 0.0, %v5345
        %v5347 = vpop.f32.mrf.mxu0
        %5348 = vmatprep.mubr.f32.mxu0 %v5074
        %5349 = vmatmul.mubr.f32.gmra.mxu0 %v5073
        %v5350 = vpop.f32.mrf.mxu0
        %v5351 = vadd.f32 0.0, %v5350
        %v5352 = vpop.f32.mrf.mxu0
        %5353 = vmatprep.mubr.f32.mxu0 %v5076
        %5354 = vmatmul.mubr.f32.gmra.mxu0 %v5075
        %v5355 = vpop.f32.mrf.mxu0
        %v5356 = vadd.f32 0.0, %v5355
        %v5357 = vpop.f32.mrf.mxu0
        %5358 = vmatprep.mubr.f32.mxu0 %v5078
        %5359 = vmatmul.mubr.f32.gmra.mxu0 %v5077
        %v5360 = vpop.f32.mrf.mxu0
        %v5361 = vadd.f32 0.0, %v5360
        %v5362 = vpop.f32.mrf.mxu0
        %5363 = vmatprep.mubr.f32.mxu0 %v5080
        %5364 = vmatmul.mubr.f32.gmra.mxu0 %v5079
        %v5365 = vpop.f32.mrf.mxu0
        %v5366 = vadd.f32 0.0, %v5365
        %v5367 = vpop.f32.mrf.mxu0
        %5368 = vmatprep.mubr.f32.mxu0 %v5082
        %5369 = vmatmul.mubr.f32.gmra.mxu0 %v5081
        %v5370 = vpop.f32.mrf.mxu0
        %v5371 = vadd.f32 0.0, %v5370
        %v5372 = vpop.f32.mrf.mxu0
        %5373 = vmatprep.mubr.f32.mxu0 %v5084
        %5374 = vmatmul.mubr.f32.gmra.mxu0 %v5083
        %v5375 = vpop.f32.mrf.mxu0
        %v5376 = vadd.f32 0.0, %v5375
        %v5377 = vpop.f32.mrf.mxu0
        %5378 = vmatprep.mubr.f32.mxu0 %v5086
        %5379 = vmatmul.mubr.f32.gmra.mxu0 %v5085
        %v5380 = vpop.f32.mrf.mxu0
        %v5381 = vadd.f32 0.0, %v5380
        %v5382 = vpop.f32.mrf.mxu0
        %5383 = vmatprep.mubr.f32.mxu0 %v5088
        %5384 = vmatmul.mubr.f32.gmra.mxu0 %v5087
        %v5385 = vpop.f32.mrf.mxu0
        %v5386 = vadd.f32 0.0, %v5385
        %v5387 = vpop.f32.mrf.mxu0
        %5388 = vmatprep.mubr.f32.mxu0 %v5090
        %5389 = vmatmul.mubr.f32.gmra.mxu0 %v5089
        %v5390 = vpop.f32.mrf.mxu0
        %v5391 = vadd.f32 0.0, %v5390
        %v5392 = vpop.f32.mrf.mxu0
        %5393 = vmatprep.mubr.f32.mxu0 %v5092
        %5394 = vmatmul.mubr.f32.gmra.mxu0 %v5091
        %v5395 = vpop.f32.mrf.mxu0
        %v5396 = vadd.f32 0.0, %v5395
        %v5397 = vpop.f32.mrf.mxu0
        %5398 = vmatprep.mubr.f32.mxu0 %v5094
        %5399 = vmatmul.mubr.f32.gmra.mxu0 %v5093
        %v5400 = vpop.f32.mrf.mxu0
        %v5401 = vadd.f32 0.0, %v5400
        %v5402 = vpop.f32.mrf.mxu0
        %5403 = vmatprep.mubr.f32.mxu0 %v5096
        %5404 = vmatmul.mubr.f32.gmra.mxu0 %v5095
        %v5405 = vpop.f32.mrf.mxu0
        %v5406 = vadd.f32 0.0, %v5405
        %v5407 = vpop.f32.mrf.mxu0
        %5408 = vmatprep.mubr.f32.mxu0 %v5098
        %5409 = vmatmul.mubr.f32.gmra.mxu0 %v5097
        %v5410 = vpop.f32.mrf.mxu0
        %v5411 = vadd.f32 0.0, %v5410
        %v5412 = vpop.f32.mrf.mxu0
        %5413 = vmatprep.mubr.f32.mxu0 %v5100
        %5414 = vmatmul.mubr.f32.gmra.mxu0 %v5099
        %v5415 = vpop.f32.mrf.mxu0
        %v5416 = vadd.f32 0.0, %v5415
        %v5417 = vpop.f32.mrf.mxu0
        %5418 = vmatprep.mubr.f32.mxu0 %v5102
        %5419 = vmatmul.mubr.f32.gmra.mxu0 %v5101
        %v5420 = vpop.f32.mrf.mxu0
        %v5421 = vadd.f32 0.0, %v5420
        %v5422 = vpop.f32.mrf.mxu0
        %5423 = vdwg.mxu0
        %v5425 = vsel %vm2923, %v5266, 0
        %v5428 = vsel %vm2923, %v5271, 0
        %v5431 = vsel %vm2923, %v5276, 0
        %v5434 = vsel %vm2923, %v5281, 0
        %v5437 = vsel %vm2923, %v5286, 0
        %v5440 = vsel %vm2923, %v5291, 0
        %v5443 = vsel %vm2923, %v5296, 0
        %v5446 = vsel %vm2923, %v5301, 0
        %v5449 = vsel %vm2923, %v5306, 0
        %v5452 = vsel %vm2923, %v5311, 0
        %v5455 = vsel %vm2923, %v5316, 0
        %v5458 = vsel %vm2923, %v5321, 0
        %v5461 = vsel %vm2923, %v5326, 0
        %v5464 = vsel %vm2923, %v5331, 0
        %v5467 = vsel %vm2923, %v5336, 0
        %v5470 = vsel %vm2923, %v5341, 0
        %v5473 = vsel %vm2923, %v5346, 0
        %v5476 = vsel %vm2923, %v5351, 0
        %v5479 = vsel %vm2923, %v5356, 0
        %v5482 = vsel %vm2923, %v5361, 0
        %v5485 = vsel %vm2923, %v5366, 0
        %v5488 = vsel %vm2923, %v5371, 0
        %v5491 = vsel %vm2923, %v5376, 0
        %v5494 = vsel %vm2923, %v5381, 0
        %v5497 = vsel %vm2923, %v5386, 0
        %v5500 = vsel %vm2923, %v5391, 0
        %v5503 = vsel %vm2923, %v5396, 0
        %v5506 = vsel %vm2923, %v5401, 0
        %v5509 = vsel %vm2923, %v5406, 0
        %v5512 = vsel %vm2923, %v5411, 0
        %v5515 = vsel %vm2923, %v5416, 0
        %v5518 = vsel %vm2923, %v5421, 0
        %5520 = vmatprep.subr.mxu0 0.0
        %5521 = vmatpush1.msra.mxu0 0.0
        %5522 = vmatprep.subr.mxu0 0.0
        %5523 = vmatpush1.msra.mxu0 0.0
        %5524 = vmatprep.subr.mxu0 0.0
        %5525 = vmatpush1.msra.mxu0 0.0
        %5526 = vmatprep.subr.mxu0 0.0
        %5527 = vmatpush1.msra.mxu0 0.0
        %5528 = vmatprep.subr.mxu0 0.0
        %5529 = vmatpush1.msra.mxu0 0.0
        %5530 = vmatprep.subr.mxu0 0.0
        %5531 = vmatpush1.msra.mxu0 0.0
        %5532 = vmatprep.subr.mxu0 0.0
        %5533 = vmatpush1.msra.mxu0 0.0
        %5534 = vmatprep.subr.mxu0 0.0
        %5535 = vmatpush1.msra.mxu0 0.0
        %5536 = vmatprep.subr.mxu0 0.0
        %5537 = vmatpush1.msra.mxu0 0.0
        %5538 = vmatprep.subr.mxu0 0.0
        %5539 = vmatpush1.msra.mxu0 0.0
        %5540 = vmatprep.subr.mxu0 0.0
        %5541 = vmatpush1.msra.mxu0 0.0
        %5542 = vmatprep.subr.mxu0 0.0
        %5543 = vmatpush1.msra.mxu0 0.0
        %5544 = vmatprep.subr.mxu0 0.0
        %5545 = vmatpush1.msra.mxu0 0.0
        %5546 = vmatprep.subr.mxu0 0.0
        %5547 = vmatpush1.msra.mxu0 0.0
        %5548 = vmatprep.subr.mxu0 0.0
        %5549 = vmatpush1.msra.mxu0 %v2826
        %5550 = vmatprep.subr.mxu0 0.0
        %5551 = vmatpush1.msra.mxu0 %v2825
        %5552 = vmatprep.subr.mxu0 0.0
        %5553 = vmatpush2.msra.mxu0 0.0
        %5554 = vmatprep.subr.mxu0 0.0
        %5555 = vmatpush2.msra.mxu0 0.0
        %5556 = vmatprep.subr.mxu0 0.0
        %5557 = vmatpush2.msra.mxu0 0.0
        %5558 = vmatprep.subr.mxu0 0.0
        %5559 = vmatpush2.msra.mxu0 0.0
        %5560 = vmatprep.subr.mxu0 0.0
        %5561 = vmatpush2.msra.mxu0 0.0
        %5562 = vmatprep.subr.mxu0 0.0
        %5563 = vmatpush2.msra.mxu0 0.0
        %5564 = vmatprep.subr.mxu0 0.0
        %5565 = vmatpush2.msra.mxu0 0.0
        %5566 = vmatprep.subr.mxu0 0.0
        %5567 = vmatpush2.msra.mxu0 0.0
        %5568 = vmatprep.subr.mxu0 0.0
        %5569 = vmatpush2.msra.mxu0 0.0
        %5570 = vmatprep.subr.mxu0 0.0
        %5571 = vmatpush2.msra.mxu0 0.0
        %5572 = vmatprep.subr.mxu0 0.0
        %5573 = vmatpush2.msra.mxu0 0.0
        %5574 = vmatprep.subr.mxu0 0.0
        %5575 = vmatpush2.msra.mxu0 0.0
        %5576 = vmatprep.subr.mxu0 0.0
        %5577 = vmatpush2.msra.mxu0 0.0
        %5578 = vmatprep.subr.mxu0 0.0
        %5579 = vmatpush2.msra.mxu0 0.0
        %5580 = vmatprep.subr.mxu0 0.0
        %5581 = vmatpush2.msra.mxu0 0.0
        %5582 = vmatprep.subr.mxu0 0.0
        %5583 = vmatpush2.msra.mxu0 0.0
        %5584 = vmatprep.mubr.f32.mxu0 0.0
        %5585 = vmatmul.mubr.f32.gmra.mxu0 %v5425
        %v5586 = vpop.f32.mrf.mxu0
        %v5587 = vadd.f32 0.0, %v5586
        %v5588 = vpop.f32.mrf.mxu0
        %5589 = vmatprep.mubr.f32.mxu0 0.0
        %5590 = vmatmul.mubr.f32.gmra.mxu0 %v5428
        %v5591 = vpop.f32.mrf.mxu0
        %v5592 = vadd.f32 0.0, %v5591
        %v5593 = vpop.f32.mrf.mxu0
        %5594 = vmatprep.mubr.f32.mxu0 0.0
        %5595 = vmatmul.mubr.f32.gmra.mxu0 %v5431
        %v5596 = vpop.f32.mrf.mxu0
        %v5597 = vadd.f32 0.0, %v5596
        %v5598 = vpop.f32.mrf.mxu0
        %5599 = vmatprep.mubr.f32.mxu0 0.0
        %5600 = vmatmul.mubr.f32.gmra.mxu0 %v5434
        %v5601 = vpop.f32.mrf.mxu0
        %v5602 = vadd.f32 0.0, %v5601
        %v5603 = vpop.f32.mrf.mxu0
        %5604 = vmatprep.mubr.f32.mxu0 0.0
        %5605 = vmatmul.mubr.f32.gmra.mxu0 %v5437
        %v5606 = vpop.f32.mrf.mxu0
        %v5607 = vadd.f32 0.0, %v5606
        %v5608 = vpop.f32.mrf.mxu0
        %5609 = vmatprep.mubr.f32.mxu0 0.0
        %5610 = vmatmul.mubr.f32.gmra.mxu0 %v5440
        %v5611 = vpop.f32.mrf.mxu0
        %v5612 = vadd.f32 0.0, %v5611
        %v5613 = vpop.f32.mrf.mxu0
        %5614 = vmatprep.mubr.f32.mxu0 0.0
        %5615 = vmatmul.mubr.f32.gmra.mxu0 %v5443
        %v5616 = vpop.f32.mrf.mxu0
        %v5617 = vadd.f32 0.0, %v5616
        %v5618 = vpop.f32.mrf.mxu0
        %5619 = vmatprep.mubr.f32.mxu0 0.0
        %5620 = vmatmul.mubr.f32.gmra.mxu0 %v5446
        %v5621 = vpop.f32.mrf.mxu0
        %v5622 = vadd.f32 0.0, %v5621
        %v5623 = vpop.f32.mrf.mxu0
        %5624 = vmatprep.mubr.f32.mxu0 0.0
        %5625 = vmatmul.mubr.f32.gmra.mxu0 %v5449
        %v5626 = vpop.f32.mrf.mxu0
        %v5627 = vadd.f32 0.0, %v5626
        %v5628 = vpop.f32.mrf.mxu0
        %5629 = vmatprep.mubr.f32.mxu0 0.0
        %5630 = vmatmul.mubr.f32.gmra.mxu0 %v5452
        %v5631 = vpop.f32.mrf.mxu0
        %v5632 = vadd.f32 0.0, %v5631
        %v5633 = vpop.f32.mrf.mxu0
        %5634 = vmatprep.mubr.f32.mxu0 0.0
        %5635 = vmatmul.mubr.f32.gmra.mxu0 %v5455
        %v5636 = vpop.f32.mrf.mxu0
        %v5637 = vadd.f32 0.0, %v5636
        %v5638 = vpop.f32.mrf.mxu0
        %5639 = vmatprep.mubr.f32.mxu0 0.0
        %5640 = vmatmul.mubr.f32.gmra.mxu0 %v5458
        %v5641 = vpop.f32.mrf.mxu0
        %v5642 = vadd.f32 0.0, %v5641
        %v5643 = vpop.f32.mrf.mxu0
        %5644 = vmatprep.mubr.f32.mxu0 0.0
        %5645 = vmatmul.mubr.f32.gmra.mxu0 %v5461
        %v5646 = vpop.f32.mrf.mxu0
        %v5647 = vadd.f32 0.0, %v5646
        %v5648 = vpop.f32.mrf.mxu0
        %5649 = vmatprep.mubr.f32.mxu0 0.0
        %5650 = vmatmul.mubr.f32.gmra.mxu0 %v5464
        %v5651 = vpop.f32.mrf.mxu0
        %v5652 = vadd.f32 0.0, %v5651
        %v5653 = vpop.f32.mrf.mxu0
        %5654 = vmatprep.mubr.f32.mxu0 0.0
        %5655 = vmatmul.mubr.f32.gmra.mxu0 %v5467
        %v5656 = vpop.f32.mrf.mxu0
        %v5657 = vadd.f32 0.0, %v5656
        %v5658 = vpop.f32.mrf.mxu0
        %5659 = vmatprep.mubr.f32.mxu0 0.0
        %5660 = vmatmul.mubr.f32.gmra.mxu0 %v5470
        %v5661 = vpop.f32.mrf.mxu0
        %v5662 = vadd.f32 0.0, %v5661
        %v5663 = vpop.f32.mrf.mxu0
        %5664 = vmatprep.mubr.f32.mxu0 0.0
        %5665 = vmatmul.mubr.f32.gmra.mxu0 %v5473
        %v5666 = vpop.f32.mrf.mxu0
        %v5667 = vadd.f32 0.0, %v5666
        %v5668 = vpop.f32.mrf.mxu0
        %5669 = vmatprep.mubr.f32.mxu0 0.0
        %5670 = vmatmul.mubr.f32.gmra.mxu0 %v5476
        %v5671 = vpop.f32.mrf.mxu0
        %v5672 = vadd.f32 0.0, %v5671
        %v5673 = vpop.f32.mrf.mxu0
        %5674 = vmatprep.mubr.f32.mxu0 0.0
        %5675 = vmatmul.mubr.f32.gmra.mxu0 %v5479
        %v5676 = vpop.f32.mrf.mxu0
        %v5677 = vadd.f32 0.0, %v5676
        %v5678 = vpop.f32.mrf.mxu0
        %5679 = vmatprep.mubr.f32.mxu0 0.0
        %5680 = vmatmul.mubr.f32.gmra.mxu0 %v5482
        %v5681 = vpop.f32.mrf.mxu0
        %v5682 = vadd.f32 0.0, %v5681
        %v5683 = vpop.f32.mrf.mxu0
        %5684 = vmatprep.mubr.f32.mxu0 0.0
        %5685 = vmatmul.mubr.f32.gmra.mxu0 %v5485
        %v5686 = vpop.f32.mrf.mxu0
        %v5687 = vadd.f32 0.0, %v5686
        %v5688 = vpop.f32.mrf.mxu0
        %5689 = vmatprep.mubr.f32.mxu0 0.0
        %5690 = vmatmul.mubr.f32.gmra.mxu0 %v5488
        %v5691 = vpop.f32.mrf.mxu0
        %v5692 = vadd.f32 0.0, %v5691
        %v5693 = vpop.f32.mrf.mxu0
        %5694 = vmatprep.mubr.f32.mxu0 0.0
        %5695 = vmatmul.mubr.f32.gmra.mxu0 %v5491
        %v5696 = vpop.f32.mrf.mxu0
        %v5697 = vadd.f32 0.0, %v5696
        %v5698 = vpop.f32.mrf.mxu0
        %5699 = vmatprep.mubr.f32.mxu0 0.0
        %5700 = vmatmul.mubr.f32.gmra.mxu0 %v5494
        %v5701 = vpop.f32.mrf.mxu0
        %v5702 = vadd.f32 0.0, %v5701
        %v5703 = vpop.f32.mrf.mxu0
        %5704 = vmatprep.mubr.f32.mxu0 0.0
        %5705 = vmatmul.mubr.f32.gmra.mxu0 %v5497
        %v5706 = vpop.f32.mrf.mxu0
        %v5707 = vadd.f32 0.0, %v5706
        %v5708 = vpop.f32.mrf.mxu0
        %5709 = vmatprep.mubr.f32.mxu0 0.0
        %5710 = vmatmul.mubr.f32.gmra.mxu0 %v5500
        %v5711 = vpop.f32.mrf.mxu0
        %v5712 = vadd.f32 0.0, %v5711
        %v5713 = vpop.f32.mrf.mxu0
        %5714 = vmatprep.mubr.f32.mxu0 0.0
        %5715 = vmatmul.mubr.f32.gmra.mxu0 %v5503
        %v5716 = vpop.f32.mrf.mxu0
        %v5717 = vadd.f32 0.0, %v5716
        %v5718 = vpop.f32.mrf.mxu0
        %5719 = vmatprep.mubr.f32.mxu0 0.0
        %5720 = vmatmul.mubr.f32.gmra.mxu0 %v5506
        %v5721 = vpop.f32.mrf.mxu0
        %v5722 = vadd.f32 0.0, %v5721
        %v5723 = vpop.f32.mrf.mxu0
        %5724 = vmatprep.mubr.f32.mxu0 0.0
        %5725 = vmatmul.mubr.f32.gmra.mxu0 %v5509
        %v5726 = vpop.f32.mrf.mxu0
        %v5727 = vadd.f32 0.0, %v5726
        %v5728 = vpop.f32.mrf.mxu0
        %5729 = vmatprep.mubr.f32.mxu0 0.0
        %5730 = vmatmul.mubr.f32.gmra.mxu0 %v5512
        %v5731 = vpop.f32.mrf.mxu0
        %v5732 = vadd.f32 0.0, %v5731
        %v5733 = vpop.f32.mrf.mxu0
        %5734 = vmatprep.mubr.f32.mxu0 0.0
        %5735 = vmatmul.mubr.f32.gmra.mxu0 %v5515
        %v5736 = vpop.f32.mrf.mxu0
        %v5737 = vadd.f32 0.0, %v5736
        %v5738 = vpop.f32.mrf.mxu0
        %5739 = vmatprep.mubr.f32.mxu0 0.0
        %5740 = vmatmul.mubr.f32.gmra.mxu0 %v5518
        %v5741 = vpop.f32.mrf.mxu0
        %v5742 = vadd.f32 0.0, %v5741
        %v5743 = vpop.f32.mrf.mxu0
        %5744 = vdwg.mxu0
        %v5746 = vsel %vm2923, %v3952, 0
        %v5749 = vsel %vm2923, %v3957, 0
        %v5752 = vsel %vm2923, %v3962, 0
        %v5755 = vsel %vm2923, %v3967, 0
        %v5758 = vsel %vm2923, %v3972, 0
        %v5761 = vsel %vm2923, %v3977, 0
        %v5764 = vsel %vm2923, %v3982, 0
        %v5767 = vsel %vm2923, %v3987, 0
        %v5770 = vsel %vm2923, %v3992, 0
        %v5773 = vsel %vm2923, %v3997, 0
        %v5776 = vsel %vm2923, %v4002, 0
        %v5779 = vsel %vm2923, %v4007, 0
        %v5782 = vsel %vm2923, %v4012, 0
        %v5785 = vsel %vm2923, %v4017, 0
        %v5788 = vsel %vm2923, %v4022, 0
        %v5791 = vsel %vm2923, %v4027, 0
        %v5794 = vsel %vm2923, %v4032, 0
        %v5797 = vsel %vm2923, %v4037, 0
        %v5800 = vsel %vm2923, %v4042, 0
        %v5803 = vsel %vm2923, %v4047, 0
        %v5806 = vsel %vm2923, %v4052, 0
        %v5809 = vsel %vm2923, %v4057, 0
        %v5812 = vsel %vm2923, %v4062, 0
        %v5815 = vsel %vm2923, %v4067, 0
        %v5818 = vsel %vm2923, %v4072, 0
        %v5821 = vsel %vm2923, %v4077, 0
        %v5824 = vsel %vm2923, %v4082, 0
        %v5827 = vsel %vm2923, %v4087, 0
        %v5830 = vsel %vm2923, %v4092, 0
        %v5833 = vsel %vm2923, %v4097, 0
        %v5836 = vsel %vm2923, %v4102, 0
        %v5839 = vsel %vm2923, %v4107, 0
        %5841 = vmatprep.subr.mxu0 0.0
        %5842 = vmatpush1.msra.mxu0 0.0
        %5843 = vmatprep.subr.mxu0 0.0
        %5844 = vmatpush1.msra.mxu0 0.0
        %5845 = vmatprep.subr.mxu0 0.0
        %5846 = vmatpush1.msra.mxu0 0.0
        %5847 = vmatprep.subr.mxu0 0.0
        %5848 = vmatpush1.msra.mxu0 0.0
        %5849 = vmatprep.subr.mxu0 0.0
        %5850 = vmatpush1.msra.mxu0 0.0
        %5851 = vmatprep.subr.mxu0 0.0
        %5852 = vmatpush1.msra.mxu0 0.0
        %5853 = vmatprep.subr.mxu0 0.0
        %5854 = vmatpush1.msra.mxu0 0.0
        %5855 = vmatprep.subr.mxu0 0.0
        %5856 = vmatpush1.msra.mxu0 0.0
        %5857 = vmatprep.subr.mxu0 0.0
        %5858 = vmatpush1.msra.mxu0 0.0
        %5859 = vmatprep.subr.mxu0 0.0
        %5860 = vmatpush1.msra.mxu0 0.0
        %5861 = vmatprep.subr.mxu0 0.0
        %5862 = vmatpush1.msra.mxu0 0.0
        %5863 = vmatprep.subr.mxu0 0.0
        %5864 = vmatpush1.msra.mxu0 0.0
        %5865 = vmatprep.subr.mxu0 0.0
        %5866 = vmatpush1.msra.mxu0 0.0
        %5867 = vmatprep.subr.mxu0 0.0
        %5868 = vmatpush1.msra.mxu0 0.0
        %5869 = vmatprep.subr.mxu0 0.0
        %5870 = vmatpush1.msra.mxu0 %v2824
        %5871 = vmatprep.subr.mxu0 0.0
        %5872 = vmatpush1.msra.mxu0 %v2823
        %5873 = vmatprep.subr.mxu0 0.0
        %5874 = vmatpush2.msra.mxu0 0.0
        %5875 = vmatprep.subr.mxu0 0.0
        %5876 = vmatpush2.msra.mxu0 0.0
        %5877 = vmatprep.subr.mxu0 0.0
        %5878 = vmatpush2.msra.mxu0 0.0
        %5879 = vmatprep.subr.mxu0 0.0
        %5880 = vmatpush2.msra.mxu0 0.0
        %5881 = vmatprep.subr.mxu0 0.0
        %5882 = vmatpush2.msra.mxu0 0.0
        %5883 = vmatprep.subr.mxu0 0.0
        %5884 = vmatpush2.msra.mxu0 0.0
        %5885 = vmatprep.subr.mxu0 0.0
        %5886 = vmatpush2.msra.mxu0 0.0
        %5887 = vmatprep.subr.mxu0 0.0
        %5888 = vmatpush2.msra.mxu0 0.0
        %5889 = vmatprep.subr.mxu0 0.0
        %5890 = vmatpush2.msra.mxu0 0.0
        %5891 = vmatprep.subr.mxu0 0.0
        %5892 = vmatpush2.msra.mxu0 0.0
        %5893 = vmatprep.subr.mxu0 0.0
        %5894 = vmatpush2.msra.mxu0 0.0
        %5895 = vmatprep.subr.mxu0 0.0
        %5896 = vmatpush2.msra.mxu0 0.0
        %5897 = vmatprep.subr.mxu0 0.0
        %5898 = vmatpush2.msra.mxu0 0.0
        %5899 = vmatprep.subr.mxu0 0.0
        %5900 = vmatpush2.msra.mxu0 0.0
        %5901 = vmatprep.subr.mxu0 0.0
        %5902 = vmatpush2.msra.mxu0 0.0
        %5903 = vmatprep.subr.mxu0 0.0
        %5904 = vmatpush2.msra.mxu0 0.0
        %5905 = vmatprep.mubr.f32.mxu0 0.0
        %5906 = vmatmul.mubr.f32.gmra.mxu0 %v5746
        %v5907 = vpop.f32.mrf.mxu0
        %v5908 = vadd.f32 %v5587, %v5907
        %v5909 = vpop.f32.mrf.mxu0
        %5910 = vmatprep.mubr.f32.mxu0 0.0
        %5911 = vmatmul.mubr.f32.gmra.mxu0 %v5749
        %v5912 = vpop.f32.mrf.mxu0
        %v5913 = vadd.f32 %v5592, %v5912
        %v5914 = vpop.f32.mrf.mxu0
        %5915 = vmatprep.mubr.f32.mxu0 0.0
        %5916 = vmatmul.mubr.f32.gmra.mxu0 %v5752
        %v5917 = vpop.f32.mrf.mxu0
        %v5918 = vadd.f32 %v5597, %v5917
        %v5919 = vpop.f32.mrf.mxu0
        %5920 = vmatprep.mubr.f32.mxu0 0.0
        %5921 = vmatmul.mubr.f32.gmra.mxu0 %v5755
        %v5922 = vpop.f32.mrf.mxu0
        %v5923 = vadd.f32 %v5602, %v5922
        %v5924 = vpop.f32.mrf.mxu0
        %5925 = vmatprep.mubr.f32.mxu0 0.0
        %5926 = vmatmul.mubr.f32.gmra.mxu0 %v5758
        %v5927 = vpop.f32.mrf.mxu0
        %v5928 = vadd.f32 %v5607, %v5927
        %v5929 = vpop.f32.mrf.mxu0
        %5930 = vmatprep.mubr.f32.mxu0 0.0
        %5931 = vmatmul.mubr.f32.gmra.mxu0 %v5761
        %v5932 = vpop.f32.mrf.mxu0
        %v5933 = vadd.f32 %v5612, %v5932
        %v5934 = vpop.f32.mrf.mxu0
        %5935 = vmatprep.mubr.f32.mxu0 0.0
        %5936 = vmatmul.mubr.f32.gmra.mxu0 %v5764
        %v5937 = vpop.f32.mrf.mxu0
        %v5938 = vadd.f32 %v5617, %v5937
        %v5939 = vpop.f32.mrf.mxu0
        %5940 = vmatprep.mubr.f32.mxu0 0.0
        %5941 = vmatmul.mubr.f32.gmra.mxu0 %v5767
        %v5942 = vpop.f32.mrf.mxu0
        %v5943 = vadd.f32 %v5622, %v5942
        %v5944 = vpop.f32.mrf.mxu0
        %5945 = vmatprep.mubr.f32.mxu0 0.0
        %5946 = vmatmul.mubr.f32.gmra.mxu0 %v5770
        %v5947 = vpop.f32.mrf.mxu0
        %v5948 = vadd.f32 %v5627, %v5947
        %v5949 = vpop.f32.mrf.mxu0
        %5950 = vmatprep.mubr.f32.mxu0 0.0
        %5951 = vmatmul.mubr.f32.gmra.mxu0 %v5773
        %v5952 = vpop.f32.mrf.mxu0
        %v5953 = vadd.f32 %v5632, %v5952
        %v5954 = vpop.f32.mrf.mxu0
        %5955 = vmatprep.mubr.f32.mxu0 0.0
        %5956 = vmatmul.mubr.f32.gmra.mxu0 %v5776
        %v5957 = vpop.f32.mrf.mxu0
        %v5958 = vadd.f32 %v5637, %v5957
        %v5959 = vpop.f32.mrf.mxu0
        %5960 = vmatprep.mubr.f32.mxu0 0.0
        %5961 = vmatmul.mubr.f32.gmra.mxu0 %v5779
        %v5962 = vpop.f32.mrf.mxu0
        %v5963 = vadd.f32 %v5642, %v5962
        %v5964 = vpop.f32.mrf.mxu0
        %5965 = vmatprep.mubr.f32.mxu0 0.0
        %5966 = vmatmul.mubr.f32.gmra.mxu0 %v5782
        %v5967 = vpop.f32.mrf.mxu0
        %v5968 = vadd.f32 %v5647, %v5967
        %v5969 = vpop.f32.mrf.mxu0
        %5970 = vmatprep.mubr.f32.mxu0 0.0
        %5971 = vmatmul.mubr.f32.gmra.mxu0 %v5785
        %v5972 = vpop.f32.mrf.mxu0
        %v5973 = vadd.f32 %v5652, %v5972
        %v5974 = vpop.f32.mrf.mxu0
        %5975 = vmatprep.mubr.f32.mxu0 0.0
        %5976 = vmatmul.mubr.f32.gmra.mxu0 %v5788
        %v5977 = vpop.f32.mrf.mxu0
        %v5978 = vadd.f32 %v5657, %v5977
        %v5979 = vpop.f32.mrf.mxu0
        %5980 = vmatprep.mubr.f32.mxu0 0.0
        %5981 = vmatmul.mubr.f32.gmra.mxu0 %v5791
        %v5982 = vpop.f32.mrf.mxu0
        %v5983 = vadd.f32 %v5662, %v5982
        %v5984 = vpop.f32.mrf.mxu0
        %5985 = vmatprep.mubr.f32.mxu0 0.0
        %5986 = vmatmul.mubr.f32.gmra.mxu0 %v5794
        %v5987 = vpop.f32.mrf.mxu0
        %v5988 = vadd.f32 %v5667, %v5987
        %v5989 = vpop.f32.mrf.mxu0
        %5990 = vmatprep.mubr.f32.mxu0 0.0
        %5991 = vmatmul.mubr.f32.gmra.mxu0 %v5797
        %v5992 = vpop.f32.mrf.mxu0
        %v5993 = vadd.f32 %v5672, %v5992
        %v5994 = vpop.f32.mrf.mxu0
        %5995 = vmatprep.mubr.f32.mxu0 0.0
        %5996 = vmatmul.mubr.f32.gmra.mxu0 %v5800
        %v5997 = vpop.f32.mrf.mxu0
        %v5998 = vadd.f32 %v5677, %v5997
        %v5999 = vpop.f32.mrf.mxu0
        %6000 = vmatprep.mubr.f32.mxu0 0.0
        %6001 = vmatmul.mubr.f32.gmra.mxu0 %v5803
        %v6002 = vpop.f32.mrf.mxu0
        %v6003 = vadd.f32 %v5682, %v6002
        %v6004 = vpop.f32.mrf.mxu0
        %6005 = vmatprep.mubr.f32.mxu0 0.0
        %6006 = vmatmul.mubr.f32.gmra.mxu0 %v5806
        %v6007 = vpop.f32.mrf.mxu0
        %v6008 = vadd.f32 %v5687, %v6007
        %v6009 = vpop.f32.mrf.mxu0
        %6010 = vmatprep.mubr.f32.mxu0 0.0
        %6011 = vmatmul.mubr.f32.gmra.mxu0 %v5809
        %v6012 = vpop.f32.mrf.mxu0
        %v6013 = vadd.f32 %v5692, %v6012
        %v6014 = vpop.f32.mrf.mxu0
        %6015 = vmatprep.mubr.f32.mxu0 0.0
        %6016 = vmatmul.mubr.f32.gmra.mxu0 %v5812
        %v6017 = vpop.f32.mrf.mxu0
        %v6018 = vadd.f32 %v5697, %v6017
        %v6019 = vpop.f32.mrf.mxu0
        %6020 = vmatprep.mubr.f32.mxu0 0.0
        %6021 = vmatmul.mubr.f32.gmra.mxu0 %v5815
        %v6022 = vpop.f32.mrf.mxu0
        %v6023 = vadd.f32 %v5702, %v6022
        %v6024 = vpop.f32.mrf.mxu0
        %6025 = vmatprep.mubr.f32.mxu0 0.0
        %6026 = vmatmul.mubr.f32.gmra.mxu0 %v5818
        %v6027 = vpop.f32.mrf.mxu0
        %v6028 = vadd.f32 %v5707, %v6027
        %v6029 = vpop.f32.mrf.mxu0
        %6030 = vmatprep.mubr.f32.mxu0 0.0
        %6031 = vmatmul.mubr.f32.gmra.mxu0 %v5821
        %v6032 = vpop.f32.mrf.mxu0
        %v6033 = vadd.f32 %v5712, %v6032
        %v6034 = vpop.f32.mrf.mxu0
        %6035 = vmatprep.mubr.f32.mxu0 0.0
        %6036 = vmatmul.mubr.f32.gmra.mxu0 %v5824
        %v6037 = vpop.f32.mrf.mxu0
        %v6038 = vadd.f32 %v5717, %v6037
        %v6039 = vpop.f32.mrf.mxu0
        %6040 = vmatprep.mubr.f32.mxu0 0.0
        %6041 = vmatmul.mubr.f32.gmra.mxu0 %v5827
        %v6042 = vpop.f32.mrf.mxu0
        %v6043 = vadd.f32 %v5722, %v6042
        %v6044 = vpop.f32.mrf.mxu0
        %6045 = vmatprep.mubr.f32.mxu0 0.0
        %6046 = vmatmul.mubr.f32.gmra.mxu0 %v5830
        %v6047 = vpop.f32.mrf.mxu0
        %v6048 = vadd.f32 %v5727, %v6047
        %v6049 = vpop.f32.mrf.mxu0
        %6050 = vmatprep.mubr.f32.mxu0 0.0
        %6051 = vmatmul.mubr.f32.gmra.mxu0 %v5833
        %v6052 = vpop.f32.mrf.mxu0
        %v6053 = vadd.f32 %v5732, %v6052
        %v6054 = vpop.f32.mrf.mxu0
        %6055 = vmatprep.mubr.f32.mxu0 0.0
        %6056 = vmatmul.mubr.f32.gmra.mxu0 %v5836
        %v6057 = vpop.f32.mrf.mxu0
        %v6058 = vadd.f32 %v5737, %v6057
        %v6059 = vpop.f32.mrf.mxu0
        %6060 = vmatprep.mubr.f32.mxu0 0.0
        %6061 = vmatmul.mubr.f32.gmra.mxu0 %v5839
        %v6062 = vpop.f32.mrf.mxu0
        %v6063 = vadd.f32 %v5742, %v6062
        %v6064 = vpop.f32.mrf.mxu0
        %6065 = vdwg.mxu0
        %v6066 = vadd.f32 %v2348, %v5908
        %v6067 = vadd.f32 %v2350, %v5913
        %v6068 = vadd.f32 %v2353, %v5918
        %v6069 = vadd.f32 %v2355, %v5923
        %v6070 = vadd.f32 %v2358, %v5928
        %v6071 = vadd.f32 %v2360, %v5933
        %v6072 = vadd.f32 %v2363, %v5938
        %v6073 = vadd.f32 %v2365, %v5943
        %v6074 = vadd.f32 %v2368, %v5948
        %v6075 = vadd.f32 %v2370, %v5953
        %v6076 = vadd.f32 %v2373, %v5958
        %v6077 = vadd.f32 %v2375, %v5963
        %v6078 = vadd.f32 %v2378, %v5968
        %v6079 = vadd.f32 %v2380, %v5973
        %v6080 = vadd.f32 %v2383, %v5978
        %v6081 = vadd.f32 %v2385, %v5983
        %v6082 = vadd.f32 %v2388, %v5988
        %v6083 = vadd.f32 %v2390, %v5993
        %v6084 = vadd.f32 %v2393, %v5998
        %v6085 = vadd.f32 %v2395, %v6003
        %v6086 = vadd.f32 %v2398, %v6008
        %v6087 = vadd.f32 %v2400, %v6013
        %v6088 = vadd.f32 %v2403, %v6018
        %v6089 = vadd.f32 %v2405, %v6023
        %v6090 = vadd.f32 %v2408, %v6028
        %v6091 = vadd.f32 %v2410, %v6033
        %v6092 = vadd.f32 %v2413, %v6038
        %v6093 = vadd.f32 %v2415, %v6043
        %v6094 = vadd.f32 %v2418, %v6048
        %v6095 = vadd.f32 %v2420, %v6053
        %v6096 = vadd.f32 %v2423, %v6058
        %v6097 = vadd.f32 %v2425, %v6063
        %v6098 = vld [vmem:[%s7] sm:$0x1]
        %v6100 = vlaneseq
        %v6101 = vshrl.u32 %v6100, 7
        %v6102 = vsub.s32 0, %v6101
        %v6103 = vrot.slane %v6098, %v6102
        %v6105 = vadd.f32 %v6066, %v6103
        %v6106 = vadd.f32 %v6067, %v6103
        %v6107 = vadd.f32 %v6068, %v6103
        %v6108 = vadd.f32 %v6069, %v6103
        %v6109 = vadd.f32 %v6070, %v6103
        %v6110 = vadd.f32 %v6071, %v6103
        %v6111 = vadd.f32 %v6072, %v6103
        %v6112 = vadd.f32 %v6073, %v6103
        %v6113 = vadd.f32 %v6074, %v6103
        %v6114 = vadd.f32 %v6075, %v6103
        %v6115 = vadd.f32 %v6076, %v6103
        %v6116 = vadd.f32 %v6077, %v6103
        %v6117 = vadd.f32 %v6078, %v6103
        %v6118 = vadd.f32 %v6079, %v6103
        %v6119 = vadd.f32 %v6080, %v6103
        %v6120 = vadd.f32 %v6081, %v6103
        %v6121 = vadd.f32 %v6082, %v6103
        %v6122 = vadd.f32 %v6083, %v6103
        %v6123 = vadd.f32 %v6084, %v6103
        %v6124 = vadd.f32 %v6085, %v6103
        %v6125 = vadd.f32 %v6086, %v6103
        %v6126 = vadd.f32 %v6087, %v6103
        %v6127 = vadd.f32 %v6088, %v6103
        %v6128 = vadd.f32 %v6089, %v6103
        %v6129 = vadd.f32 %v6090, %v6103
        %v6130 = vadd.f32 %v6091, %v6103
        %v6131 = vadd.f32 %v6092, %v6103
        %v6132 = vadd.f32 %v6093, %v6103
        %v6133 = vadd.f32 %v6094, %v6103
        %v6134 = vadd.f32 %v6095, %v6103
        %v6135 = vadd.f32 %v6096, %v6103
        %v6136 = vadd.f32 %v6097, %v6103
        %v6137 = vld [vmem:[%s8] sm:$0xff]
        %v6138 = vld [vmem:[%s8 + $0x8] sm:$0xff]
        %v6139 = vld [vmem:[%s8 + $0x10] sm:$0xff]
        %v6140 = vld [vmem:[%s8 + $0x18] sm:$0xff]
        %v6141 = vld [vmem:[%s9] sm:$0x1]
        %v6143 = vlaneseq
        %v6144 = vshrl.u32 %v6143, 7
        %v6145 = vsub.s32 0, %v6144
        %v6146 = vrot.slane %v6141, %v6145
        %v6149 = vsel %vm2469, %v6105, 0
        %v6152 = vsel %vm2469, %v6106, 0
        %v6155 = vsel %vm2469, %v6107, 0
        %v6158 = vsel %vm2469, %v6108, 0
        %v6161 = vsel %vm2469, %v6109, 0
        %v6164 = vsel %vm2469, %v6110, 0
        %v6167 = vsel %vm2469, %v6111, 0
        %v6170 = vsel %vm2469, %v6112, 0
        %v6173 = vsel %vm2469, %v6113, 0
        %v6176 = vsel %vm2469, %v6114, 0
        %v6179 = vsel %vm2469, %v6115, 0
        %v6182 = vsel %vm2469, %v6116, 0
        %v6185 = vsel %vm2469, %v6117, 0
        %v6188 = vsel %vm2469, %v6118, 0
        %v6191 = vsel %vm2469, %v6119, 0
        %v6194 = vsel %vm2469, %v6120, 0
        %v6197 = vsel %vm2469, %v6121, 0
        %v6200 = vsel %vm2469, %v6122, 0
        %v6203 = vsel %vm2469, %v6123, 0
        %v6206 = vsel %vm2469, %v6124, 0
        %v6209 = vsel %vm2469, %v6125, 0
        %v6212 = vsel %vm2469, %v6126, 0
        %v6215 = vsel %vm2469, %v6127, 0
        %v6218 = vsel %vm2469, %v6128, 0
        %v6221 = vsel %vm2469, %v6129, 0
        %v6224 = vsel %vm2469, %v6130, 0
        %v6227 = vsel %vm2469, %v6131, 0
        %v6230 = vsel %vm2469, %v6132, 0
        %v6233 = vsel %vm2469, %v6133, 0
        %v6236 = vsel %vm2469, %v6134, 0
        %v6239 = vsel %vm2469, %v6135, 0
        %v6242 = vsel %vm2469, %v6136, 0
        %6244 = vmatprep.subr.mxu0 0.0
        %6245 = vmatpush1.msra.mxu0 0.0
        %6246 = vmatprep.subr.mxu0 0.0
        %6247 = vmatpush1.msra.mxu0 0.0
        %6248 = vmatprep.subr.mxu0 0.0
        %6249 = vmatpush1.msra.mxu0 0.0
        %6250 = vmatprep.subr.mxu0 0.0
        %6251 = vmatpush1.msra.mxu0 0.0
        %6252 = vmatprep.subr.mxu0 0.0
        %6253 = vmatpush1.msra.mxu0 0.0
        %6254 = vmatprep.subr.mxu0 0.0
        %6255 = vmatpush1.msra.mxu0 0.0
        %6256 = vmatprep.subr.mxu0 0.0
        %6257 = vmatpush1.msra.mxu0 0.0
        %6258 = vmatprep.subr.mxu0 0.0
        %6259 = vmatpush1.msra.mxu0 0.0
        %6260 = vmatprep.subr.mxu0 0.0
        %6261 = vmatpush1.msra.mxu0 0.0
        %6262 = vmatprep.subr.mxu0 0.0
        %6263 = vmatpush1.msra.mxu0 0.0
        %6264 = vmatprep.subr.mxu0 0.0
        %6265 = vmatpush1.msra.mxu0 0.0
        %6266 = vmatprep.subr.mxu0 0.0
        %6267 = vmatpush1.msra.mxu0 0.0
        %6268 = vmatprep.subr.mxu0 0.0
        %6269 = vmatpush1.msra.mxu0 %v6140
        %6270 = vmatprep.subr.mxu0 0.0
        %6271 = vmatpush1.msra.mxu0 %v6139
        %6272 = vmatprep.subr.mxu0 0.0
        %6273 = vmatpush1.msra.mxu0 %v6138
        %6274 = vmatprep.subr.mxu0 0.0
        %6275 = vmatpush1.msra.mxu0 %v6137
        %6276 = vmatprep.subr.mxu0 0.0
        %6277 = vmatpush2.msra.mxu0 0.0
        %6278 = vmatprep.subr.mxu0 0.0
        %6279 = vmatpush2.msra.mxu0 0.0
        %6280 = vmatprep.subr.mxu0 0.0
        %6281 = vmatpush2.msra.mxu0 0.0
        %6282 = vmatprep.subr.mxu0 0.0
        %6283 = vmatpush2.msra.mxu0 0.0
        %6284 = vmatprep.subr.mxu0 0.0
        %6285 = vmatpush2.msra.mxu0 0.0
        %6286 = vmatprep.subr.mxu0 0.0
        %6287 = vmatpush2.msra.mxu0 0.0
        %6288 = vmatprep.subr.mxu0 0.0
        %6289 = vmatpush2.msra.mxu0 0.0
        %6290 = vmatprep.subr.mxu0 0.0
        %6291 = vmatpush2.msra.mxu0 0.0
        %6292 = vmatprep.subr.mxu0 0.0
        %6293 = vmatpush2.msra.mxu0 0.0
        %6294 = vmatprep.subr.mxu0 0.0
        %6295 = vmatpush2.msra.mxu0 0.0
        %6296 = vmatprep.subr.mxu0 0.0
        %6297 = vmatpush2.msra.mxu0 0.0
        %6298 = vmatprep.subr.mxu0 0.0
        %6299 = vmatpush2.msra.mxu0 0.0
        %6300 = vmatprep.subr.mxu0 0.0
        %6301 = vmatpush2.msra.mxu0 0.0
        %6302 = vmatprep.subr.mxu0 0.0
        %6303 = vmatpush2.msra.mxu0 0.0
        %6304 = vmatprep.subr.mxu0 0.0
        %6305 = vmatpush2.msra.mxu0 0.0
        %6306 = vmatprep.subr.mxu0 0.0
        %6307 = vmatpush2.msra.mxu0 0.0
        %6308 = vmatprep.mubr.f32.mxu0 0.0
        %6309 = vmatmul.mubr.f32.gmra.mxu0 %v6149
        %v6310 = vpop.f32.mrf.mxu0
        %v6311 = vadd.f32 %v6146, %v6310
        %v6312 = vpop.f32.mrf.mxu0
        %6313 = vmatprep.mubr.f32.mxu0 0.0
        %6314 = vmatmul.mubr.f32.gmra.mxu0 %v6152
        %v6315 = vpop.f32.mrf.mxu0
        %v6316 = vadd.f32 %v6146, %v6315
        %v6317 = vpop.f32.mrf.mxu0
        %6318 = vmatprep.mubr.f32.mxu0 0.0
        %6319 = vmatmul.mubr.f32.gmra.mxu0 %v6155
        %v6320 = vpop.f32.mrf.mxu0
        %v6321 = vadd.f32 %v6146, %v6320
        %v6322 = vpop.f32.mrf.mxu0
        %6323 = vmatprep.mubr.f32.mxu0 0.0
        %6324 = vmatmul.mubr.f32.gmra.mxu0 %v6158
        %v6325 = vpop.f32.mrf.mxu0
        %v6326 = vadd.f32 %v6146, %v6325
        %v6327 = vpop.f32.mrf.mxu0
        %6328 = vmatprep.mubr.f32.mxu0 0.0
        %6329 = vmatmul.mubr.f32.gmra.mxu0 %v6161
        %v6330 = vpop.f32.mrf.mxu0
        %v6331 = vadd.f32 %v6146, %v6330
        %v6332 = vpop.f32.mrf.mxu0
        %6333 = vmatprep.mubr.f32.mxu0 0.0
        %6334 = vmatmul.mubr.f32.gmra.mxu0 %v6164
        %v6335 = vpop.f32.mrf.mxu0
        %v6336 = vadd.f32 %v6146, %v6335
        %v6337 = vpop.f32.mrf.mxu0
        %6338 = vmatprep.mubr.f32.mxu0 0.0
        %6339 = vmatmul.mubr.f32.gmra.mxu0 %v6167
        %v6340 = vpop.f32.mrf.mxu0
        %v6341 = vadd.f32 %v6146, %v6340
        %v6342 = vpop.f32.mrf.mxu0
        %6343 = vmatprep.mubr.f32.mxu0 0.0
        %6344 = vmatmul.mubr.f32.gmra.mxu0 %v6170
        %v6345 = vpop.f32.mrf.mxu0
        %v6346 = vadd.f32 %v6146, %v6345
        %v6347 = vpop.f32.mrf.mxu0
        %6348 = vmatprep.mubr.f32.mxu0 0.0
        %6349 = vmatmul.mubr.f32.gmra.mxu0 %v6173
        %v6350 = vpop.f32.mrf.mxu0
        %v6351 = vadd.f32 %v6146, %v6350
        %v6352 = vpop.f32.mrf.mxu0
        %6353 = vmatprep.mubr.f32.mxu0 0.0
        %6354 = vmatmul.mubr.f32.gmra.mxu0 %v6176
        %v6355 = vpop.f32.mrf.mxu0
        %v6356 = vadd.f32 %v6146, %v6355
        %v6357 = vpop.f32.mrf.mxu0
        %6358 = vmatprep.mubr.f32.mxu0 0.0
        %6359 = vmatmul.mubr.f32.gmra.mxu0 %v6179
        %v6360 = vpop.f32.mrf.mxu0
        %v6361 = vadd.f32 %v6146, %v6360
        %v6362 = vpop.f32.mrf.mxu0
        %6363 = vmatprep.mubr.f32.mxu0 0.0
        %6364 = vmatmul.mubr.f32.gmra.mxu0 %v6182
        %v6365 = vpop.f32.mrf.mxu0
        %v6366 = vadd.f32 %v6146, %v6365
        %v6367 = vpop.f32.mrf.mxu0
        %6368 = vmatprep.mubr.f32.mxu0 0.0
        %6369 = vmatmul.mubr.f32.gmra.mxu0 %v6185
        %v6370 = vpop.f32.mrf.mxu0
        %v6371 = vadd.f32 %v6146, %v6370
        %v6372 = vpop.f32.mrf.mxu0
        %6373 = vmatprep.mubr.f32.mxu0 0.0
        %6374 = vmatmul.mubr.f32.gmra.mxu0 %v6188
        %v6375 = vpop.f32.mrf.mxu0
        %v6376 = vadd.f32 %v6146, %v6375
        %v6377 = vpop.f32.mrf.mxu0
        %6378 = vmatprep.mubr.f32.mxu0 0.0
        %6379 = vmatmul.mubr.f32.gmra.mxu0 %v6191
        %v6380 = vpop.f32.mrf.mxu0
        %v6381 = vadd.f32 %v6146, %v6380
        %v6382 = vpop.f32.mrf.mxu0
        %6383 = vmatprep.mubr.f32.mxu0 0.0
        %6384 = vmatmul.mubr.f32.gmra.mxu0 %v6194
        %v6385 = vpop.f32.mrf.mxu0
        %v6386 = vadd.f32 %v6146, %v6385
        %v6387 = vpop.f32.mrf.mxu0
        %6388 = vmatprep.mubr.f32.mxu0 0.0
        %6389 = vmatmul.mubr.f32.gmra.mxu0 %v6197
        %v6390 = vpop.f32.mrf.mxu0
        %v6391 = vadd.f32 %v6146, %v6390
        %v6392 = vpop.f32.mrf.mxu0
        %6393 = vmatprep.mubr.f32.mxu0 0.0
        %6394 = vmatmul.mubr.f32.gmra.mxu0 %v6200
        %v6395 = vpop.f32.mrf.mxu0
        %v6396 = vadd.f32 %v6146, %v6395
        %v6397 = vpop.f32.mrf.mxu0
        %6398 = vmatprep.mubr.f32.mxu0 0.0
        %6399 = vmatmul.mubr.f32.gmra.mxu0 %v6203
        %v6400 = vpop.f32.mrf.mxu0
        %v6401 = vadd.f32 %v6146, %v6400
        %v6402 = vpop.f32.mrf.mxu0
        %6403 = vmatprep.mubr.f32.mxu0 0.0
        %6404 = vmatmul.mubr.f32.gmra.mxu0 %v6206
        %v6405 = vpop.f32.mrf.mxu0
        %v6406 = vadd.f32 %v6146, %v6405
        %v6407 = vpop.f32.mrf.mxu0
        %6408 = vmatprep.mubr.f32.mxu0 0.0
        %6409 = vmatmul.mubr.f32.gmra.mxu0 %v6209
        %v6410 = vpop.f32.mrf.mxu0
        %v6411 = vadd.f32 %v6146, %v6410
        %v6412 = vpop.f32.mrf.mxu0
        %6413 = vmatprep.mubr.f32.mxu0 0.0
        %6414 = vmatmul.mubr.f32.gmra.mxu0 %v6212
        %v6415 = vpop.f32.mrf.mxu0
        %v6416 = vadd.f32 %v6146, %v6415
        %v6417 = vpop.f32.mrf.mxu0
        %6418 = vmatprep.mubr.f32.mxu0 0.0
        %6419 = vmatmul.mubr.f32.gmra.mxu0 %v6215
        %v6420 = vpop.f32.mrf.mxu0
        %v6421 = vadd.f32 %v6146, %v6420
        %v6422 = vpop.f32.mrf.mxu0
        %6423 = vmatprep.mubr.f32.mxu0 0.0
        %6424 = vmatmul.mubr.f32.gmra.mxu0 %v6218
        %v6425 = vpop.f32.mrf.mxu0
        %v6426 = vadd.f32 %v6146, %v6425
        %v6427 = vpop.f32.mrf.mxu0
        %6428 = vmatprep.mubr.f32.mxu0 0.0
        %6429 = vmatmul.mubr.f32.gmra.mxu0 %v6221
        %v6430 = vpop.f32.mrf.mxu0
        %v6431 = vadd.f32 %v6146, %v6430
        %v6432 = vpop.f32.mrf.mxu0
        %6433 = vmatprep.mubr.f32.mxu0 0.0
        %6434 = vmatmul.mubr.f32.gmra.mxu0 %v6224
        %v6435 = vpop.f32.mrf.mxu0
        %v6436 = vadd.f32 %v6146, %v6435
        %v6437 = vpop.f32.mrf.mxu0
        %6438 = vmatprep.mubr.f32.mxu0 0.0
        %6439 = vmatmul.mubr.f32.gmra.mxu0 %v6227
        %v6440 = vpop.f32.mrf.mxu0
        %v6441 = vadd.f32 %v6146, %v6440
        %v6442 = vpop.f32.mrf.mxu0
        %6443 = vmatprep.mubr.f32.mxu0 0.0
        %6444 = vmatmul.mubr.f32.gmra.mxu0 %v6230
        %v6445 = vpop.f32.mrf.mxu0
        %v6446 = vadd.f32 %v6146, %v6445
        %v6447 = vpop.f32.mrf.mxu0
        %6448 = vmatprep.mubr.f32.mxu0 0.0
        %6449 = vmatmul.mubr.f32.gmra.mxu0 %v6233
        %v6450 = vpop.f32.mrf.mxu0
        %v6451 = vadd.f32 %v6146, %v6450
        %v6452 = vpop.f32.mrf.mxu0
        %6453 = vmatprep.mubr.f32.mxu0 0.0
        %6454 = vmatmul.mubr.f32.gmra.mxu0 %v6236
        %v6455 = vpop.f32.mrf.mxu0
        %v6456 = vadd.f32 %v6146, %v6455
        %v6457 = vpop.f32.mrf.mxu0
        %6458 = vmatprep.mubr.f32.mxu0 0.0
        %6459 = vmatmul.mubr.f32.gmra.mxu0 %v6239
        %v6460 = vpop.f32.mrf.mxu0
        %v6461 = vadd.f32 %v6146, %v6460
        %v6462 = vpop.f32.mrf.mxu0
        %6463 = vmatprep.mubr.f32.mxu0 0.0
        %6464 = vmatmul.mubr.f32.gmra.mxu0 %v6242
        %v6465 = vpop.f32.mrf.mxu0
        %v6466 = vadd.f32 %v6146, %v6465
        %v6467 = vpop.f32.mrf.mxu0
        %6468 = vdwg.mxu0
        %v6469 = vmul.f32 %v6311, %v6311
        %v6470 = vmul.f32 %v6316, %v6316
        %v6471 = vmul.f32 %v6321, %v6321
        %v6472 = vmul.f32 %v6326, %v6326
        %v6473 = vmul.f32 %v6331, %v6331
        %v6474 = vmul.f32 %v6336, %v6336
        %v6475 = vmul.f32 %v6341, %v6341
        %v6476 = vmul.f32 %v6346, %v6346
        %v6477 = vmul.f32 %v6351, %v6351
        %v6478 = vmul.f32 %v6356, %v6356
        %v6479 = vmul.f32 %v6361, %v6361
        %v6480 = vmul.f32 %v6366, %v6366
        %v6481 = vmul.f32 %v6371, %v6371
        %v6482 = vmul.f32 %v6376, %v6376
        %v6483 = vmul.f32 %v6381, %v6381
        %v6484 = vmul.f32 %v6386, %v6386
        %v6485 = vmul.f32 %v6391, %v6391
        %v6486 = vmul.f32 %v6396, %v6396
        %v6487 = vmul.f32 %v6401, %v6401
        %v6488 = vmul.f32 %v6406, %v6406
        %v6489 = vmul.f32 %v6411, %v6411
        %v6490 = vmul.f32 %v6416, %v6416
        %v6491 = vmul.f32 %v6421, %v6421
        %v6492 = vmul.f32 %v6426, %v6426
        %v6493 = vmul.f32 %v6431, %v6431
        %v6494 = vmul.f32 %v6436, %v6436
        %v6495 = vmul.f32 %v6441, %v6441
        %v6496 = vmul.f32 %v6446, %v6446
        %v6497 = vmul.f32 %v6451, %v6451
        %v6498 = vmul.f32 %v6456, %v6456
        %v6499 = vmul.f32 %v6461, %v6461
        %v6500 = vmul.f32 %v6466, %v6466
        %v6501 = vmul.f32 %v6311, %v6469
        %v6502 = vmul.f32 %v6316, %v6470
        %v6503 = vmul.f32 %v6321, %v6471
        %v6504 = vmul.f32 %v6326, %v6472
        %v6505 = vmul.f32 %v6331, %v6473
        %v6506 = vmul.f32 %v6336, %v6474
        %v6507 = vmul.f32 %v6341, %v6475
        %v6508 = vmul.f32 %v6346, %v6476
        %v6509 = vmul.f32 %v6351, %v6477
        %v6510 = vmul.f32 %v6356, %v6478
        %v6511 = vmul.f32 %v6361, %v6479
        %v6512 = vmul.f32 %v6366, %v6480
        %v6513 = vmul.f32 %v6371, %v6481
        %v6514 = vmul.f32 %v6376, %v6482
        %v6515 = vmul.f32 %v6381, %v6483
        %v6516 = vmul.f32 %v6386, %v6484
        %v6517 = vmul.f32 %v6391, %v6485
        %v6518 = vmul.f32 %v6396, %v6486
        %v6519 = vmul.f32 %v6401, %v6487
        %v6520 = vmul.f32 %v6406, %v6488
        %v6521 = vmul.f32 %v6411, %v6489
        %v6522 = vmul.f32 %v6416, %v6490
        %v6523 = vmul.f32 %v6421, %v6491
        %v6524 = vmul.f32 %v6426, %v6492
        %v6525 = vmul.f32 %v6431, %v6493
        %v6526 = vmul.f32 %v6436, %v6494
        %v6527 = vmul.f32 %v6441, %v6495
        %v6528 = vmul.f32 %v6446, %v6496
        %v6529 = vmul.f32 %v6451, %v6497
        %v6530 = vmul.f32 %v6456, %v6498
        %v6531 = vmul.f32 %v6461, %v6499
        %v6532 = vmul.f32 %v6466, %v6500
        %v6533 = vmul.f32 %v6501, 0.044715
        %v6534 = vmul.f32 %v6502, 0.044715
        %v6535 = vmul.f32 %v6503, 0.044715
        %v6536 = vmul.f32 %v6504, 0.044715
        %v6537 = vmul.f32 %v6505, 0.044715
        %v6538 = vmul.f32 %v6506, 0.044715
        %v6539 = vmul.f32 %v6507, 0.044715
        %v6540 = vmul.f32 %v6508, 0.044715
        %v6541 = vmul.f32 %v6509, 0.044715
        %v6542 = vmul.f32 %v6510, 0.044715
        %v6543 = vmul.f32 %v6511, 0.044715
        %v6544 = vmul.f32 %v6512, 0.044715
        %v6545 = vmul.f32 %v6513, 0.044715
        %v6546 = vmul.f32 %v6514, 0.044715
        %v6547 = vmul.f32 %v6515, 0.044715
        %v6548 = vmul.f32 %v6516, 0.044715
        %v6549 = vmul.f32 %v6517, 0.044715
        %v6550 = vmul.f32 %v6518, 0.044715
        %v6551 = vmul.f32 %v6519, 0.044715
        %v6552 = vmul.f32 %v6520, 0.044715
        %v6553 = vmul.f32 %v6521, 0.044715
        %v6554 = vmul.f32 %v6522, 0.044715
        %v6555 = vmul.f32 %v6523, 0.044715
        %v6556 = vmul.f32 %v6524, 0.044715
        %v6557 = vmul.f32 %v6525, 0.044715
        %v6558 = vmul.f32 %v6526, 0.044715
        %v6559 = vmul.f32 %v6527, 0.044715
        %v6560 = vmul.f32 %v6528, 0.044715
        %v6561 = vmul.f32 %v6529, 0.044715
        %v6562 = vmul.f32 %v6530, 0.044715
        %v6563 = vmul.f32 %v6531, 0.044715
        %v6564 = vmul.f32 %v6532, 0.044715
        %v6565 = vadd.f32 %v6311, %v6533
        %v6566 = vadd.f32 %v6316, %v6534
        %v6567 = vadd.f32 %v6321, %v6535
        %v6568 = vadd.f32 %v6326, %v6536
        %v6569 = vadd.f32 %v6331, %v6537
        %v6570 = vadd.f32 %v6336, %v6538
        %v6571 = vadd.f32 %v6341, %v6539
        %v6572 = vadd.f32 %v6346, %v6540
        %v6573 = vadd.f32 %v6351, %v6541
        %v6574 = vadd.f32 %v6356, %v6542
        %v6575 = vadd.f32 %v6361, %v6543
        %v6576 = vadd.f32 %v6366, %v6544
        %v6577 = vadd.f32 %v6371, %v6545
        %v6578 = vadd.f32 %v6376, %v6546
        %v6579 = vadd.f32 %v6381, %v6547
        %v6580 = vadd.f32 %v6386, %v6548
        %v6581 = vadd.f32 %v6391, %v6549
        %v6582 = vadd.f32 %v6396, %v6550
        %v6583 = vadd.f32 %v6401, %v6551
        %v6584 = vadd.f32 %v6406, %v6552
        %v6585 = vadd.f32 %v6411, %v6553
        %v6586 = vadd.f32 %v6416, %v6554
        %v6587 = vadd.f32 %v6421, %v6555
        %v6588 = vadd.f32 %v6426, %v6556
        %v6589 = vadd.f32 %v6431, %v6557
        %v6590 = vadd.f32 %v6436, %v6558
        %v6591 = vadd.f32 %v6441, %v6559
        %v6592 = vadd.f32 %v6446, %v6560
        %v6593 = vadd.f32 %v6451, %v6561
        %v6594 = vadd.f32 %v6456, %v6562
        %v6595 = vadd.f32 %v6461, %v6563
        %v6596 = vadd.f32 %v6466, %v6564
        %v6597 = vmul.f32 %v6565, 0.7978846
        %v6598 = vmul.f32 %v6566, 0.7978846
        %v6599 = vmul.f32 %v6567, 0.7978846
        %v6600 = vmul.f32 %v6568, 0.7978846
        %v6601 = vmul.f32 %v6569, 0.7978846
        %v6602 = vmul.f32 %v6570, 0.7978846
        %v6603 = vmul.f32 %v6571, 0.7978846
        %v6604 = vmul.f32 %v6572, 0.7978846
        %v6605 = vmul.f32 %v6573, 0.7978846
        %v6606 = vmul.f32 %v6574, 0.7978846
        %v6607 = vmul.f32 %v6575, 0.7978846
        %v6608 = vmul.f32 %v6576, 0.7978846
        %v6609 = vmul.f32 %v6577, 0.7978846
        %v6610 = vmul.f32 %v6578, 0.7978846
        %v6611 = vmul.f32 %v6579, 0.7978846
        %v6612 = vmul.f32 %v6580, 0.7978846
        %v6613 = vmul.f32 %v6581, 0.7978846
        %v6614 = vmul.f32 %v6582, 0.7978846
        %v6615 = vmul.f32 %v6583, 0.7978846
        %v6616 = vmul.f32 %v6584, 0.7978846
        %v6617 = vmul.f32 %v6585, 0.7978846
        %v6618 = vmul.f32 %v6586, 0.7978846
        %v6619 = vmul.f32 %v6587, 0.7978846
        %v6620 = vmul.f32 %v6588, 0.7978846
        %v6621 = vmul.f32 %v6589, 0.7978846
        %v6622 = vmul.f32 %v6590, 0.7978846
        %v6623 = vmul.f32 %v6591, 0.7978846
        %v6624 = vmul.f32 %v6592, 0.7978846
        %v6625 = vmul.f32 %v6593, 0.7978846
        %v6626 = vmul.f32 %v6594, 0.7978846
        %v6627 = vmul.f32 %v6595, 0.7978846
        %v6628 = vmul.f32 %v6596, 0.7978846
        %v6629 = vtanh.pop %v6597
        %v6630 = vtanh.pop %v6598
        %v6631 = vtanh.pop %v6599
        %v6632 = vtanh.pop %v6600
        %v6633 = vtanh.pop %v6601
        %v6634 = vtanh.pop %v6602
        %v6635 = vtanh.pop %v6603
        %v6636 = vtanh.pop %v6604
        %v6637 = vtanh.pop %v6605
        %v6638 = vtanh.pop %v6606
        %v6639 = vtanh.pop %v6607
        %v6640 = vtanh.pop %v6608
        %v6641 = vtanh.pop %v6609
        %v6642 = vtanh.pop %v6610
        %v6643 = vtanh.pop %v6611
        %v6644 = vtanh.pop %v6612
        %v6645 = vtanh.pop %v6613
        %v6646 = vtanh.pop %v6614
        %v6647 = vtanh.pop %v6615
        %v6648 = vtanh.pop %v6616
        %v6649 = vtanh.pop %v6617
        %v6650 = vtanh.pop %v6618
        %v6651 = vtanh.pop %v6619
        %v6652 = vtanh.pop %v6620
        %v6653 = vtanh.pop %v6621
        %v6654 = vtanh.pop %v6622
        %v6655 = vtanh.pop %v6623
        %v6656 = vtanh.pop %v6624
        %v6657 = vtanh.pop %v6625
        %v6658 = vtanh.pop %v6626
        %v6659 = vtanh.pop %v6627
        %v6660 = vtanh.pop %v6628
        %v6661 = vadd.f32 %v6629, 1.0
        %v6662 = vadd.f32 %v6630, 1.0
        %v6663 = vadd.f32 %v6631, 1.0
        %v6664 = vadd.f32 %v6632, 1.0
        %v6665 = vadd.f32 %v6633, 1.0
        %v6666 = vadd.f32 %v6634, 1.0
        %v6667 = vadd.f32 %v6635, 1.0
        %v6668 = vadd.f32 %v6636, 1.0
        %v6669 = vadd.f32 %v6637, 1.0
        %v6670 = vadd.f32 %v6638, 1.0
        %v6671 = vadd.f32 %v6639, 1.0
        %v6672 = vadd.f32 %v6640, 1.0
        %v6673 = vadd.f32 %v6641, 1.0
        %v6674 = vadd.f32 %v6642, 1.0
        %v6675 = vadd.f32 %v6643, 1.0
        %v6676 = vadd.f32 %v6644, 1.0
        %v6677 = vadd.f32 %v6645, 1.0
        %v6678 = vadd.f32 %v6646, 1.0
        %v6679 = vadd.f32 %v6647, 1.0
        %v6680 = vadd.f32 %v6648, 1.0
        %v6681 = vadd.f32 %v6649, 1.0
        %v6682 = vadd.f32 %v6650, 1.0
        %v6683 = vadd.f32 %v6651, 1.0
        %v6684 = vadd.f32 %v6652, 1.0
        %v6685 = vadd.f32 %v6653, 1.0
        %v6686 = vadd.f32 %v6654, 1.0
        %v6687 = vadd.f32 %v6655, 1.0
        %v6688 = vadd.f32 %v6656, 1.0
        %v6689 = vadd.f32 %v6657, 1.0
        %v6690 = vadd.f32 %v6658, 1.0
        %v6691 = vadd.f32 %v6659, 1.0
        %v6692 = vadd.f32 %v6660, 1.0
        %v6693 = vmul.f32 %v6661, 0.5
        %v6694 = vmul.f32 %v6662, 0.5
        %v6695 = vmul.f32 %v6663, 0.5
        %v6696 = vmul.f32 %v6664, 0.5
        %v6697 = vmul.f32 %v6665, 0.5
        %v6698 = vmul.f32 %v6666, 0.5
        %v6699 = vmul.f32 %v6667, 0.5
        %v6700 = vmul.f32 %v6668, 0.5
        %v6701 = vmul.f32 %v6669, 0.5
        %v6702 = vmul.f32 %v6670, 0.5
        %v6703 = vmul.f32 %v6671, 0.5
        %v6704 = vmul.f32 %v6672, 0.5
        %v6705 = vmul.f32 %v6673, 0.5
        %v6706 = vmul.f32 %v6674, 0.5
        %v6707 = vmul.f32 %v6675, 0.5
        %v6708 = vmul.f32 %v6676, 0.5
        %v6709 = vmul.f32 %v6677, 0.5
        %v6710 = vmul.f32 %v6678, 0.5
        %v6711 = vmul.f32 %v6679, 0.5
        %v6712 = vmul.f32 %v6680, 0.5
        %v6713 = vmul.f32 %v6681, 0.5
        %v6714 = vmul.f32 %v6682, 0.5
        %v6715 = vmul.f32 %v6683, 0.5
        %v6716 = vmul.f32 %v6684, 0.5
        %v6717 = vmul.f32 %v6685, 0.5
        %v6718 = vmul.f32 %v6686, 0.5
        %v6719 = vmul.f32 %v6687, 0.5
        %v6720 = vmul.f32 %v6688, 0.5
        %v6721 = vmul.f32 %v6689, 0.5
        %v6722 = vmul.f32 %v6690, 0.5
        %v6723 = vmul.f32 %v6691, 0.5
        %v6724 = vmul.f32 %v6692, 0.5
        %v6725 = vmul.f32 %v6311, %v6693
        %v6726 = vmul.f32 %v6316, %v6694
        %v6727 = vmul.f32 %v6321, %v6695
        %v6728 = vmul.f32 %v6326, %v6696
        %v6729 = vmul.f32 %v6331, %v6697
        %v6730 = vmul.f32 %v6336, %v6698
        %v6731 = vmul.f32 %v6341, %v6699
        %v6732 = vmul.f32 %v6346, %v6700
        %v6733 = vmul.f32 %v6351, %v6701
        %v6734 = vmul.f32 %v6356, %v6702
        %v6735 = vmul.f32 %v6361, %v6703
        %v6736 = vmul.f32 %v6366, %v6704
        %v6737 = vmul.f32 %v6371, %v6705
        %v6738 = vmul.f32 %v6376, %v6706
        %v6739 = vmul.f32 %v6381, %v6707
        %v6740 = vmul.f32 %v6386, %v6708
        %v6741 = vmul.f32 %v6391, %v6709
        %v6742 = vmul.f32 %v6396, %v6710
        %v6743 = vmul.f32 %v6401, %v6711
        %v6744 = vmul.f32 %v6406, %v6712
        %v6745 = vmul.f32 %v6411, %v6713
        %v6746 = vmul.f32 %v6416, %v6714
        %v6747 = vmul.f32 %v6421, %v6715
        %v6748 = vmul.f32 %v6426, %v6716
        %v6749 = vmul.f32 %v6431, %v6717
        %v6750 = vmul.f32 %v6436, %v6718
        %v6751 = vmul.f32 %v6441, %v6719
        %v6752 = vmul.f32 %v6446, %v6720
        %v6753 = vmul.f32 %v6451, %v6721
        %v6754 = vmul.f32 %v6456, %v6722
        %v6755 = vmul.f32 %v6461, %v6723
        %v6756 = vmul.f32 %v6466, %v6724
        %v6757 = vld [vmem:[%s10] sm:$0xff]
        %v6758 = vld [vmem:[%s10 + $0x8] sm:$0xff]
        %v6759 = vld [vmem:[%s10 + $0x10] sm:$0xff]
        %v6760 = vld [vmem:[%s10 + $0x18] sm:$0xff]
        %v6761 = vld [vmem:[%s10 + $0x20] sm:$0xff]
        %v6762 = vld [vmem:[%s10 + $0x28] sm:$0xff]
        %v6763 = vld [vmem:[%s10 + $0x30] sm:$0xff]
        %v6764 = vld [vmem:[%s10 + $0x38] sm:$0xff]
        %v6765 = vld [vmem:[%s10 + $0x40] sm:$0xff]
        %v6766 = vld [vmem:[%s10 + $0x48] sm:$0xff]
        %v6767 = vld [vmem:[%s10 + $0x50] sm:$0xff]
        %v6768 = vld [vmem:[%s10 + $0x58] sm:$0xff]
        %v6769 = vld [vmem:[%s10 + $0x60] sm:$0xff]
        %v6770 = vld [vmem:[%s10 + $0x68] sm:$0xff]
        %v6771 = vld [vmem:[%s10 + $0x70] sm:$0xff]
        %v6772 = vld [vmem:[%s10 + $0x78] sm:$0xff]
        %v6773 = vld [vmem:[%s11] sm:$0x1]
        %v6775 = vlaneseq
        %v6776 = vshrl.u32 %v6775, 7
        %v6777 = vsub.s32 0, %v6776
        %v6778 = vrot.slane %v6773, %v6777
        %6780 = vmatprep.subr.mxu0 0.0
        %6781 = vmatpush1.msra.mxu0 %v6772
        %6782 = vmatprep.subr.mxu0 0.0
        %6783 = vmatpush1.msra.mxu0 %v6771
        %6784 = vmatprep.subr.mxu0 0.0
        %6785 = vmatpush1.msra.mxu0 %v6770
        %6786 = vmatprep.subr.mxu0 0.0
        %6787 = vmatpush1.msra.mxu0 %v6769
        %6788 = vmatprep.subr.mxu0 0.0
        %6789 = vmatpush1.msra.mxu0 %v6768
        %6790 = vmatprep.subr.mxu0 0.0
        %6791 = vmatpush1.msra.mxu0 %v6767
        %6792 = vmatprep.subr.mxu0 0.0
        %6793 = vmatpush1.msra.mxu0 %v6766
        %6794 = vmatprep.subr.mxu0 0.0
        %6795 = vmatpush1.msra.mxu0 %v6765
        %6796 = vmatprep.subr.mxu0 0.0
        %6797 = vmatpush1.msra.mxu0 %v6764
        %6798 = vmatprep.subr.mxu0 0.0
        %6799 = vmatpush1.msra.mxu0 %v6763
        %6800 = vmatprep.subr.mxu0 0.0
        %6801 = vmatpush1.msra.mxu0 %v6762
        %6802 = vmatprep.subr.mxu0 0.0
        %6803 = vmatpush1.msra.mxu0 %v6761
        %6804 = vmatprep.subr.mxu0 0.0
        %6805 = vmatpush1.msra.mxu0 %v6760
        %6806 = vmatprep.subr.mxu0 0.0
        %6807 = vmatpush1.msra.mxu0 %v6759
        %6808 = vmatprep.subr.mxu0 0.0
        %6809 = vmatpush1.msra.mxu0 %v6758
        %6810 = vmatprep.subr.mxu0 0.0
        %6811 = vmatpush1.msra.mxu0 %v6757
        %6812 = vmatprep.subr.mxu0 0.0
        %6813 = vmatpush2.msra.mxu0 0.0
        %6814 = vmatprep.subr.mxu0 0.0
        %6815 = vmatpush2.msra.mxu0 0.0
        %6816 = vmatprep.subr.mxu0 0.0
        %6817 = vmatpush2.msra.mxu0 0.0
        %6818 = vmatprep.subr.mxu0 0.0
        %6819 = vmatpush2.msra.mxu0 0.0
        %6820 = vmatprep.subr.mxu0 0.0
        %6821 = vmatpush2.msra.mxu0 0.0
        %6822 = vmatprep.subr.mxu0 0.0
        %6823 = vmatpush2.msra.mxu0 0.0
        %6824 = vmatprep.subr.mxu0 0.0
        %6825 = vmatpush2.msra.mxu0 0.0
        %6826 = vmatprep.subr.mxu0 0.0
        %6827 = vmatpush2.msra.mxu0 0.0
        %6828 = vmatprep.subr.mxu0 0.0
        %6829 = vmatpush2.msra.mxu0 0.0
        %6830 = vmatprep.subr.mxu0 0.0
        %6831 = vmatpush2.msra.mxu0 0.0
        %6832 = vmatprep.subr.mxu0 0.0
        %6833 = vmatpush2.msra.mxu0 0.0
        %6834 = vmatprep.subr.mxu0 0.0
        %6835 = vmatpush2.msra.mxu0 0.0
        %6836 = vmatprep.subr.mxu0 0.0
        %6837 = vmatpush2.msra.mxu0 0.0
        %6838 = vmatprep.subr.mxu0 0.0
        %6839 = vmatpush2.msra.mxu0 0.0
        %6840 = vmatprep.subr.mxu0 0.0
        %6841 = vmatpush2.msra.mxu0 0.0
        %6842 = vmatprep.subr.mxu0 0.0
        %6843 = vmatpush2.msra.mxu0 0.0
        %6844 = vmatprep.mubr.f32.mxu0 0.0
        %6845 = vmatmul.mubr.f32.gmra.mxu0 %v6725
        %v6846 = vpop.f32.mrf.mxu0
        %v6847 = vadd.f32 %v6778, %v6846
        %v6848 = vpop.f32.mrf.mxu0
        %6849 = vmatprep.mubr.f32.mxu0 0.0
        %6850 = vmatmul.mubr.f32.gmra.mxu0 %v6726
        %v6851 = vpop.f32.mrf.mxu0
        %v6852 = vadd.f32 %v6778, %v6851
        %v6853 = vpop.f32.mrf.mxu0
        %6854 = vmatprep.mubr.f32.mxu0 0.0
        %6855 = vmatmul.mubr.f32.gmra.mxu0 %v6727
        %v6856 = vpop.f32.mrf.mxu0
        %v6857 = vadd.f32 %v6778, %v6856
        %v6858 = vpop.f32.mrf.mxu0
        %6859 = vmatprep.mubr.f32.mxu0 0.0
        %6860 = vmatmul.mubr.f32.gmra.mxu0 %v6728
        %v6861 = vpop.f32.mrf.mxu0
        %v6862 = vadd.f32 %v6778, %v6861
        %v6863 = vpop.f32.mrf.mxu0
        %6864 = vmatprep.mubr.f32.mxu0 0.0
        %6865 = vmatmul.mubr.f32.gmra.mxu0 %v6729
        %v6866 = vpop.f32.mrf.mxu0
        %v6867 = vadd.f32 %v6778, %v6866
        %v6868 = vpop.f32.mrf.mxu0
        %6869 = vmatprep.mubr.f32.mxu0 0.0
        %6870 = vmatmul.mubr.f32.gmra.mxu0 %v6730
        %v6871 = vpop.f32.mrf.mxu0
        %v6872 = vadd.f32 %v6778, %v6871
        %v6873 = vpop.f32.mrf.mxu0
        %6874 = vmatprep.mubr.f32.mxu0 0.0
        %6875 = vmatmul.mubr.f32.gmra.mxu0 %v6731
        %v6876 = vpop.f32.mrf.mxu0
        %v6877 = vadd.f32 %v6778, %v6876
        %v6878 = vpop.f32.mrf.mxu0
        %6879 = vmatprep.mubr.f32.mxu0 0.0
        %6880 = vmatmul.mubr.f32.gmra.mxu0 %v6732
        %v6881 = vpop.f32.mrf.mxu0
        %v6882 = vadd.f32 %v6778, %v6881
        %v6883 = vpop.f32.mrf.mxu0
        %6884 = vmatprep.mubr.f32.mxu0 0.0
        %6885 = vmatmul.mubr.f32.gmra.mxu0 %v6733
        %v6886 = vpop.f32.mrf.mxu0
        %v6887 = vadd.f32 %v6778, %v6886
        %v6888 = vpop.f32.mrf.mxu0
        %6889 = vmatprep.mubr.f32.mxu0 0.0
        %6890 = vmatmul.mubr.f32.gmra.mxu0 %v6734
        %v6891 = vpop.f32.mrf.mxu0
        %v6892 = vadd.f32 %v6778, %v6891
        %v6893 = vpop.f32.mrf.mxu0
        %6894 = vmatprep.mubr.f32.mxu0 0.0
        %6895 = vmatmul.mubr.f32.gmra.mxu0 %v6735
        %v6896 = vpop.f32.mrf.mxu0
        %v6897 = vadd.f32 %v6778, %v6896
        %v6898 = vpop.f32.mrf.mxu0
        %6899 = vmatprep.mubr.f32.mxu0 0.0
        %6900 = vmatmul.mubr.f32.gmra.mxu0 %v6736
        %v6901 = vpop.f32.mrf.mxu0
        %v6902 = vadd.f32 %v6778, %v6901
        %v6903 = vpop.f32.mrf.mxu0
        %6904 = vmatprep.mubr.f32.mxu0 0.0
        %6905 = vmatmul.mubr.f32.gmra.mxu0 %v6737
        %v6906 = vpop.f32.mrf.mxu0
        %v6907 = vadd.f32 %v6778, %v6906
        %v6908 = vpop.f32.mrf.mxu0
        %6909 = vmatprep.mubr.f32.mxu0 0.0
        %6910 = vmatmul.mubr.f32.gmra.mxu0 %v6738
        %v6911 = vpop.f32.mrf.mxu0
        %v6912 = vadd.f32 %v6778, %v6911
        %v6913 = vpop.f32.mrf.mxu0
        %6914 = vmatprep.mubr.f32.mxu0 0.0
        %6915 = vmatmul.mubr.f32.gmra.mxu0 %v6739
        %v6916 = vpop.f32.mrf.mxu0
        %v6917 = vadd.f32 %v6778, %v6916
        %v6918 = vpop.f32.mrf.mxu0
        %6919 = vmatprep.mubr.f32.mxu0 0.0
        %6920 = vmatmul.mubr.f32.gmra.mxu0 %v6740
        %v6921 = vpop.f32.mrf.mxu0
        %v6922 = vadd.f32 %v6778, %v6921
        %v6923 = vpop.f32.mrf.mxu0
        %6924 = vmatprep.mubr.f32.mxu0 0.0
        %6925 = vmatmul.mubr.f32.gmra.mxu0 %v6741
        %v6926 = vpop.f32.mrf.mxu0
        %v6927 = vadd.f32 %v6778, %v6926
        %v6928 = vpop.f32.mrf.mxu0
        %6929 = vmatprep.mubr.f32.mxu0 0.0
        %6930 = vmatmul.mubr.f32.gmra.mxu0 %v6742
        %v6931 = vpop.f32.mrf.mxu0
        %v6932 = vadd.f32 %v6778, %v6931
        %v6933 = vpop.f32.mrf.mxu0
        %6934 = vmatprep.mubr.f32.mxu0 0.0
        %6935 = vmatmul.mubr.f32.gmra.mxu0 %v6743
        %v6936 = vpop.f32.mrf.mxu0
        %v6937 = vadd.f32 %v6778, %v6936
        %v6938 = vpop.f32.mrf.mxu0
        %6939 = vmatprep.mubr.f32.mxu0 0.0
        %6940 = vmatmul.mubr.f32.gmra.mxu0 %v6744
        %v6941 = vpop.f32.mrf.mxu0
        %v6942 = vadd.f32 %v6778, %v6941
        %v6943 = vpop.f32.mrf.mxu0
        %6944 = vmatprep.mubr.f32.mxu0 0.0
        %6945 = vmatmul.mubr.f32.gmra.mxu0 %v6745
        %v6946 = vpop.f32.mrf.mxu0
        %v6947 = vadd.f32 %v6778, %v6946
        %v6948 = vpop.f32.mrf.mxu0
        %6949 = vmatprep.mubr.f32.mxu0 0.0
        %6950 = vmatmul.mubr.f32.gmra.mxu0 %v6746
        %v6951 = vpop.f32.mrf.mxu0
        %v6952 = vadd.f32 %v6778, %v6951
        %v6953 = vpop.f32.mrf.mxu0
        %6954 = vmatprep.mubr.f32.mxu0 0.0
        %6955 = vmatmul.mubr.f32.gmra.mxu0 %v6747
        %v6956 = vpop.f32.mrf.mxu0
        %v6957 = vadd.f32 %v6778, %v6956
        %v6958 = vpop.f32.mrf.mxu0
        %6959 = vmatprep.mubr.f32.mxu0 0.0
        %6960 = vmatmul.mubr.f32.gmra.mxu0 %v6748
        %v6961 = vpop.f32.mrf.mxu0
        %v6962 = vadd.f32 %v6778, %v6961
        %v6963 = vpop.f32.mrf.mxu0
        %6964 = vmatprep.mubr.f32.mxu0 0.0
        %6965 = vmatmul.mubr.f32.gmra.mxu0 %v6749
        %v6966 = vpop.f32.mrf.mxu0
        %v6967 = vadd.f32 %v6778, %v6966
        %v6968 = vpop.f32.mrf.mxu0
        %6969 = vmatprep.mubr.f32.mxu0 0.0
        %6970 = vmatmul.mubr.f32.gmra.mxu0 %v6750
        %v6971 = vpop.f32.mrf.mxu0
        %v6972 = vadd.f32 %v6778, %v6971
        %v6973 = vpop.f32.mrf.mxu0
        %6974 = vmatprep.mubr.f32.mxu0 0.0
        %6975 = vmatmul.mubr.f32.gmra.mxu0 %v6751
        %v6976 = vpop.f32.mrf.mxu0
        %v6977 = vadd.f32 %v6778, %v6976
        %v6978 = vpop.f32.mrf.mxu0
        %6979 = vmatprep.mubr.f32.mxu0 0.0
        %6980 = vmatmul.mubr.f32.gmra.mxu0 %v6752
        %v6981 = vpop.f32.mrf.mxu0
        %v6982 = vadd.f32 %v6778, %v6981
        %v6983 = vpop.f32.mrf.mxu0
        %6984 = vmatprep.mubr.f32.mxu0 0.0
        %6985 = vmatmul.mubr.f32.gmra.mxu0 %v6753
        %v6986 = vpop.f32.mrf.mxu0
        %v6987 = vadd.f32 %v6778, %v6986
        %v6988 = vpop.f32.mrf.mxu0
        %6989 = vmatprep.mubr.f32.mxu0 0.0
        %6990 = vmatmul.mubr.f32.gmra.mxu0 %v6754
        %v6991 = vpop.f32.mrf.mxu0
        %v6992 = vadd.f32 %v6778, %v6991
        %v6993 = vpop.f32.mrf.mxu0
        %6994 = vmatprep.mubr.f32.mxu0 0.0
        %6995 = vmatmul.mubr.f32.gmra.mxu0 %v6755
        %v6996 = vpop.f32.mrf.mxu0
        %v6997 = vadd.f32 %v6778, %v6996
        %v6998 = vpop.f32.mrf.mxu0
        %6999 = vmatprep.mubr.f32.mxu0 0.0
        %7000 = vmatmul.mubr.f32.gmra.mxu0 %v6756
        %v7001 = vpop.f32.mrf.mxu0
        %v7002 = vadd.f32 %v6778, %v7001
        %v7003 = vpop.f32.mrf.mxu0
        %7004 = vdwg.mxu0
        %v7005 = vadd.f32 %v6105, %v6847
        %v7006 = vadd.f32 %v6106, %v6852
        %v7007 = vadd.f32 %v6107, %v6857
        %v7008 = vadd.f32 %v6108, %v6862
        %v7009 = vadd.f32 %v6109, %v6867
        %v7010 = vadd.f32 %v6110, %v6872
        %v7011 = vadd.f32 %v6111, %v6877
        %v7012 = vadd.f32 %v6112, %v6882
        %v7013 = vadd.f32 %v6113, %v6887
        %v7014 = vadd.f32 %v6114, %v6892
        %v7015 = vadd.f32 %v6115, %v6897
        %v7016 = vadd.f32 %v6116, %v6902
        %v7017 = vadd.f32 %v6117, %v6907
        %v7018 = vadd.f32 %v6118, %v6912
        %v7019 = vadd.f32 %v6119, %v6917
        %v7020 = vadd.f32 %v6120, %v6922
        %v7021 = vadd.f32 %v6121, %v6927
        %v7022 = vadd.f32 %v6122, %v6932
        %v7023 = vadd.f32 %v6123, %v6937
        %v7024 = vadd.f32 %v6124, %v6942
        %v7025 = vadd.f32 %v6125, %v6947
        %v7026 = vadd.f32 %v6126, %v6952
        %v7027 = vadd.f32 %v6127, %v6957
        %v7028 = vadd.f32 %v6128, %v6962
        %v7029 = vadd.f32 %v6129, %v6967
        %v7030 = vadd.f32 %v6130, %v6972
        %v7031 = vadd.f32 %v6131, %v6977
        %v7032 = vadd.f32 %v6132, %v6982
        %v7033 = vadd.f32 %v6133, %v6987
        %v7034 = vadd.f32 %v6134, %v6992
        %v7035 = vadd.f32 %v6135, %v6997
        %v7036 = vadd.f32 %v6136, %v7002
        %7037 = vst.msk [vmem:[%s406] sm:$0xff] %vm2469, %v7005
        %7038 = vst.msk [vmem:[%s406 + $0x8] sm:$0xff] %vm2469, %v7006
        %7039 = vst.msk [vmem:[%s406 + $0x10] sm:$0xff] %vm2469, %v7007
        %7040 = vst.msk [vmem:[%s406 + $0x18] sm:$0xff] %vm2469, %v7008
        %7041 = vst.msk [vmem:[%s406 + $0x20] sm:$0xff] %vm2469, %v7009
        %7042 = vst.msk [vmem:[%s406 + $0x28] sm:$0xff] %vm2469, %v7010
        %7043 = vst.msk [vmem:[%s406 + $0x30] sm:$0xff] %vm2469, %v7011
        %7044 = vst.msk [vmem:[%s406 + $0x38] sm:$0xff] %vm2469, %v7012
        %7045 = vst.msk [vmem:[%s406 + $0x40] sm:$0xff] %vm2469, %v7013
        %7046 = vst.msk [vmem:[%s406 + $0x48] sm:$0xff] %vm2469, %v7014
        %7047 = vst.msk [vmem:[%s406 + $0x50] sm:$0xff] %vm2469, %v7015
        %7048 = vst.msk [vmem:[%s406 + $0x58] sm:$0xff] %vm2469, %v7016
        %7049 = vst.msk [vmem:[%s406 + $0x60] sm:$0xff] %vm2469, %v7017
        %7050 = vst.msk [vmem:[%s406 + $0x68] sm:$0xff] %vm2469, %v7018
        %7051 = vst.msk [vmem:[%s406 + $0x70] sm:$0xff] %vm2469, %v7019
        %7052 = vst.msk [vmem:[%s406 + $0x78] sm:$0xff] %vm2469, %v7020
        %7053 = vst.msk [vmem:[%s406 + $0x80] sm:$0xff] %vm2469, %v7021
        %7054 = vst.msk [vmem:[%s406 + $0x88] sm:$0xff] %vm2469, %v7022
        %7055 = vst.msk [vmem:[%s406 + $0x90] sm:$0xff] %vm2469, %v7023
        %7056 = vst.msk [vmem:[%s406 + $0x98] sm:$0xff] %vm2469, %v7024
        %7057 = vst.msk [vmem:[%s406 + $0xa0] sm:$0xff] %vm2469, %v7025
        %7058 = vst.msk [vmem:[%s406 + $0xa8] sm:$0xff] %vm2469, %v7026
        %7059 = vst.msk [vmem:[%s406 + $0xb0] sm:$0xff] %vm2469, %v7027
        %7060 = vst.msk [vmem:[%s406 + $0xb8] sm:$0xff] %vm2469, %v7028
        %7061 = vst.msk [vmem:[%s406 + $0xc0] sm:$0xff] %vm2469, %v7029
        %7062 = vst.msk [vmem:[%s406 + $0xc8] sm:$0xff] %vm2469, %v7030
        %7063 = vst.msk [vmem:[%s406 + $0xd0] sm:$0xff] %vm2469, %v7031
        %7064 = vst.msk [vmem:[%s406 + $0xd8] sm:$0xff] %vm2469, %v7032
        %7065 = vst.msk [vmem:[%s406 + $0xe0] sm:$0xff] %vm2469, %v7033
        %7066 = vst.msk [vmem:[%s406 + $0xe8] sm:$0xff] %vm2469, %v7034
        %7067 = vst.msk [vmem:[%s406 + $0xf0] sm:$0xff] %vm2469, %v7035
        %7068 = vst.msk [vmem:[%s406 + $0xf8] sm:$0xff] %vm2469, %v7036
        %s7069 = sand.u32 %s291, 1
        %s7070 = scalar_lea.sflag [#allocation3], %s7069
        %s7071 = sand.u32 %s291, 1
        %s7072 = smul.addr %s7071, 256
        %s7073 = scalar_lea.vmem [#allocation2], %s7072
        // Predicated region
        $region69: #{swin_transformer_block.1} parent=67 // pred_check
          %p7074 = pneg %p301
        $region70: #{swin_transformer_block.1} parent=67 // pred_check_branch
          %7076 = sbr.rel (%p7074) target = $region72
        $region71: #{swin_transformer_block.1} parent=67 // pred_region
          %s7078 = ssub.s32 4096, 4096
          %7079 = vsyncadd %s7070, %s7078
          %s7080 = smul.addr %s26, 32
          %s7081 = smul.addr %s7080, 128
          %s7082 = scalar_lea.hbm %s12, %s7081
          %s7083 = sshll.u32 %s7073, 4
          %s7084 = int_to_ptr.vmem [resolvable:$true] %s7083
          %7089 = dma.vmem_to_hbm [thread:$0]  %s7084, 4096, %s7082, %s7070, 128, 128, 8
        $region72: #{swin_transformer_block.1} parent=67 // pred_fallthru
          _
      $region68: #{swin_transformer_block.1} parent=5 // pred_fallthru
        _
      %p7090 = scmp.le.s32.totalorder 2, %s21
      // Predicated region
      $region73: #{swin_transformer_block.1} parent=5 // pred_check
        %p7091 = pneg %p7090
      $region74: #{swin_transformer_block.1} parent=5 // pred_check_branch
        %7093 = sbr.rel (%p7091) target = $region76
      $region75: #{swin_transformer_block.1} parent=5 // pred_region
        %s7094 = ssub.s32 %s21, 2
        // Predicated region
        $region77: #{swin_transformer_block.1} parent=75 // pred_check
          %p7095 = pneg %p307
        $region78: #{swin_transformer_block.1} parent=75 // pred_check_branch
          %7097 = sbr.rel (%p7095) target = $region80
        $region79: #{swin_transformer_block.1} parent=75 // pred_region
          %s7098 = sand.u32 %s292, 1
          %s7099 = scalar_lea.sflag [#allocation3], %s7098
          %s7100 = sand.u32 %s292, 1
          %s7101 = smul.addr %s7100, 256
          %s7102 = scalar_lea.vmem [#allocation2], %s7101
          %7103 = dma.done %s7099, 4096
        $region80: #{swin_transformer_block.1} parent=75 // pred_fallthru
          _
      $region76: #{swin_transformer_block.1} parent=5 // pred_fallthru
        _
    $region6: #{swin_transformer_block.1} parent=1 // loop_footer
      %s25 = sadd.s32 1, %s21
    $region7: #{swin_transformer_block.1} parent=1 // loop_footer_branch
      %20 = sbr.rel target = $region3
    $region8: #{swin_transformer_block.1} parent=1 // loop_exit
      _
    %7104 = vsyncpa [#allocation3], 1
    %s7105 = scalar_lea.sflag [#allocation3], 1
    %7106 = vsyncpa %s7105, 1

</llo_original>
